<compile_context>
chip_gen: v6e
topology: v6e:2x2x1
jax: 0.10.0
libtpu: 0.0.40
codegen_flags: <defaults>
</compile_context>

<pallas_src>
import functools
import numpy as np
import jax
import jax.numpy as jnp
from jax import lax
from jax.experimental import pallas as pl
from jax.experimental.pallas import tpu as pltpu


def _ru(a, m):
    return (a + m - 1) // m * m


# ---------------------------------- fused kernel ----------------------------------


def _upscal_kernel(xp_ref, w1_ref, b1_ref, a_ref, w2_ref, b2_ref, o_ref, fp_ref, *,
                   N, H, W, Cmid, OC, LBp):
    Wp = W + 2                    # padded row length (flat "wide" stride)
    P = (H + 2) * Wp              # flat rows per padded image
    L1 = H * Wp                   # flat rows of the wide conv output per image

    # ----- conv1: reflect-padded 3x3 conv as 9 shifted-slice tap matmuls (bf16 MXU,
    #       f32 accumulation).  Row b = i*Wp + j of the "wide" output is output pixel
    #       (i, j); the two columns j in {W, W+1} wrap across row boundaries and are
    #       garbage (recycled below as replication borders for conv2).
    acc1 = jnp.zeros((LBp, Cmid), jnp.float32)
    for kh in range(3):
        for kw in range(3):
            k = kh * 3 + kw
            off = kh * Wp + kw
            lhs = xp_ref[pl.ds(off, LBp), :]                       # (LBp, Cin) bf16
            acc1 = acc1 + jnp.dot(lhs, w1_ref[k],
                                  preferred_element_type=jnp.float32)

    feat = acc1 + b1_ref[...]                                      # bias (f32)
    alpha = a_ref[0]                                               # SMEM scalar
    feat = jnp.where(feat > 0, feat, feat * alpha)                 # PReLU (f32 epilogue)
    feat = feat.astype(fp_ref.dtype)                               # bf16 for conv2 MXU

    # ----- build the replication-padded feature map in VMEM scratch.
    # Zero the scratch (gap/tail rows must be finite), bulk-store the wide conv1 output
    # at flat offset W+3 (so row/col both shift by 1 into padded coordinates), then fix
    # the two wrap-around columns so they hold the replication borders:
    #   wide col == W   -> value at b-1  (right border, f[i, W-1])
    #   wide col == W+1 -> value at b+1  (left border of the next padded row, f[i+1, 0])
    fp_ref[...] = jnp.zeros(fp_ref.shape, fp_ref.dtype)
    fp_ref[pl.ds(W + 3, LBp), :] = feat
    col = lax.broadcasted_iota(jnp.int32, (LBp, 1), 0) % Wp
    f_dn = fp_ref[pl.ds(W + 2, LBp), :]                            # value at b-1
    f_up = fp_ref[pl.ds(W + 4, LBp), :]                            # value at b+1
    feat = jnp.where(col == W, f_dn, feat)
    feat = jnp.where(col == W + 1, f_up, feat)
    fp_ref[pl.ds(W + 3, LBp), :] = feat
    # image-0, padded row 1, left border: the only border the bulk store misses.
    fp_ref[pl.ds(Wp, 1), :] = fp_ref[pl.ds(Wp + 1, 1), :]
    # top / bottom padded rows: replicate rows 1 and H of every image.
    for n in range(N):
        base = n * P
        fp_ref[pl.ds(base, Wp), :] = fp_ref[pl.ds(base + Wp, Wp), :]
        fp_ref[pl.ds(base + (H + 1) * Wp, Wp), :] = \
            fp_ref[pl.ds(base + H * Wp, Wp), :]

    # ----- conv2: nearest-x2 upsample + reflection pad + 3x3 conv, decomposed into 4
    # sub-pixel phases with 2x2 effective taps on the replication-padded feature map.
    # The phases are packed along the 4*Coutp (=128) output lanes of the 9 tap weight
    # matrices, so this is again 9 shifted-slice matmuls into ONE lane-dense accumulator.
    acc2 = jnp.zeros((LBp, OC), jnp.float32)
    for kh in range(3):
        for kw in range(3):
            k = kh * 3 + kw
            off = kh * Wp + kw
            lhs = fp_ref[pl.ds(off, LBp), :]                       # (LBp, Cmid) bf16
            acc2 = acc2 + jnp.dot(lhs, w2_ref[k],
                                  preferred_element_type=jnp.float32)
    out = acc2 + b2_ref[...]                                       # bias (f32)

    # store per-image valid row ranges (wide columns j >= W are dropped in the wrapper)
    for n in range(N):
        o_ref[n] = out[n * P:n * P + L1, :]


# ------------------------------------- wrapper -------------------------------------


def upscal_forward(p, x):
    """x: (N, H, W, nFeat) NHWC -> (N, 2H, 2W, nFeat2)."""
    N, H, W, Cin = x.shape
    Cmid = p["w1"].shape[-1]
    Cout = p["w2"].shape[-1]
    Wp, Hp = W + 2, H + 2
    P = Hp * Wp
    L1 = H * Wp
    LB = (N - 1) * P + L1                 # batch-folded "wide" M dimension
    LBp = _ru(LB, 8)
    TOT = _ru(LBp + 2 * Wp + 2, 8)        # rows of padded-flat input / feat scratch
    Coutp = _ru(Cout, 32)                 # 4*Coutp is a multiple of 128 (lane-dense)
    OC = 4 * Coutp

    # Reflect-pad + flatten the input; zero tail rows so every in-kernel tap slice of
    # length LBp stays in bounds.  bf16 MXU operands, f32 accumulation in the kernel.
    xpad = jnp.pad(x, ((0, 0), (1, 1), (1, 1), (0, 0)), mode="reflect")
    xpf = xpad.reshape(N * P, Cin)
    xpf = jnp.pad(xpf, ((0, TOT - N * P), (0, 0))).astype(jnp.bfloat16)

    w1f = p["w1"].reshape(9, Cin, Cmid).astype(jnp.bfloat16)
    b1 = p["b1"].reshape(1, Cmid).astype(jnp.float32)
    alpha = p["alpha"].reshape(1).astype(jnp.float32)

    # Sub-pixel decomposition of (nearest-x2 upsample + reflect pad + 3x3 conv):
    # output pixel (2i+di, 2j+dj) sees a 2x2 window of the replication-padded feature
    # map; rmap maps each original 3x3 tap index to the effective padded-feature offset.
    rmap = ((0, 1, 1), (1, 1, 2))
    w2 = p["w2"].astype(jnp.float32)
    w2tap = jnp.zeros((9, Cmid, OC), jnp.float32)
    b2p = jnp.zeros((1, OC), jnp.float32)
    for di in range(2):
        for dj in range(2):
            ph = 2 * di + dj
            b2p = b2p.at[0, ph * Coutp:ph * Coutp + Cout].set(
                p["b2"].astype(jnp.float32))
            for kh in range(3):
                for kw in range(3):
                    t = rmap[di][kh] * 3 + rmap[dj][kw]
                    w2tap = w2tap.at[t, :, ph * Coutp:ph * Coutp + Cout].add(w2[kh, kw])
    w2tap = w2tap.astype(jnp.bfloat16)

    kernel = functools.partial(_upscal_kernel, N=N, H=H, W=W,
                               Cmid=Cmid, OC=OC, LBp=LBp)

    out = pl.pallas_call(
        kernel,
        out_shape=jax.ShapeDtypeStruct((N, L1, OC), jnp.float32),
        in_specs=[
            pl.BlockSpec(memory_space=pltpu.MemorySpace.VMEM),   # padded-flat input
            pl.BlockSpec(memory_space=pltpu.MemorySpace.VMEM),   # conv1 tap weights
            pl.BlockSpec(memory_space=pltpu.MemorySpace.VMEM),   # b1
            pl.BlockSpec(memory_space=pltpu.MemorySpace.SMEM),   # PReLU alpha (scalar)
            pl.BlockSpec(memory_space=pltpu.MemorySpace.VMEM),   # conv2 phase-tap weights
            pl.BlockSpec(memory_space=pltpu.MemorySpace.VMEM),   # b2 (phase-packed)
        ],
        out_specs=pl.BlockSpec(memory_space=pltpu.MemorySpace.VMEM),
        scratch_shapes=[pltpu.VMEM((TOT, Cmid), jnp.bfloat16)],  # replication-padded feat
    )(xpf, w1f, b1, alpha, w2tap, b2p)

    # depth-to-space + drop wide columns / padded output channels (layout plumbing)
    out = out.reshape(N, H, Wp, 2, 2, Coutp)[:, :, :W]
    out = out.transpose(0, 1, 3, 2, 4, 5).reshape(N, 2 * H, 2 * W, Coutp)
    return out[..., :Cout]


# ------------------------------- pure-JAX reference --------------------------------


def upscal_reference(p, x):
    xp = jnp.pad(x, ((0, 0), (1, 1), (1, 1), (0, 0)), mode="reflect")
    feat = lax.conv_general_dilated(
        xp, p["w1"], (1, 1), "VALID",
        dimension_numbers=("NHWC", "HWIO", "NHWC"),
        precision=lax.Precision.HIGHEST) + p["b1"]
    feat = jnp.where(feat > 0, feat, feat * p["alpha"][0])
    up = jnp.repeat(jnp.repeat(feat, 2, axis=1), 2, axis=2)
    upp = jnp.pad(up, ((0, 0), (1, 1), (1, 1), (0, 0)), mode="reflect")
    return lax.conv_general_dilated(
        upp, p["w2"], (1, 1), "VALID",
        dimension_numbers=("NHWC", "HWIO", "NHWC"),
        precision=lax.Precision.HIGHEST) + p["b2"]


# --------------------------------- parameter init ----------------------------------


def _conv_init(key, kh, kw, cin, cout):
    kw_, kb_ = jax.random.split(key)
    bound = 1.0 / np.sqrt(kh * kw * cin)
    w = jax.random.uniform(kw_, (kh, kw, cin, cout), jnp.float32, -bound, bound)
    b = jax.random.uniform(kb_, (cout,), jnp.float32, -bound, bound)
    return w, b


def init_upscal(key, nFeat, nFeat2):
    k1, k2 = jax.random.split(key)
    w1, b1 = _conv_init(k1, 3, 3, nFeat, nFeat)       # mConv
    w2, b2 = _conv_init(k2, 3, 3, nFeat, nFeat2)      # upper
    alpha = jnp.full((1,), 0.25, jnp.float32)         # torch PReLU default
    return dict(w1=w1, b1=b1, alpha=alpha, w2=w2, b2=b2)


# -------------------------------------- main ----------------------------------------


if __name__ == "__main__":
    nFeat, nFeat2 = 24, 16
    N, H, W = 2, 8, 8

    key = jax.random.PRNGKey(0)
    kp, kx = jax.random.split(key)
    params = init_upscal(kp, nFeat, nFeat2)
    x = jax.random.normal(kx, (N, H, W, nFeat), jnp.float32)

    fwd = jax.jit(lambda inp: upscal_forward(params, inp))
    out = fwd(x)
    jax.block_until_ready(out)
    assert out.shape == (N, 2 * H, 2 * W, nFeat2)

    ref = upscal_reference(params, x)
    err = float(jnp.max(jnp.abs(out - ref)))
    # bf16 MXU operands with f32 accumulation: allow a slightly looser tolerance.
    assert err < 3e-2, f"max abs error vs reference: {err}"

    print("KERNEL_OK")
</pallas_src>

<mosaic_0001>
module attributes {stable_mosaic.version = 11 : i64} {
  func.func @_upscal_kernel(%arg0: memref<208x24xbf16, #tpu.memory_space<vmem>>, %arg1: memref<9x24x24xbf16, #tpu.memory_space<vmem>>, %arg2: memref<1x24xf32, #tpu.memory_space<vmem>>, %arg3: memref<1xf32, #tpu.memory_space<smem>>, %arg4: memref<9x24x128xbf16, #tpu.memory_space<vmem>>, %arg5: memref<1x128xf32, #tpu.memory_space<vmem>>, %arg6: memref<2x80x128xf32, #tpu.memory_space<vmem>>, %arg7: memref<208x24xbf16, #tpu.memory_space<vmem>>) attributes {dimension_semantics = [], scalar_prefetch = 0 : i64, scratch_operands = 1 : i64, tpu.core_type = #tpu.core_type<tc>} {
    %cst = arith.constant 0.000000e+00 : f32
    %0 = vector.broadcast %cst : f32 to vector<184x24xf32>
    %c0 = arith.constant 0 : index
    %c0_0 = arith.constant 0 : index
    %1 = vector.load %arg0[%c0, %c0_0] : memref<208x24xbf16, #tpu.memory_space<vmem>>, vector<184x24xbf16>
    %c0_1 = arith.constant 0 : index
    %c0_2 = arith.constant 0 : index
    %c0_3 = arith.constant 0 : index
    %2 = vector.load %arg1[%c0_1, %c0_2, %c0_3] : memref<9x24x24xbf16, #tpu.memory_space<vmem>>, vector<1x24x24xbf16>
    %3 = vector.shape_cast %2 : vector<1x24x24xbf16> to vector<24x24xbf16>
    %cst_4 = arith.constant dense<0.000000e+00> : vector<184x24xf32>
    %4 = tpu.matmul %1, %3, %cst_4 {dimension_numbers = #tpu.dot_dimension_numbers<[1], [0], [0], [1], [0, 0, 1, 1], [], []>} : vector<184x24xbf16>, vector<24x24xbf16>, vector<184x24xf32> -> vector<184x24xf32>
    %5 = arith.addf %0, %4 : vector<184x24xf32>
    %c1 = arith.constant 1 : index
    %c0_5 = arith.constant 0 : index
    %6 = vector.load %arg0[%c1, %c0_5] : memref<208x24xbf16, #tpu.memory_space<vmem>>, vector<184x24xbf16>
    %c1_6 = arith.constant 1 : index
    %c0_7 = arith.constant 0 : index
    %c0_8 = arith.constant 0 : index
    %7 = vector.load %arg1[%c1_6, %c0_7, %c0_8] : memref<9x24x24xbf16, #tpu.memory_space<vmem>>, vector<1x24x24xbf16>
    %8 = vector.shape_cast %7 : vector<1x24x24xbf16> to vector<24x24xbf16>
    %cst_9 = arith.constant dense<0.000000e+00> : vector<184x24xf32>
    %9 = tpu.matmul %6, %8, %cst_9 {dimension_numbers = #tpu.dot_dimension_numbers<[1], [0], [0], [1], [0, 0, 1, 1], [], []>} : vector<184x24xbf16>, vector<24x24xbf16>, vector<184x24xf32> -> vector<184x24xf32>
    %10 = arith.addf %5, %9 : vector<184x24xf32>
    %c2 = arith.constant 2 : index
    %c0_10 = arith.constant 0 : index
    %11 = vector.load %arg0[%c2, %c0_10] : memref<208x24xbf16, #tpu.memory_space<vmem>>, vector<184x24xbf16>
    %c2_11 = arith.constant 2 : index
    %c0_12 = arith.constant 0 : index
    %c0_13 = arith.constant 0 : index
    %12 = vector.load %arg1[%c2_11, %c0_12, %c0_13] : memref<9x24x24xbf16, #tpu.memory_space<vmem>>, vector<1x24x24xbf16>
    %13 = vector.shape_cast %12 : vector<1x24x24xbf16> to vector<24x24xbf16>
    %cst_14 = arith.constant dense<0.000000e+00> : vector<184x24xf32>
    %14 = tpu.matmul %11, %13, %cst_14 {dimension_numbers = #tpu.dot_dimension_numbers<[1], [0], [0], [1], [0, 0, 1, 1], [], []>} : vector<184x24xbf16>, vector<24x24xbf16>, vector<184x24xf32> -> vector<184x24xf32>
    %15 = arith.addf %10, %14 : vector<184x24xf32>
    %c10 = arith.constant 10 : index
    %c0_15 = arith.constant 0 : index
    %16 = vector.load %arg0[%c10, %c0_15] : memref<208x24xbf16, #tpu.memory_space<vmem>>, vector<184x24xbf16>
    %c3 = arith.constant 3 : index
    %c0_16 = arith.constant 0 : index
    %c0_17 = arith.constant 0 : index
    %17 = vector.load %arg1[%c3, %c0_16, %c0_17] : memref<9x24x24xbf16, #tpu.memory_space<vmem>>, vector<1x24x24xbf16>
    %18 = vector.shape_cast %17 : vector<1x24x24xbf16> to vector<24x24xbf16>
    %cst_18 = arith.constant dense<0.000000e+00> : vector<184x24xf32>
    %19 = tpu.matmul %16, %18, %cst_18 {dimension_numbers = #tpu.dot_dimension_numbers<[1], [0], [0], [1], [0, 0, 1, 1], [], []>} : vector<184x24xbf16>, vector<24x24xbf16>, vector<184x24xf32> -> vector<184x24xf32>
    %20 = arith.addf %15, %19 : vector<184x24xf32>
    %c11 = arith.constant 11 : index
    %c0_19 = arith.constant 0 : index
    %21 = vector.load %arg0[%c11, %c0_19] : memref<208x24xbf16, #tpu.memory_space<vmem>>, vector<184x24xbf16>
    %c4 = arith.constant 4 : index
    %c0_20 = arith.constant 0 : index
    %c0_21 = arith.constant 0 : index
    %22 = vector.load %arg1[%c4, %c0_20, %c0_21] : memref<9x24x24xbf16, #tpu.memory_space<vmem>>, vector<1x24x24xbf16>
    %23 = vector.shape_cast %22 : vector<1x24x24xbf16> to vector<24x24xbf16>
    %cst_22 = arith.constant dense<0.000000e+00> : vector<184x24xf32>
    %24 = tpu.matmul %21, %23, %cst_22 {dimension_numbers = #tpu.dot_dimension_numbers<[1], [0], [0], [1], [0, 0, 1, 1], [], []>} : vector<184x24xbf16>, vector<24x24xbf16>, vector<184x24xf32> -> vector<184x24xf32>
    %25 = arith.addf %20, %24 : vector<184x24xf32>
    %c12 = arith.constant 12 : index
    %c0_23 = arith.constant 0 : index
    %26 = vector.load %arg0[%c12, %c0_23] : memref<208x24xbf16, #tpu.memory_space<vmem>>, vector<184x24xbf16>
    %c5 = arith.constant 5 : index
    %c0_24 = arith.constant 0 : index
    %c0_25 = arith.constant 0 : index
    %27 = vector.load %arg1[%c5, %c0_24, %c0_25] : memref<9x24x24xbf16, #tpu.memory_space<vmem>>, vector<1x24x24xbf16>
    %28 = vector.shape_cast %27 : vector<1x24x24xbf16> to vector<24x24xbf16>
    %cst_26 = arith.constant dense<0.000000e+00> : vector<184x24xf32>
    %29 = tpu.matmul %26, %28, %cst_26 {dimension_numbers = #tpu.dot_dimension_numbers<[1], [0], [0], [1], [0, 0, 1, 1], [], []>} : vector<184x24xbf16>, vector<24x24xbf16>, vector<184x24xf32> -> vector<184x24xf32>
    %30 = arith.addf %25, %29 : vector<184x24xf32>
    %c20 = arith.constant 20 : index
    %c0_27 = arith.constant 0 : index
    %31 = vector.load %arg0[%c20, %c0_27] : memref<208x24xbf16, #tpu.memory_space<vmem>>, vector<184x24xbf16>
    %c6 = arith.constant 6 : index
    %c0_28 = arith.constant 0 : index
    %c0_29 = arith.constant 0 : index
    %32 = vector.load %arg1[%c6, %c0_28, %c0_29] : memref<9x24x24xbf16, #tpu.memory_space<vmem>>, vector<1x24x24xbf16>
    %33 = vector.shape_cast %32 : vector<1x24x24xbf16> to vector<24x24xbf16>
    %cst_30 = arith.constant dense<0.000000e+00> : vector<184x24xf32>
    %34 = tpu.matmul %31, %33, %cst_30 {dimension_numbers = #tpu.dot_dimension_numbers<[1], [0], [0], [1], [0, 0, 1, 1], [], []>} : vector<184x24xbf16>, vector<24x24xbf16>, vector<184x24xf32> -> vector<184x24xf32>
    %35 = arith.addf %30, %34 : vector<184x24xf32>
    %c21 = arith.constant 21 : index
    %c0_31 = arith.constant 0 : index
    %36 = vector.load %arg0[%c21, %c0_31] : memref<208x24xbf16, #tpu.memory_space<vmem>>, vector<184x24xbf16>
    %c7 = arith.constant 7 : index
    %c0_32 = arith.constant 0 : index
    %c0_33 = arith.constant 0 : index
    %37 = vector.load %arg1[%c7, %c0_32, %c0_33] : memref<9x24x24xbf16, #tpu.memory_space<vmem>>, vector<1x24x24xbf16>
    %38 = vector.shape_cast %37 : vector<1x24x24xbf16> to vector<24x24xbf16>
    %cst_34 = arith.constant dense<0.000000e+00> : vector<184x24xf32>
    %39 = tpu.matmul %36, %38, %cst_34 {dimension_numbers = #tpu.dot_dimension_numbers<[1], [0], [0], [1], [0, 0, 1, 1], [], []>} : vector<184x24xbf16>, vector<24x24xbf16>, vector<184x24xf32> -> vector<184x24xf32>
    %40 = arith.addf %35, %39 : vector<184x24xf32>
    %c22 = arith.constant 22 : index
    %c0_35 = arith.constant 0 : index
    %41 = vector.load %arg0[%c22, %c0_35] : memref<208x24xbf16, #tpu.memory_space<vmem>>, vector<184x24xbf16>
    %c8 = arith.constant 8 : index
    %c0_36 = arith.constant 0 : index
    %c0_37 = arith.constant 0 : index
    %42 = vector.load %arg1[%c8, %c0_36, %c0_37] : memref<9x24x24xbf16, #tpu.memory_space<vmem>>, vector<1x24x24xbf16>
    %43 = vector.shape_cast %42 : vector<1x24x24xbf16> to vector<24x24xbf16>
    %cst_38 = arith.constant dense<0.000000e+00> : vector<184x24xf32>
    %44 = tpu.matmul %41, %43, %cst_38 {dimension_numbers = #tpu.dot_dimension_numbers<[1], [0], [0], [1], [0, 0, 1, 1], [], []>} : vector<184x24xbf16>, vector<24x24xbf16>, vector<184x24xf32> -> vector<184x24xf32>
    %45 = arith.addf %40, %44 : vector<184x24xf32>
    %c0_39 = arith.constant 0 : index
    %c0_40 = arith.constant 0 : index
    %46 = vector.load %arg2[%c0_39, %c0_40] : memref<1x24xf32, #tpu.memory_space<vmem>>, vector<1x24xf32>
    %47 = vector.broadcast %46 : vector<1x24xf32> to vector<184x24xf32>
    %48 = arith.addf %45, %47 : vector<184x24xf32>
    %c0_41 = arith.constant 0 : index
    %49 = memref.load %arg3[%c0_41] : memref<1xf32, #tpu.memory_space<smem>>
    %cst_42 = arith.constant 0.000000e+00 : f32
    %50 = vector.broadcast %cst_42 : f32 to vector<184x24xf32>
    %51 = arith.cmpf ogt, %48, %50 : vector<184x24xf32>
    %52 = vector.broadcast %49 : f32 to vector<184x24xf32>
    %53 = arith.mulf %48, %52 : vector<184x24xf32>
    %54 = arith.select %51, %48, %53 : vector<184x24xi1>, vector<184x24xf32>
    %55 = arith.truncf %54 : vector<184x24xf32> to vector<184x24xbf16>
    %cst_43 = arith.constant 0.000000e+00 : bf16
    %56 = vector.broadcast %cst_43 : bf16 to vector<208x24xbf16>
    %c0_44 = arith.constant 0 : index
    %c0_45 = arith.constant 0 : index
    %57 = vector.load %arg7[%c0_44, %c0_45] : memref<208x24xbf16, #tpu.memory_space<vmem>>, vector<208x24xbf16>
    tpu.vector_store %arg7[%c0_44, %c0_45], %56 {strides = array<i32>} : memref<208x24xbf16, #tpu.memory_space<vmem>>, vector<208x24xbf16>,
    %c11_46 = arith.constant 11 : index
    %c0_47 = arith.constant 0 : index
    %58 = vector.load %arg7[%c11_46, %c0_47] : memref<208x24xbf16, #tpu.memory_space<vmem>>, vector<184x24xbf16>
    tpu.vector_store %arg7[%c11_46, %c0_47], %55 {strides = array<i32>} : memref<208x24xbf16, #tpu.memory_space<vmem>>, vector<184x24xbf16>,
    %59 = tpu.iota {dimensions = array<i32: 0>} : vector<184x1xi32>
    %c10_i32 = arith.constant 10 : i32
    %c0_i32 = arith.constant 0 : i32
    %60 = arith.cmpi eq, %c10_i32, %c0_i32 : i32
    %c1_i32 = arith.constant 1 : i32
    %61 = arith.select %60, %c1_i32, %c10_i32 : i32
    %62 = vector.broadcast %61 : i32 to vector<184x1xi32>
    %63 = arith.remsi %59, %62 : vector<184x1xi32>
    %c0_i32_48 = arith.constant 0 : i32
    %64 = vector.broadcast %c0_i32_48 : i32 to vector<184x1xi32>
    %65 = arith.cmpi ne, %63, %64 : vector<184x1xi32>
    %c0_i32_49 = arith.constant 0 : i32
    %66 = vector.broadcast %c0_i32_49 : i32 to vector<184x1xi32>
    %67 = arith.cmpi slt, %63, %66 : vector<184x1xi32>
    %c0_i32_50 = arith.constant 0 : i32
    %68 = arith.cmpi slt, %61, %c0_i32_50 : i32
    %69 = vector.broadcast %68 : i1 to vector<184x1xi1>
    %70 = vector.broadcast %69 : vector<184x1xi1> to vector<184x1xi1>
    %71 = arith.xori %67, %70 : vector<184x1xi1>
    %72 = arith.andi %71, %65 : vector<184x1xi1>
    %73 = vector.broadcast %61 : i32 to vector<184x1xi32>
    %74 = arith.addi %63, %73 : vector<184x1xi32>
    %75 = arith.select %72, %74, %63 : vector<184x1xi1>, vector<184x1xi32>
    %c10_51 = arith.constant 10 : index
    %c0_52 = arith.constant 0 : index
    %76 = vector.load %arg7[%c10_51, %c0_52] : memref<208x24xbf16, #tpu.memory_space<vmem>>, vector<184x24xbf16>
    %c12_53 = arith.constant 12 : index
    %c0_54 = arith.constant 0 : index
    %77 = vector.load %arg7[%c12_53, %c0_54] : memref<208x24xbf16, #tpu.memory_space<vmem>>, vector<184x24xbf16>
    %c8_i32 = arith.constant 8 : i32
    %78 = vector.broadcast %c8_i32 : i32 to vector<184x1xi32>
    %79 = arith.cmpi eq, %75, %78 : vector<184x1xi32>
    %80 = vector.shape_cast %79 : vector<184x1xi1> to vector<184x1xi1>
    %81 = vector.broadcast %80 : vector<184x1xi1> to vector<184x24xi1>
    %82 = arith.select %81, %76, %55 : vector<184x24xi1>, vector<184x24xbf16>
    %c9_i32 = arith.constant 9 : i32
    %83 = vector.broadcast %c9_i32 : i32 to vector<184x1xi32>
    %84 = arith.cmpi eq, %75, %83 : vector<184x1xi32>
    %85 = vector.shape_cast %84 : vector<184x1xi1> to vector<184x1xi1>
    %86 = vector.broadcast %85 : vector<184x1xi1> to vector<184x24xi1>
    %87 = arith.select %86, %77, %82 : vector<184x24xi1>, vector<184x24xbf16>
    %c11_55 = arith.constant 11 : index
    %c0_56 = arith.constant 0 : index
    %88 = vector.load %arg7[%c11_55, %c0_56] : memref<208x24xbf16, #tpu.memory_space<vmem>>, vector<184x24xbf16>
    tpu.vector_store %arg7[%c11_55, %c0_56], %87 {strides = array<i32>} : memref<208x24xbf16, #tpu.memory_space<vmem>>, vector<184x24xbf16>,
    %c11_57 = arith.constant 11 : index
    %c0_58 = arith.constant 0 : index
    %89 = vector.load %arg7[%c11_57, %c0_58] : memref<208x24xbf16, #tpu.memory_space<vmem>>, vector<1x24xbf16>
    %c10_59 = arith.constant 10 : index
    %c0_60 = arith.constant 0 : index
    %90 = vector.load %arg7[%c10_59, %c0_60] : memref<208x24xbf16, #tpu.memory_space<vmem>>, vector<1x24xbf16>
    tpu.vector_store %arg7[%c10_59, %c0_60], %89 {strides = array<i32>} : memref<208x24xbf16, #tpu.memory_space<vmem>>, vector<1x24xbf16>,
    %c10_61 = arith.constant 10 : index
    %c0_62 = arith.constant 0 : index
    %91 = vector.load %arg7[%c10_61, %c0_62] : memref<208x24xbf16, #tpu.memory_space<vmem>>, vector<10x24xbf16>
    %c0_63 = arith.constant 0 : index
    %c0_64 = arith.constant 0 : index
    %92 = vector.load %arg7[%c0_63, %c0_64] : memref<208x24xbf16, #tpu.memory_space<vmem>>, vector<10x24xbf16>
    tpu.vector_store %arg7[%c0_63, %c0_64], %91 {strides = array<i32>} : memref<208x24xbf16, #tpu.memory_space<vmem>>, vector<10x24xbf16>,
    %c80 = arith.constant 80 : index
    %c0_65 = arith.constant 0 : index
    %93 = vector.load %arg7[%c80, %c0_65] : memref<208x24xbf16, #tpu.memory_space<vmem>>, vector<10x24xbf16>
    %c90 = arith.constant 90 : index
    %c0_66 = arith.constant 0 : index
    %94 = vector.load %arg7[%c90, %c0_66] : memref<208x24xbf16, #tpu.memory_space<vmem>>, vector<10x24xbf16>
    tpu.vector_store %arg7[%c90, %c0_66], %93 {strides = array<i32>} : memref<208x24xbf16, #tpu.memory_space<vmem>>, vector<10x24xbf16>,
    %c110 = arith.constant 110 : index
    %c0_67 = arith.constant 0 : index
    %95 = vector.load %arg7[%c110, %c0_67] : memref<208x24xbf16, #tpu.memory_space<vmem>>, vector<10x24xbf16>
    %c100 = arith.constant 100 : index
    %c0_68 = arith.constant 0 : index
    %96 = vector.load %arg7[%c100, %c0_68] : memref<208x24xbf16, #tpu.memory_space<vmem>>, vector<10x24xbf16>
    tpu.vector_store %arg7[%c100, %c0_68], %95 {strides = array<i32>} : memref<208x24xbf16, #tpu.memory_space<vmem>>, vector<10x24xbf16>,
    %c180 = arith.constant 180 : index
    %c0_69 = arith.constant 0 : index
    %97 = vector.load %arg7[%c180, %c0_69] : memref<208x24xbf16, #tpu.memory_space<vmem>>, vector<10x24xbf16>
    %c190 = arith.constant 190 : index
    %c0_70 = arith.constant 0 : index
    %98 = vector.load %arg7[%c190, %c0_70] : memref<208x24xbf16, #tpu.memory_space<vmem>>, vector<10x24xbf16>
    tpu.vector_store %arg7[%c190, %c0_70], %97 {strides = array<i32>} : memref<208x24xbf16, #tpu.memory_space<vmem>>, vector<10x24xbf16>,
    %cst_71 = arith.constant 0.000000e+00 : f32
    %99 = vector.broadcast %cst_71 : f32 to vector<184x128xf32>
    %c0_72 = arith.constant 0 : index
    %c0_73 = arith.constant 0 : index
    %100 = vector.load %arg7[%c0_72, %c0_73] : memref<208x24xbf16, #tpu.memory_space<vmem>>, vector<184x24xbf16>
    %c0_74 = arith.constant 0 : index
    %c0_75 = arith.constant 0 : index
    %c0_76 = arith.constant 0 : index
    %101 = vector.load %arg4[%c0_74, %c0_75, %c0_76] : memref<9x24x128xbf16, #tpu.memory_space<vmem>>, vector<1x24x128xbf16>
    %102 = vector.shape_cast %101 : vector<1x24x128xbf16> to vector<24x128xbf16>
    %cst_77 = arith.constant dense<0.000000e+00> : vector<184x128xf32>
    %103 = tpu.matmul %100, %102, %cst_77 {dimension_numbers = #tpu.dot_dimension_numbers<[1], [0], [0], [1], [0, 0, 1, 1], [], []>} : vector<184x24xbf16>, vector<24x128xbf16>, vector<184x128xf32> -> vector<184x128xf32>
    %104 = arith.addf %99, %103 : vector<184x128xf32>
    %c1_78 = arith.constant 1 : index
    %c0_79 = arith.constant 0 : index
    %105 = vector.load %arg7[%c1_78, %c0_79] : memref<208x24xbf16, #tpu.memory_space<vmem>>, vector<184x24xbf16>
    %c1_80 = arith.constant 1 : index
    %c0_81 = arith.constant 0 : index
    %c0_82 = arith.constant 0 : index
    %106 = vector.load %arg4[%c1_80, %c0_81, %c0_82] : memref<9x24x128xbf16, #tpu.memory_space<vmem>>, vector<1x24x128xbf16>
    %107 = vector.shape_cast %106 : vector<1x24x128xbf16> to vector<24x128xbf16>
    %cst_83 = arith.constant dense<0.000000e+00> : vector<184x128xf32>
    %108 = tpu.matmul %105, %107, %cst_83 {dimension_numbers = #tpu.dot_dimension_numbers<[1], [0], [0], [1], [0, 0, 1, 1], [], []>} : vector<184x24xbf16>, vector<24x128xbf16>, vector<184x128xf32> -> vector<184x128xf32>
    %109 = arith.addf %104, %108 : vector<184x128xf32>
    %c2_84 = arith.constant 2 : index
    %c0_85 = arith.constant 0 : index
    %110 = vector.load %arg7[%c2_84, %c0_85] : memref<208x24xbf16, #tpu.memory_space<vmem>>, vector<184x24xbf16>
    %c2_86 = arith.constant 2 : index
    %c0_87 = arith.constant 0 : index
    %c0_88 = arith.constant 0 : index
    %111 = vector.load %arg4[%c2_86, %c0_87, %c0_88] : memref<9x24x128xbf16, #tpu.memory_space<vmem>>, vector<1x24x128xbf16>
    %112 = vector.shape_cast %111 : vector<1x24x128xbf16> to vector<24x128xbf16>
    %cst_89 = arith.constant dense<0.000000e+00> : vector<184x128xf32>
    %113 = tpu.matmul %110, %112, %cst_89 {dimension_numbers = #tpu.dot_dimension_numbers<[1], [0], [0], [1], [0, 0, 1, 1], [], []>} : vector<184x24xbf16>, vector<24x128xbf16>, vector<184x128xf32> -> vector<184x128xf32>
    %114 = arith.addf %109, %113 : vector<184x128xf32>
    %c10_90 = arith.constant 10 : index
    %c0_91 = arith.constant 0 : index
    %115 = vector.load %arg7[%c10_90, %c0_91] : memref<208x24xbf16, #tpu.memory_space<vmem>>, vector<184x24xbf16>
    %c3_92 = arith.constant 3 : index
    %c0_93 = arith.constant 0 : index
    %c0_94 = arith.constant 0 : index
    %116 = vector.load %arg4[%c3_92, %c0_93, %c0_94] : memref<9x24x128xbf16, #tpu.memory_space<vmem>>, vector<1x24x128xbf16>
    %117 = vector.shape_cast %116 : vector<1x24x128xbf16> to vector<24x128xbf16>
    %cst_95 = arith.constant dense<0.000000e+00> : vector<184x128xf32>
    %118 = tpu.matmul %115, %117, %cst_95 {dimension_numbers = #tpu.dot_dimension_numbers<[1], [0], [0], [1], [0, 0, 1, 1], [], []>} : vector<184x24xbf16>, vector<24x128xbf16>, vector<184x128xf32> -> vector<184x128xf32>
    %119 = arith.addf %114, %118 : vector<184x128xf32>
    %c11_96 = arith.constant 11 : index
    %c0_97 = arith.constant 0 : index
    %120 = vector.load %arg7[%c11_96, %c0_97] : memref<208x24xbf16, #tpu.memory_space<vmem>>, vector<184x24xbf16>
    %c4_98 = arith.constant 4 : index
    %c0_99 = arith.constant 0 : index
    %c0_100 = arith.constant 0 : index
    %121 = vector.load %arg4[%c4_98, %c0_99, %c0_100] : memref<9x24x128xbf16, #tpu.memory_space<vmem>>, vector<1x24x128xbf16>
    %122 = vector.shape_cast %121 : vector<1x24x128xbf16> to vector<24x128xbf16>
    %cst_101 = arith.constant dense<0.000000e+00> : vector<184x128xf32>
    %123 = tpu.matmul %120, %122, %cst_101 {dimension_numbers = #tpu.dot_dimension_numbers<[1], [0], [0], [1], [0, 0, 1, 1], [], []>} : vector<184x24xbf16>, vector<24x128xbf16>, vector<184x128xf32> -> vector<184x128xf32>
    %124 = arith.addf %119, %123 : vector<184x128xf32>
    %c12_102 = arith.constant 12 : index
    %c0_103 = arith.constant 0 : index
    %125 = vector.load %arg7[%c12_102, %c0_103] : memref<208x24xbf16, #tpu.memory_space<vmem>>, vector<184x24xbf16>
    %c5_104 = arith.constant 5 : index
    %c0_105 = arith.constant 0 : index
    %c0_106 = arith.constant 0 : index
    %126 = vector.load %arg4[%c5_104, %c0_105, %c0_106] : memref<9x24x128xbf16, #tpu.memory_space<vmem>>, vector<1x24x128xbf16>
    %127 = vector.shape_cast %126 : vector<1x24x128xbf16> to vector<24x128xbf16>
    %cst_107 = arith.constant dense<0.000000e+00> : vector<184x128xf32>
    %128 = tpu.matmul %125, %127, %cst_107 {dimension_numbers = #tpu.dot_dimension_numbers<[1], [0], [0], [1], [0, 0, 1, 1], [], []>} : vector<184x24xbf16>, vector<24x128xbf16>, vector<184x128xf32> -> vector<184x128xf32>
    %129 = arith.addf %124, %128 : vector<184x128xf32>
    %c20_108 = arith.constant 20 : index
    %c0_109 = arith.constant 0 : index
    %130 = vector.load %arg7[%c20_108, %c0_109] : memref<208x24xbf16, #tpu.memory_space<vmem>>, vector<184x24xbf16>
    %c6_110 = arith.constant 6 : index
    %c0_111 = arith.constant 0 : index
    %c0_112 = arith.constant 0 : index
    %131 = vector.load %arg4[%c6_110, %c0_111, %c0_112] : memref<9x24x128xbf16, #tpu.memory_space<vmem>>, vector<1x24x128xbf16>
    %132 = vector.shape_cast %131 : vector<1x24x128xbf16> to vector<24x128xbf16>
    %cst_113 = arith.constant dense<0.000000e+00> : vector<184x128xf32>
    %133 = tpu.matmul %130, %132, %cst_113 {dimension_numbers = #tpu.dot_dimension_numbers<[1], [0], [0], [1], [0, 0, 1, 1], [], []>} : vector<184x24xbf16>, vector<24x128xbf16>, vector<184x128xf32> -> vector<184x128xf32>
    %134 = arith.addf %129, %133 : vector<184x128xf32>
    %c21_114 = arith.constant 21 : index
    %c0_115 = arith.constant 0 : index
    %135 = vector.load %arg7[%c21_114, %c0_115] : memref<208x24xbf16, #tpu.memory_space<vmem>>, vector<184x24xbf16>
    %c7_116 = arith.constant 7 : index
    %c0_117 = arith.constant 0 : index
    %c0_118 = arith.constant 0 : index
    %136 = vector.load %arg4[%c7_116, %c0_117, %c0_118] : memref<9x24x128xbf16, #tpu.memory_space<vmem>>, vector<1x24x128xbf16>
    %137 = vector.shape_cast %136 : vector<1x24x128xbf16> to vector<24x128xbf16>
    %cst_119 = arith.constant dense<0.000000e+00> : vector<184x128xf32>
    %138 = tpu.matmul %135, %137, %cst_119 {dimension_numbers = #tpu.dot_dimension_numbers<[1], [0], [0], [1], [0, 0, 1, 1], [], []>} : vector<184x24xbf16>, vector<24x128xbf16>, vector<184x128xf32> -> vector<184x128xf32>
    %139 = arith.addf %134, %138 : vector<184x128xf32>
    %c22_120 = arith.constant 22 : index
    %c0_121 = arith.constant 0 : index
    %140 = vector.load %arg7[%c22_120, %c0_121] : memref<208x24xbf16, #tpu.memory_space<vmem>>, vector<184x24xbf16>
    %c8_122 = arith.constant 8 : index
    %c0_123 = arith.constant 0 : index
    %c0_124 = arith.constant 0 : index
    %141 = vector.load %arg4[%c8_122, %c0_123, %c0_124] : memref<9x24x128xbf16, #tpu.memory_space<vmem>>, vector<1x24x128xbf16>
    %142 = vector.shape_cast %141 : vector<1x24x128xbf16> to vector<24x128xbf16>
    %cst_125 = arith.constant dense<0.000000e+00> : vector<184x128xf32>
    %143 = tpu.matmul %140, %142, %cst_125 {dimension_numbers = #tpu.dot_dimension_numbers<[1], [0], [0], [1], [0, 0, 1, 1], [], []>} : vector<184x24xbf16>, vector<24x128xbf16>, vector<184x128xf32> -> vector<184x128xf32>
    %144 = arith.addf %139, %143 : vector<184x128xf32>
    %c0_126 = arith.constant 0 : index
    %c0_127 = arith.constant 0 : index
    %145 = vector.load %arg5[%c0_126, %c0_127] : memref<1x128xf32, #tpu.memory_space<vmem>>, vector<1x128xf32>
    %146 = vector.broadcast %145 : vector<1x128xf32> to vector<184x128xf32>
    %147 = arith.addf %144, %146 : vector<184x128xf32>
    %148 = vector.extract_strided_slice %147 {offsets = [0, 0], sizes = [80, 128], strides = [1, 1]} : vector<184x128xf32> to vector<80x128xf32>
    %c0_128 = arith.constant 0 : index
    %c0_129 = arith.constant 0 : index
    %c0_130 = arith.constant 0 : index
    %149 = vector.load %arg6[%c0_128, %c0_129, %c0_130] : memref<2x80x128xf32, #tpu.memory_space<vmem>>, vector<1x80x128xf32>
    %150 = vector.shape_cast %149 : vector<1x80x128xf32> to vector<80x128xf32>
    %151 = vector.shape_cast %148 : vector<80x128xf32> to vector<1x80x128xf32>
    tpu.vector_store %arg6[%c0_128, %c0_129, %c0_130], %151 {strides = array<i32>} : memref<2x80x128xf32, #tpu.memory_space<vmem>>, vector<1x80x128xf32>,
    %152 = vector.extract_strided_slice %147 {offsets = [100, 0], sizes = [80, 128], strides = [1, 1]} : vector<184x128xf32> to vector<80x128xf32>
    %c1_131 = arith.constant 1 : index
    %c0_132 = arith.constant 0 : index
    %c0_133 = arith.constant 0 : index
    %153 = vector.load %arg6[%c1_131, %c0_132, %c0_133] : memref<2x80x128xf32, #tpu.memory_space<vmem>>, vector<1x80x128xf32>
    %154 = vector.shape_cast %153 : vector<1x80x128xf32> to vector<80x128xf32>
    %155 = vector.shape_cast %152 : vector<80x128xf32> to vector<1x80x128xf32>
    tpu.vector_store %arg6[%c1_131, %c0_132, %c0_133], %155 {strides = array<i32>} : memref<2x80x128xf32, #tpu.memory_space<vmem>>, vector<1x80x128xf32>,
    return
  }
}

</mosaic_0001>

<llo_original>
// kernel: _lambda_.1
$region0: #{_lambda_.1}
  #allocation0 [shape = 'u32[]', space=smem, size = 0x4, offset = 0x4, fixed_abs, tag = 'smem constant byte address 0x4 - core index']
  #allocation1 [shape = 'u32[144,128]{1,0:T(1,128)}', space=vmem, size = 0x12000, scoped, tag = 'internal scratch']
  #allocation2 [shape = 'bf16[208,24]{1,0:T(8,128)(2,1)}', space=vmem, size = 0xd000, scoped, tag = 'scratch operand']
  #allocation3 [shape = 'f32[1]{0:T(128)S(6)}', space=smem, size = 0x200, scoped, tag = 'scoped memory for _lambda_.1']
  %s0 = inlined_call_operand.vmem [shape: bf16[208,24], index: 0, kind: input, shape index: {}]
  %s1 = inlined_call_operand.vmem [shape: bf16[9,24,24], index: 1, kind: input, shape index: {}]
  %s2 = inlined_call_operand.vmem [shape: f32[1,24], index: 2, kind: input, shape index: {}]
  %s3 = inlined_call_operand.<no memory space> [shape: f32[1], index: 3, kind: input, shape index: {}]
  %s4 = inlined_call_operand.vmem [shape: bf16[9,24,128], index: 4, kind: input, shape index: {}]
  %s5 = inlined_call_operand.vmem [shape: f32[1,128], index: 5, kind: input, shape index: {}]
  %s6 = inlined_call_operand.vmem [shape: f32[2,80,128], index: 6, kind: output, shape index: {}]
  %s7 = sld [smem:[#allocation0]]
  $region34: #{_lambda_.1} parent=0
    _
  %s9 = ssub.s32 1, %s7
  %s10 = scalar_select 0, %s9, %s7
  %11 = sst [smem:[#allocation3]] %s3
  // Predicated region
  $region2: #{_lambda_.1} parent=0 // pred_check
    _
  $region3: #{_lambda_.1} parent=0 // pred_check_branch
    %13 = sbr.rel (0) target = $region5
  $region4: #{_lambda_.1} parent=0 // pred_region
    _
  $region5: #{_lambda_.1} parent=0 // pred_fallthru
    _
  // Predicated region
  $region6: #{_lambda_.1} parent=0 // pred_check
    _
  $region7: #{_lambda_.1} parent=0 // pred_check_branch
    %15 = sbr.rel (0) target = $region9
  $region8: #{_lambda_.1} parent=0 // pred_region
    _
  $region9: #{_lambda_.1} parent=0 // pred_fallthru
    _
  // Predicated region
  $region10: #{_lambda_.1} parent=0 // pred_check
    _
  $region11: #{_lambda_.1} parent=0 // pred_check_branch
    %17 = sbr.rel (0) target = $region13
  $region12: #{_lambda_.1} parent=0 // pred_region
    _
  $region13: #{_lambda_.1} parent=0 // pred_fallthru
    _
  // Predicated region
  $region14: #{_lambda_.1} parent=0 // pred_check
    _
  $region15: #{_lambda_.1} parent=0 // pred_check_branch
    %19 = sbr.rel (0) target = $region17
  $region16: #{_lambda_.1} parent=0 // pred_region
    _
  $region17: #{_lambda_.1} parent=0 // pred_fallthru
    _
  // Predicated region
  $region18: #{_lambda_.1} parent=0 // pred_check
    _
  $region19: #{_lambda_.1} parent=0 // pred_check_branch
    %21 = sbr.rel (0) target = $region21
  $region20: #{_lambda_.1} parent=0 // pred_region
    _
  $region21: #{_lambda_.1} parent=0 // pred_fallthru
    _
  // Predicated region
  $region22: #{_lambda_.1} parent=0 // pred_check
    _
  $region23: #{_lambda_.1} parent=0 // pred_check_branch
    %23 = sbr.rel (0) target = $region25
  $region24: #{_lambda_.1} parent=0 // pred_region
    _
  $region25: #{_lambda_.1} parent=0 // pred_fallthru
    _
  %v27 = vld [vmem:[%s0] sm:$0xf]
  %v28 = vld [vmem:[%s0 + $0x4] sm:$0xf]
  %v29 = vld [vmem:[%s0 + $0x8] sm:$0xf]
  %v30 = vld [vmem:[%s0 + $0xc] sm:$0xf]
  %v31 = vld [vmem:[%s0 + $0x10] sm:$0xf]
  %v32 = vld [vmem:[%s0 + $0x14] sm:$0xf]
  %v33 = vld [vmem:[%s0 + $0x18] sm:$0xf]
  %v34 = vld [vmem:[%s0 + $0x1c] sm:$0xf]
  %v35 = vld [vmem:[%s0 + $0x20] sm:$0xf]
  %v36 = vld [vmem:[%s0 + $0x24] sm:$0xf]
  %v37 = vld [vmem:[%s0 + $0x28] sm:$0xf]
  %v38 = vld [vmem:[%s0 + $0x2c] sm:$0xf]
  %v39 = vld [vmem:[%s0 + $0x30] sm:$0xf]
  %v40 = vld [vmem:[%s0 + $0x34] sm:$0xf]
  %v41 = vld [vmem:[%s0 + $0x38] sm:$0xf]
  %v42 = vld [vmem:[%s0 + $0x3c] sm:$0xf]
  %v43 = vld [vmem:[%s0 + $0x40] sm:$0xf]
  %v44 = vld [vmem:[%s0 + $0x44] sm:$0xf]
  %v45 = vld [vmem:[%s0 + $0x48] sm:$0xf]
  %v46 = vld [vmem:[%s0 + $0x4c] sm:$0xf]
  %v47 = vld [vmem:[%s0 + $0x50] sm:$0xf]
  %v48 = vld [vmem:[%s0 + $0x54] sm:$0xf]
  %v49 = vld [vmem:[%s0 + $0x58] sm:$0xf]
  %v50 = vld [vmem:[%s1] sm:$0xf]
  %v51 = vld [vmem:[%s1 + $0x4] sm:$0xf]
  %v52 = vld [vmem:[%s1 + $0x8] sm:$0xf]
  %v53 = vld [vmem:[%s0 + $0x5c] sm:$0x1]
  %s54 = scalar_lea.vmem %s1, 12
  %v55 = vld [vmem:[%s54] sm:$0xf]
  %v56 = vld [vmem:[%s54 + $0x4] sm:$0xf]
  %v57 = vld [vmem:[%s54 + $0x8] sm:$0xf]
  %v82 = vunpack.c.l.b16 %v27
  %v83 = vunpack.c.l.b16 %v28
  %v84 = vunpack.c.l.b16 %v29
  %v85 = vunpack.c.l.b16 %v30
  %v86 = vunpack.c.l.b16 %v31
  %v87 = vunpack.c.l.b16 %v32
  %v88 = vunpack.c.l.b16 %v33
  %v89 = vunpack.c.l.b16 %v34
  %v90 = vunpack.c.l.b16 %v35
  %v91 = vunpack.c.l.b16 %v36
  %v92 = vunpack.c.l.b16 %v37
  %v93 = vunpack.c.l.b16 %v38
  %v94 = vunpack.c.l.b16 %v39
  %v95 = vunpack.c.l.b16 %v40
  %v96 = vunpack.c.l.b16 %v41
  %v97 = vunpack.c.l.b16 %v42
  %v98 = vunpack.c.l.b16 %v43
  %v99 = vunpack.c.l.b16 %v44
  %v100 = vunpack.c.l.b16 %v45
  %v101 = vunpack.c.l.b16 %v46
  %v102 = vunpack.c.l.b16 %v47
  %v103 = vunpack.c.l.b16 %v48
  %v104 = vunpack.c.l.b16 %v49
  %v105 = vunpack.c.l.b16 %v53
  %v106 = vpack.c.b16 %v83, %v82
  %v107 = vpack.c.b16 %v85, %v84
  %v108 = vpack.c.b16 %v87, %v86
  %v109 = vpack.c.b16 %v89, %v88
  %v110 = vpack.c.b16 %v91, %v90
  %v111 = vpack.c.b16 %v93, %v92
  %v112 = vpack.c.b16 %v95, %v94
  %v113 = vpack.c.b16 %v97, %v96
  %v114 = vpack.c.b16 %v99, %v98
  %v115 = vpack.c.b16 %v101, %v100
  %v116 = vpack.c.b16 %v103, %v102
  %v117 = vpack.c.b16 %v105, %v104
  %vm118 = vsmask.f32 7424
  %v120 = vshrl.u32 %v106, 16
  %v122 = vshll.u32 %v106, 16
  %v124 = vrot.slane %v122, 1
  %v125 = vor.u32 %v120, %v124
  %v127 = vshll.u32 %v107, 16
  %v129 = vrot.slane %v127, 1
  %v130 = vsel %vm118, %v125, %v129
  %v131 = vshrl.u32 %v107, 16
  %v133 = vor.u32 %v131, %v129
  %v135 = vshll.u32 %v108, 16
  %v137 = vrot.slane %v135, 1
  %v138 = vsel %vm118, %v133, %v137
  %v139 = vshrl.u32 %v108, 16
  %v141 = vor.u32 %v139, %v137
  %v143 = vshll.u32 %v109, 16
  %v145 = vrot.slane %v143, 1
  %v146 = vsel %vm118, %v141, %v145
  %v147 = vshrl.u32 %v109, 16
  %v149 = vor.u32 %v147, %v145
  %v151 = vshll.u32 %v110, 16
  %v153 = vrot.slane %v151, 1
  %v154 = vsel %vm118, %v149, %v153
  %v155 = vshrl.u32 %v110, 16
  %v157 = vor.u32 %v155, %v153
  %v159 = vshll.u32 %v111, 16
  %v161 = vrot.slane %v159, 1
  %v162 = vsel %vm118, %v157, %v161
  %v163 = vshrl.u32 %v111, 16
  %v165 = vor.u32 %v163, %v161
  %v167 = vshll.u32 %v112, 16
  %v169 = vrot.slane %v167, 1
  %v170 = vsel %vm118, %v165, %v169
  %v171 = vshrl.u32 %v112, 16
  %v173 = vor.u32 %v171, %v169
  %v175 = vshll.u32 %v113, 16
  %v177 = vrot.slane %v175, 1
  %v178 = vsel %vm118, %v173, %v177
  %v179 = vshrl.u32 %v113, 16
  %v181 = vor.u32 %v179, %v177
  %v183 = vshll.u32 %v114, 16
  %v185 = vrot.slane %v183, 1
  %v186 = vsel %vm118, %v181, %v185
  %v187 = vshrl.u32 %v114, 16
  %v189 = vor.u32 %v187, %v185
  %v191 = vshll.u32 %v115, 16
  %v193 = vrot.slane %v191, 1
  %v194 = vsel %vm118, %v189, %v193
  %v195 = vshrl.u32 %v115, 16
  %v197 = vor.u32 %v195, %v193
  %v199 = vshll.u32 %v116, 16
  %v201 = vrot.slane %v199, 1
  %v202 = vsel %vm118, %v197, %v201
  %v203 = vshrl.u32 %v116, 16
  %v205 = vor.u32 %v203, %v201
  %v207 = vshll.u32 %v117, 16
  %v209 = vrot.slane %v207, 1
  %v210 = vsel %vm118, %v205, %v209
  %v211 = vshrl.u32 %v117, 16
  %v213 = vor.u32 %v211, %v209
  %v217 = vunpack.c.l.b16 %v55
  %v218 = vunpack.c.l.b16 %v56
  %v219 = vunpack.c.l.b16 %v57
  %v220 = vpack.c.b16 %v218, %v217
  %v221 = vpack.c.b16 %v219, %v219
  %vm223 = vcmask 195584
  %v225 = vsel %vm223, %v130, 0
  %v228 = vsel %vm223, %v138, 0
  %v231 = vsel %vm223, %v146, 0
  %v234 = vsel %vm223, %v154, 0
  %v237 = vsel %vm223, %v162, 0
  %v240 = vsel %vm223, %v170, 0
  %v243 = vsel %vm223, %v178, 0
  %v246 = vsel %vm223, %v186, 0
  %v249 = vsel %vm223, %v194, 0
  %v252 = vsel %vm223, %v202, 0
  %v255 = vsel %vm223, %v210, 0
  %v258 = vsel %vm223, %v213, 0
  %vm260 = vcmask 1043456
  %v262 = vsel %vm260, %v221, 0
  %264 = vmatprep.subr.bf16.mxu0 0
  %265 = vmatpush1.bf16.msra.mxu0 0
  %266 = vmatprep.subr.bf16.mxu0 0
  %267 = vmatpush1.bf16.msra.mxu0 0
  %268 = vmatprep.subr.bf16.mxu0 0
  %269 = vmatpush1.bf16.msra.mxu0 0
  %270 = vmatprep.subr.bf16.mxu0 0
  %271 = vmatpush1.bf16.msra.mxu0 0
  %272 = vmatprep.subr.bf16.mxu0 0
  %273 = vmatpush1.bf16.msra.mxu0 0
  %274 = vmatprep.subr.bf16.mxu0 0
  %275 = vmatpush1.bf16.msra.mxu0 0
  %276 = vmatprep.subr.bf16.mxu0 0
  %277 = vmatpush1.bf16.msra.mxu0 %v262
  %278 = vmatprep.subr.bf16.mxu0 0
  %279 = vmatpush1.bf16.msra.mxu0 %v220
  %280 = vmatprep.subr.bf16.mxu0 0
  %281 = vmatpush2.bf16.msra.mxu0 0
  %282 = vmatprep.subr.bf16.mxu0 0
  %283 = vmatpush2.bf16.msra.mxu0 0
  %284 = vmatprep.subr.bf16.mxu0 0
  %285 = vmatpush2.bf16.msra.mxu0 0
  %286 = vmatprep.subr.bf16.mxu0 0
  %287 = vmatpush2.bf16.msra.mxu0 0
  %288 = vmatprep.subr.bf16.mxu0 0
  %289 = vmatpush2.bf16.msra.mxu0 0
  %290 = vmatprep.subr.bf16.mxu0 0
  %291 = vmatpush2.bf16.msra.mxu0 0
  %292 = vmatprep.subr.bf16.mxu0 0
  %293 = vmatpush2.bf16.msra.mxu0 0
  %294 = vmatprep.subr.bf16.mxu0 0
  %295 = vmatpush2.bf16.msra.mxu0 0
  %296 = vmatprep.mubr.bf16.mxu0 0
  %297 = vmatmul.mubr.bf16.gmra.mxu0 %v225
  %v298 = vpop.f32.mrf.mxu0
  %v299 = vadd.f32 0.0, %v298
  %v300 = vpop.f32.mrf.mxu0
  %v301 = vpop.f32.mrf.mxu0
  %v302 = vadd.f32 0.0, %v301
  %v303 = vpop.f32.mrf.mxu0
  %304 = vmatprep.mubr.bf16.mxu0 0
  %305 = vmatmul.mubr.bf16.gmra.mxu0 %v228
  %v306 = vpop.f32.mrf.mxu0
  %v307 = vadd.f32 0.0, %v306
  %v308 = vpop.f32.mrf.mxu0
  %v309 = vpop.f32.mrf.mxu0
  %v310 = vadd.f32 0.0, %v309
  %v311 = vpop.f32.mrf.mxu0
  %312 = vmatprep.mubr.bf16.mxu0 0
  %313 = vmatmul.mubr.bf16.gmra.mxu0 %v231
  %v314 = vpop.f32.mrf.mxu0
  %v315 = vadd.f32 0.0, %v314
  %v316 = vpop.f32.mrf.mxu0
  %v317 = vpop.f32.mrf.mxu0
  %v318 = vadd.f32 0.0, %v317
  %v319 = vpop.f32.mrf.mxu0
  %320 = vmatprep.mubr.bf16.mxu0 0
  %321 = vmatmul.mubr.bf16.gmra.mxu0 %v234
  %v322 = vpop.f32.mrf.mxu0
  %v323 = vadd.f32 0.0, %v322
  %v324 = vpop.f32.mrf.mxu0
  %v325 = vpop.f32.mrf.mxu0
  %v326 = vadd.f32 0.0, %v325
  %v327 = vpop.f32.mrf.mxu0
  %328 = vmatprep.mubr.bf16.mxu0 0
  %329 = vmatmul.mubr.bf16.gmra.mxu0 %v237
  %v330 = vpop.f32.mrf.mxu0
  %v331 = vadd.f32 0.0, %v330
  %v332 = vpop.f32.mrf.mxu0
  %v333 = vpop.f32.mrf.mxu0
  %v334 = vadd.f32 0.0, %v333
  %v335 = vpop.f32.mrf.mxu0
  %336 = vmatprep.mubr.bf16.mxu0 0
  %337 = vmatmul.mubr.bf16.gmra.mxu0 %v240
  %v338 = vpop.f32.mrf.mxu0
  %v339 = vadd.f32 0.0, %v338
  %v340 = vpop.f32.mrf.mxu0
  %v341 = vpop.f32.mrf.mxu0
  %v342 = vadd.f32 0.0, %v341
  %v343 = vpop.f32.mrf.mxu0
  %344 = vmatprep.mubr.bf16.mxu0 0
  %345 = vmatmul.mubr.bf16.gmra.mxu0 %v243
  %v346 = vpop.f32.mrf.mxu0
  %v347 = vadd.f32 0.0, %v346
  %v348 = vpop.f32.mrf.mxu0
  %v349 = vpop.f32.mrf.mxu0
  %v350 = vadd.f32 0.0, %v349
  %v351 = vpop.f32.mrf.mxu0
  %352 = vmatprep.mubr.bf16.mxu0 0
  %353 = vmatmul.mubr.bf16.gmra.mxu0 %v246
  %v354 = vpop.f32.mrf.mxu0
  %v355 = vadd.f32 0.0, %v354
  %v356 = vpop.f32.mrf.mxu0
  %v357 = vpop.f32.mrf.mxu0
  %v358 = vadd.f32 0.0, %v357
  %v359 = vpop.f32.mrf.mxu0
  %360 = vmatprep.mubr.bf16.mxu0 0
  %361 = vmatmul.mubr.bf16.gmra.mxu0 %v249
  %v362 = vpop.f32.mrf.mxu0
  %v363 = vadd.f32 0.0, %v362
  %v364 = vpop.f32.mrf.mxu0
  %v365 = vpop.f32.mrf.mxu0
  %v366 = vadd.f32 0.0, %v365
  %v367 = vpop.f32.mrf.mxu0
  %368 = vmatprep.mubr.bf16.mxu0 0
  %369 = vmatmul.mubr.bf16.gmra.mxu0 %v252
  %v370 = vpop.f32.mrf.mxu0
  %v371 = vadd.f32 0.0, %v370
  %v372 = vpop.f32.mrf.mxu0
  %v373 = vpop.f32.mrf.mxu0
  %v374 = vadd.f32 0.0, %v373
  %v375 = vpop.f32.mrf.mxu0
  %376 = vmatprep.mubr.bf16.mxu0 0
  %377 = vmatmul.mubr.bf16.gmra.mxu0 %v255
  %v378 = vpop.f32.mrf.mxu0
  %v379 = vadd.f32 0.0, %v378
  %v380 = vpop.f32.mrf.mxu0
  %v381 = vpop.f32.mrf.mxu0
  %v382 = vadd.f32 0.0, %v381
  %v383 = vpop.f32.mrf.mxu0
  %384 = vmatprep.mubr.bf16.mxu0 0
  %385 = vmatmul.mubr.bf16.gmra.mxu0 %v258
  %v386 = vpop.f32.mrf.mxu0
  %v387 = vadd.f32 0.0, %v386
  %v388 = vpop.f32.mrf.mxu0
  %v389 = vpop.f32.mrf.mxu0
  %v390 = vpop.f32.mrf.mxu0
  %391 = vdwg.mxu0
  %v392 = vpack.c.b16 %v104, %v104
  %v396 = vunpack.c.l.b16 %v50
  %v397 = vunpack.c.l.b16 %v51
  %v398 = vunpack.c.l.b16 %v52
  %v399 = vpack.c.b16 %v397, %v396
  %v400 = vpack.c.b16 %v398, %v398
  %v402 = vsel %vm223, %v106, 0
  %v404 = vsel %vm223, %v107, 0
  %v406 = vsel %vm223, %v108, 0
  %v408 = vsel %vm223, %v109, 0
  %v410 = vsel %vm223, %v110, 0
  %v412 = vsel %vm223, %v111, 0
  %v414 = vsel %vm223, %v112, 0
  %v416 = vsel %vm223, %v113, 0
  %v418 = vsel %vm223, %v114, 0
  %v420 = vsel %vm223, %v115, 0
  %v422 = vsel %vm223, %v116, 0
  %v425 = vsel %vm223, %v392, 0
  %v428 = vsel %vm260, %v400, 0
  %430 = vmatprep.subr.bf16.mxu0 0
  %431 = vmatpush1.bf16.msra.mxu0 0
  %432 = vmatprep.subr.bf16.mxu0 0
  %433 = vmatpush1.bf16.msra.mxu0 0
  %434 = vmatprep.subr.bf16.mxu0 0
  %435 = vmatpush1.bf16.msra.mxu0 0
  %436 = vmatprep.subr.bf16.mxu0 0
  %437 = vmatpush1.bf16.msra.mxu0 0
  %438 = vmatprep.subr.bf16.mxu0 0
  %439 = vmatpush1.bf16.msra.mxu0 0
  %440 = vmatprep.subr.bf16.mxu0 0
  %441 = vmatpush1.bf16.msra.mxu0 0
  %442 = vmatprep.subr.bf16.mxu0 0
  %443 = vmatpush1.bf16.msra.mxu0 %v428
  %444 = vmatprep.subr.bf16.mxu0 0
  %445 = vmatpush1.bf16.msra.mxu0 %v399
  %446 = vmatprep.subr.bf16.mxu0 0
  %447 = vmatpush2.bf16.msra.mxu0 0
  %448 = vmatprep.subr.bf16.mxu0 0
  %449 = vmatpush2.bf16.msra.mxu0 0
  %450 = vmatprep.subr.bf16.mxu0 0
  %451 = vmatpush2.bf16.msra.mxu0 0
  %452 = vmatprep.subr.bf16.mxu0 0
  %453 = vmatpush2.bf16.msra.mxu0 0
  %454 = vmatprep.subr.bf16.mxu0 0
  %455 = vmatpush2.bf16.msra.mxu0 0
  %456 = vmatprep.subr.bf16.mxu0 0
  %457 = vmatpush2.bf16.msra.mxu0 0
  %458 = vmatprep.subr.bf16.mxu0 0
  %459 = vmatpush2.bf16.msra.mxu0 0
  %460 = vmatprep.subr.bf16.mxu0 0
  %461 = vmatpush2.bf16.msra.mxu0 0
  %462 = vmatprep.mubr.bf16.mxu0 0
  %463 = vmatmul.mubr.bf16.gmra.mxu0 %v402
  %v464 = vpop.f32.mrf.mxu0
  %v465 = vadd.f32 %v299, %v464
  %v466 = vpop.f32.mrf.mxu0
  %v467 = vpop.f32.mrf.mxu0
  %v468 = vadd.f32 %v302, %v467
  %v469 = vpop.f32.mrf.mxu0
  %470 = vmatprep.mubr.bf16.mxu0 0
  %471 = vmatmul.mubr.bf16.gmra.mxu0 %v404
  %v472 = vpop.f32.mrf.mxu0
  %v473 = vadd.f32 %v307, %v472
  %v474 = vpop.f32.mrf.mxu0
  %v475 = vpop.f32.mrf.mxu0
  %v476 = vadd.f32 %v310, %v475
  %v477 = vpop.f32.mrf.mxu0
  %478 = vmatprep.mubr.bf16.mxu0 0
  %479 = vmatmul.mubr.bf16.gmra.mxu0 %v406
  %v480 = vpop.f32.mrf.mxu0
  %v481 = vadd.f32 %v315, %v480
  %v482 = vpop.f32.mrf.mxu0
  %v483 = vpop.f32.mrf.mxu0
  %v484 = vadd.f32 %v318, %v483
  %v485 = vpop.f32.mrf.mxu0
  %486 = vmatprep.mubr.bf16.mxu0 0
  %487 = vmatmul.mubr.bf16.gmra.mxu0 %v408
  %v488 = vpop.f32.mrf.mxu0
  %v489 = vadd.f32 %v323, %v488
  %v490 = vpop.f32.mrf.mxu0
  %v491 = vpop.f32.mrf.mxu0
  %v492 = vadd.f32 %v326, %v491
  %v493 = vpop.f32.mrf.mxu0
  %494 = vmatprep.mubr.bf16.mxu0 0
  %495 = vmatmul.mubr.bf16.gmra.mxu0 %v410
  %v496 = vpop.f32.mrf.mxu0
  %v497 = vadd.f32 %v331, %v496
  %v498 = vpop.f32.mrf.mxu0
  %v499 = vpop.f32.mrf.mxu0
  %v500 = vadd.f32 %v334, %v499
  %v501 = vpop.f32.mrf.mxu0
  %502 = vmatprep.mubr.bf16.mxu0 0
  %503 = vmatmul.mubr.bf16.gmra.mxu0 %v412
  %v504 = vpop.f32.mrf.mxu0
  %v505 = vadd.f32 %v339, %v504
  %v506 = vpop.f32.mrf.mxu0
  %v507 = vpop.f32.mrf.mxu0
  %v508 = vadd.f32 %v342, %v507
  %v509 = vpop.f32.mrf.mxu0
  %510 = vmatprep.mubr.bf16.mxu0 0
  %511 = vmatmul.mubr.bf16.gmra.mxu0 %v414
  %v512 = vpop.f32.mrf.mxu0
  %v513 = vadd.f32 %v347, %v512
  %v514 = vpop.f32.mrf.mxu0
  %v515 = vpop.f32.mrf.mxu0
  %v516 = vadd.f32 %v350, %v515
  %v517 = vpop.f32.mrf.mxu0
  %518 = vmatprep.mubr.bf16.mxu0 0
  %519 = vmatmul.mubr.bf16.gmra.mxu0 %v416
  %v520 = vpop.f32.mrf.mxu0
  %v521 = vadd.f32 %v355, %v520
  %v522 = vpop.f32.mrf.mxu0
  %v523 = vpop.f32.mrf.mxu0
  %v524 = vadd.f32 %v358, %v523
  %v525 = vpop.f32.mrf.mxu0
  %526 = vmatprep.mubr.bf16.mxu0 0
  %527 = vmatmul.mubr.bf16.gmra.mxu0 %v418
  %v528 = vpop.f32.mrf.mxu0
  %v529 = vadd.f32 %v363, %v528
  %v530 = vpop.f32.mrf.mxu0
  %v531 = vpop.f32.mrf.mxu0
  %v532 = vadd.f32 %v366, %v531
  %v533 = vpop.f32.mrf.mxu0
  %534 = vmatprep.mubr.bf16.mxu0 0
  %535 = vmatmul.mubr.bf16.gmra.mxu0 %v420
  %v536 = vpop.f32.mrf.mxu0
  %v537 = vadd.f32 %v371, %v536
  %v538 = vpop.f32.mrf.mxu0
  %v539 = vpop.f32.mrf.mxu0
  %v540 = vadd.f32 %v374, %v539
  %v541 = vpop.f32.mrf.mxu0
  %542 = vmatprep.mubr.bf16.mxu0 0
  %543 = vmatmul.mubr.bf16.gmra.mxu0 %v422
  %v544 = vpop.f32.mrf.mxu0
  %v545 = vadd.f32 %v379, %v544
  %v546 = vpop.f32.mrf.mxu0
  %v547 = vpop.f32.mrf.mxu0
  %v548 = vadd.f32 %v382, %v547
  %v549 = vpop.f32.mrf.mxu0
  %550 = vmatprep.mubr.bf16.mxu0 0
  %551 = vmatmul.mubr.bf16.gmra.mxu0 %v425
  %v552 = vpop.f32.mrf.mxu0
  %v553 = vadd.f32 %v387, %v552
  %v554 = vpop.f32.mrf.mxu0
  %v555 = vpop.f32.mrf.mxu0
  %v556 = vpop.f32.mrf.mxu0
  %557 = vdwg.mxu0
  %v558 = vld [vmem:[%s0] sm:$0xe]
  %s559 = scalar_lea.vmem %s1, 24
  %v560 = vld [vmem:[%s559] sm:$0xf]
  %v561 = vld [vmem:[%s559 + $0x4] sm:$0xf]
  %v562 = vld [vmem:[%s559 + $0x8] sm:$0xf]
  %v564 = vunpack.c.l.b16 %v558
  %v565 = vpack.c.b16 %v83, %v564
  %vm566 = vcmask 1046528
  %v567 = vrot.slane %v565, 1
  %v568 = vrot.slane %v107, 1
  %v569 = vsel %vm566, %v567, %v568
  %v570 = vrot.slane %v108, 1
  %v571 = vsel %vm566, %v568, %v570
  %v572 = vrot.slane %v109, 1
  %v573 = vsel %vm566, %v570, %v572
  %v574 = vrot.slane %v110, 1
  %v575 = vsel %vm566, %v572, %v574
  %v576 = vrot.slane %v111, 1
  %v577 = vsel %vm566, %v574, %v576
  %v578 = vrot.slane %v112, 1
  %v579 = vsel %vm566, %v576, %v578
  %v580 = vrot.slane %v113, 1
  %v581 = vsel %vm566, %v578, %v580
  %v582 = vrot.slane %v114, 1
  %v583 = vsel %vm566, %v580, %v582
  %v584 = vrot.slane %v115, 1
  %v585 = vsel %vm566, %v582, %v584
  %v586 = vrot.slane %v116, 1
  %v587 = vsel %vm566, %v584, %v586
  %v588 = vrot.slane %v117, 1
  %v589 = vsel %vm566, %v586, %v588
  %v593 = vunpack.c.l.b16 %v560
  %v594 = vunpack.c.l.b16 %v561
  %v595 = vunpack.c.l.b16 %v562
  %v596 = vpack.c.b16 %v594, %v593
  %v597 = vpack.c.b16 %v595, %v595
  %v600 = vsel %vm223, %v569, 0
  %v603 = vsel %vm223, %v571, 0
  %v606 = vsel %vm223, %v573, 0
  %v609 = vsel %vm223, %v575, 0
  %v612 = vsel %vm223, %v577, 0
  %v615 = vsel %vm223, %v579, 0
  %v618 = vsel %vm223, %v581, 0
  %v621 = vsel %vm223, %v583, 0
  %v624 = vsel %vm223, %v585, 0
  %v627 = vsel %vm223, %v587, 0
  %v630 = vsel %vm223, %v589, 0
  %v633 = vsel %vm223, %v588, 0
  %v636 = vsel %vm260, %v597, 0
  %638 = vmatprep.subr.bf16.mxu0 0
  %639 = vmatpush1.bf16.msra.mxu0 0
  %640 = vmatprep.subr.bf16.mxu0 0
  %641 = vmatpush1.bf16.msra.mxu0 0
  %642 = vmatprep.subr.bf16.mxu0 0
  %643 = vmatpush1.bf16.msra.mxu0 0
  %644 = vmatprep.subr.bf16.mxu0 0
  %645 = vmatpush1.bf16.msra.mxu0 0
  %646 = vmatprep.subr.bf16.mxu0 0
  %647 = vmatpush1.bf16.msra.mxu0 0
  %648 = vmatprep.subr.bf16.mxu0 0
  %649 = vmatpush1.bf16.msra.mxu0 0
  %650 = vmatprep.subr.bf16.mxu0 0
  %651 = vmatpush1.bf16.msra.mxu0 %v636
  %652 = vmatprep.subr.bf16.mxu0 0
  %653 = vmatpush1.bf16.msra.mxu0 %v596
  %654 = vmatprep.subr.bf16.mxu0 0
  %655 = vmatpush2.bf16.msra.mxu0 0
  %656 = vmatprep.subr.bf16.mxu0 0
  %657 = vmatpush2.bf16.msra.mxu0 0
  %658 = vmatprep.subr.bf16.mxu0 0
  %659 = vmatpush2.bf16.msra.mxu0 0
  %660 = vmatprep.subr.bf16.mxu0 0
  %661 = vmatpush2.bf16.msra.mxu0 0
  %662 = vmatprep.subr.bf16.mxu0 0
  %663 = vmatpush2.bf16.msra.mxu0 0
  %664 = vmatprep.subr.bf16.mxu0 0
  %665 = vmatpush2.bf16.msra.mxu0 0
  %666 = vmatprep.subr.bf16.mxu0 0
  %667 = vmatpush2.bf16.msra.mxu0 0
  %668 = vmatprep.subr.bf16.mxu0 0
  %669 = vmatpush2.bf16.msra.mxu0 0
  %670 = vmatprep.mubr.bf16.mxu0 0
  %671 = vmatmul.mubr.bf16.gmra.mxu0 %v600
  %v672 = vpop.f32.mrf.mxu0
  %v673 = vadd.f32 0.0, %v672
  %v674 = vpop.f32.mrf.mxu0
  %v675 = vpop.f32.mrf.mxu0
  %v676 = vadd.f32 0.0, %v675
  %v677 = vpop.f32.mrf.mxu0
  %678 = vmatprep.mubr.bf16.mxu0 0
  %679 = vmatmul.mubr.bf16.gmra.mxu0 %v603
  %v680 = vpop.f32.mrf.mxu0
  %v681 = vadd.f32 0.0, %v680
  %v682 = vpop.f32.mrf.mxu0
  %v683 = vpop.f32.mrf.mxu0
  %v684 = vadd.f32 0.0, %v683
  %v685 = vpop.f32.mrf.mxu0
  %686 = vmatprep.mubr.bf16.mxu0 0
  %687 = vmatmul.mubr.bf16.gmra.mxu0 %v606
  %v688 = vpop.f32.mrf.mxu0
  %v689 = vadd.f32 0.0, %v688
  %v690 = vpop.f32.mrf.mxu0
  %v691 = vpop.f32.mrf.mxu0
  %v692 = vadd.f32 0.0, %v691
  %v693 = vpop.f32.mrf.mxu0
  %694 = vmatprep.mubr.bf16.mxu0 0
  %695 = vmatmul.mubr.bf16.gmra.mxu0 %v609
  %v696 = vpop.f32.mrf.mxu0
  %v697 = vadd.f32 0.0, %v696
  %v698 = vpop.f32.mrf.mxu0
  %v699 = vpop.f32.mrf.mxu0
  %v700 = vadd.f32 0.0, %v699
  %v701 = vpop.f32.mrf.mxu0
  %702 = vmatprep.mubr.bf16.mxu0 0
  %703 = vmatmul.mubr.bf16.gmra.mxu0 %v612
  %v704 = vpop.f32.mrf.mxu0
  %v705 = vadd.f32 0.0, %v704
  %v706 = vpop.f32.mrf.mxu0
  %v707 = vpop.f32.mrf.mxu0
  %v708 = vadd.f32 0.0, %v707
  %v709 = vpop.f32.mrf.mxu0
  %710 = vmatprep.mubr.bf16.mxu0 0
  %711 = vmatmul.mubr.bf16.gmra.mxu0 %v615
  %v712 = vpop.f32.mrf.mxu0
  %v713 = vadd.f32 0.0, %v712
  %v714 = vpop.f32.mrf.mxu0
  %v715 = vpop.f32.mrf.mxu0
  %v716 = vadd.f32 0.0, %v715
  %v717 = vpop.f32.mrf.mxu0
  %718 = vmatprep.mubr.bf16.mxu0 0
  %719 = vmatmul.mubr.bf16.gmra.mxu0 %v618
  %v720 = vpop.f32.mrf.mxu0
  %v721 = vadd.f32 0.0, %v720
  %v722 = vpop.f32.mrf.mxu0
  %v723 = vpop.f32.mrf.mxu0
  %v724 = vadd.f32 0.0, %v723
  %v725 = vpop.f32.mrf.mxu0
  %726 = vmatprep.mubr.bf16.mxu0 0
  %727 = vmatmul.mubr.bf16.gmra.mxu0 %v621
  %v728 = vpop.f32.mrf.mxu0
  %v729 = vadd.f32 0.0, %v728
  %v730 = vpop.f32.mrf.mxu0
  %v731 = vpop.f32.mrf.mxu0
  %v732 = vadd.f32 0.0, %v731
  %v733 = vpop.f32.mrf.mxu0
  %734 = vmatprep.mubr.bf16.mxu0 0
  %735 = vmatmul.mubr.bf16.gmra.mxu0 %v624
  %v736 = vpop.f32.mrf.mxu0
  %v737 = vadd.f32 0.0, %v736
  %v738 = vpop.f32.mrf.mxu0
  %v739 = vpop.f32.mrf.mxu0
  %v740 = vadd.f32 0.0, %v739
  %v741 = vpop.f32.mrf.mxu0
  %742 = vmatprep.mubr.bf16.mxu0 0
  %743 = vmatmul.mubr.bf16.gmra.mxu0 %v627
  %v744 = vpop.f32.mrf.mxu0
  %v745 = vadd.f32 0.0, %v744
  %v746 = vpop.f32.mrf.mxu0
  %v747 = vpop.f32.mrf.mxu0
  %v748 = vadd.f32 0.0, %v747
  %v749 = vpop.f32.mrf.mxu0
  %750 = vmatprep.mubr.bf16.mxu0 0
  %751 = vmatmul.mubr.bf16.gmra.mxu0 %v630
  %v752 = vpop.f32.mrf.mxu0
  %v753 = vadd.f32 0.0, %v752
  %v754 = vpop.f32.mrf.mxu0
  %v755 = vpop.f32.mrf.mxu0
  %v756 = vadd.f32 0.0, %v755
  %v757 = vpop.f32.mrf.mxu0
  %758 = vmatprep.mubr.bf16.mxu0 0
  %759 = vmatmul.mubr.bf16.gmra.mxu0 %v633
  %v760 = vpop.f32.mrf.mxu0
  %v761 = vadd.f32 0.0, %v760
  %v762 = vpop.f32.mrf.mxu0
  %v763 = vpop.f32.mrf.mxu0
  %v764 = vpop.f32.mrf.mxu0
  %765 = vdwg.mxu0
  %v766 = vadd.f32 %v465, %v673
  %v767 = vadd.f32 %v468, %v676
  %v768 = vadd.f32 %v473, %v681
  %v769 = vadd.f32 %v476, %v684
  %v770 = vadd.f32 %v481, %v689
  %v771 = vadd.f32 %v484, %v692
  %v772 = vadd.f32 %v489, %v697
  %v773 = vadd.f32 %v492, %v700
  %v774 = vadd.f32 %v497, %v705
  %v775 = vadd.f32 %v500, %v708
  %v776 = vadd.f32 %v505, %v713
  %v777 = vadd.f32 %v508, %v716
  %v778 = vadd.f32 %v513, %v721
  %v779 = vadd.f32 %v516, %v724
  %v780 = vadd.f32 %v521, %v729
  %v781 = vadd.f32 %v524, %v732
  %v782 = vadd.f32 %v529, %v737
  %v783 = vadd.f32 %v532, %v740
  %v784 = vadd.f32 %v537, %v745
  %v785 = vadd.f32 %v540, %v748
  %v786 = vadd.f32 %v545, %v753
  %v787 = vadd.f32 %v548, %v756
  %v788 = vadd.f32 %v553, %v761
  %v789 = vld [vmem:[%s0 + $0x4] sm:$0xe]
  %v790 = vld [vmem:[%s0 + $0x8] sm:$0xf]
  %v791 = vld [vmem:[%s0 + $0xc] sm:$0xf]
  %v792 = vld [vmem:[%s0 + $0x10] sm:$0xf]
  %v793 = vld [vmem:[%s0 + $0x14] sm:$0xf]
  %v794 = vld [vmem:[%s0 + $0x18] sm:$0xf]
  %v795 = vld [vmem:[%s0 + $0x1c] sm:$0xf]
  %v796 = vld [vmem:[%s0 + $0x20] sm:$0xf]
  %v797 = vld [vmem:[%s0 + $0x24] sm:$0xf]
  %v798 = vld [vmem:[%s0 + $0x28] sm:$0xf]
  %v799 = vld [vmem:[%s0 + $0x2c] sm:$0xf]
  %v800 = vld [vmem:[%s0 + $0x30] sm:$0xf]
  %v801 = vld [vmem:[%s0 + $0x34] sm:$0xf]
  %v802 = vld [vmem:[%s0 + $0x38] sm:$0xf]
  %v803 = vld [vmem:[%s0 + $0x3c] sm:$0xf]
  %v804 = vld [vmem:[%s0 + $0x40] sm:$0xf]
  %v805 = vld [vmem:[%s0 + $0x44] sm:$0xf]
  %v806 = vld [vmem:[%s0 + $0x48] sm:$0xf]
  %v807 = vld [vmem:[%s0 + $0x4c] sm:$0xf]
  %v808 = vld [vmem:[%s0 + $0x50] sm:$0xf]
  %v809 = vld [vmem:[%s0 + $0x54] sm:$0xf]
  %v810 = vld [vmem:[%s0 + $0x58] sm:$0xf]
  %v811 = vld [vmem:[%s0 + $0x5c] sm:$0xf]
  %v812 = vld [vmem:[%s0 + $0x60] sm:$0x1]
  %s813 = scalar_lea.vmem %s1, 36
  %v814 = vld [vmem:[%s813] sm:$0xf]
  %v815 = vld [vmem:[%s813 + $0x4] sm:$0xf]
  %v816 = vld [vmem:[%s813 + $0x8] sm:$0xf]
  %v841 = vunpack.c.l.b16 %v789
  %v842 = vunpack.c.l.b16 %v790
  %v843 = vunpack.c.l.b16 %v791
  %v844 = vunpack.c.l.b16 %v792
  %v845 = vunpack.c.l.b16 %v793
  %v846 = vunpack.c.l.b16 %v794
  %v847 = vunpack.c.l.b16 %v795
  %v848 = vunpack.c.l.b16 %v796
  %v849 = vunpack.c.l.b16 %v797
  %v850 = vunpack.c.l.b16 %v798
  %v851 = vunpack.c.l.b16 %v799
  %v852 = vunpack.c.l.b16 %v800
  %v853 = vunpack.c.l.b16 %v801
  %v854 = vunpack.c.l.b16 %v802
  %v855 = vunpack.c.l.b16 %v803
  %v856 = vunpack.c.l.b16 %v804
  %v857 = vunpack.c.l.b16 %v805
  %v858 = vunpack.c.l.b16 %v806
  %v859 = vunpack.c.l.b16 %v807
  %v860 = vunpack.c.l.b16 %v808
  %v861 = vunpack.c.l.b16 %v809
  %v862 = vunpack.c.l.b16 %v810
  %v863 = vunpack.c.l.b16 %v811
  %v864 = vunpack.c.l.b16 %v812
  %v865 = vpack.c.b16 %v842, %v841
  %v866 = vpack.c.b16 %v844, %v843
  %v867 = vpack.c.b16 %v846, %v845
  %v868 = vpack.c.b16 %v848, %v847
  %v869 = vpack.c.b16 %v850, %v849
  %v870 = vpack.c.b16 %v852, %v851
  %v871 = vpack.c.b16 %v854, %v853
  %v872 = vpack.c.b16 %v856, %v855
  %v873 = vpack.c.b16 %v858, %v857
  %v874 = vpack.c.b16 %v860, %v859
  %v875 = vpack.c.b16 %v862, %v861
  %v876 = vpack.c.b16 %v864, %v863
  %v877 = vrot.slane %v865, 1
  %v878 = vrot.slane %v866, 1
  %v879 = vsel %vm566, %v877, %v878
  %v880 = vrot.slane %v867, 1
  %v881 = vsel %vm566, %v878, %v880
  %v882 = vrot.slane %v868, 1
  %v883 = vsel %vm566, %v880, %v882
  %v884 = vrot.slane %v869, 1
  %v885 = vsel %vm566, %v882, %v884
  %v886 = vrot.slane %v870, 1
  %v887 = vsel %vm566, %v884, %v886
  %v888 = vrot.slane %v871, 1
  %v889 = vsel %vm566, %v886, %v888
  %v890 = vrot.slane %v872, 1
  %v891 = vsel %vm566, %v888, %v890
  %v892 = vrot.slane %v873, 1
  %v893 = vsel %vm566, %v890, %v892
  %v894 = vrot.slane %v874, 1
  %v895 = vsel %vm566, %v892, %v894
  %v896 = vrot.slane %v875, 1
  %v897 = vsel %vm566, %v894, %v896
  %v898 = vrot.slane %v876, 1
  %v899 = vsel %vm566, %v896, %v898
  %v903 = vunpack.c.l.b16 %v814
  %v904 = vunpack.c.l.b16 %v815
  %v905 = vunpack.c.l.b16 %v816
  %v906 = vpack.c.b16 %v904, %v903
  %v907 = vpack.c.b16 %v905, %v905
  %v910 = vsel %vm223, %v879, 0
  %v913 = vsel %vm223, %v881, 0
  %v916 = vsel %vm223, %v883, 0
  %v919 = vsel %vm223, %v885, 0
  %v922 = vsel %vm223, %v887, 0
  %v925 = vsel %vm223, %v889, 0
  %v928 = vsel %vm223, %v891, 0
  %v931 = vsel %vm223, %v893, 0
  %v934 = vsel %vm223, %v895, 0
  %v937 = vsel %vm223, %v897, 0
  %v940 = vsel %vm223, %v899, 0
  %v943 = vsel %vm223, %v898, 0
  %v946 = vsel %vm260, %v907, 0
  %948 = vmatprep.subr.bf16.mxu0 0
  %949 = vmatpush1.bf16.msra.mxu0 0
  %950 = vmatprep.subr.bf16.mxu0 0
  %951 = vmatpush1.bf16.msra.mxu0 0
  %952 = vmatprep.subr.bf16.mxu0 0
  %953 = vmatpush1.bf16.msra.mxu0 0
  %954 = vmatprep.subr.bf16.mxu0 0
  %955 = vmatpush1.bf16.msra.mxu0 0
  %956 = vmatprep.subr.bf16.mxu0 0
  %957 = vmatpush1.bf16.msra.mxu0 0
  %958 = vmatprep.subr.bf16.mxu0 0
  %959 = vmatpush1.bf16.msra.mxu0 0
  %960 = vmatprep.subr.bf16.mxu0 0
  %961 = vmatpush1.bf16.msra.mxu0 %v946
  %962 = vmatprep.subr.bf16.mxu0 0
  %963 = vmatpush1.bf16.msra.mxu0 %v906
  %964 = vmatprep.subr.bf16.mxu0 0
  %965 = vmatpush2.bf16.msra.mxu0 0
  %966 = vmatprep.subr.bf16.mxu0 0
  %967 = vmatpush2.bf16.msra.mxu0 0
  %968 = vmatprep.subr.bf16.mxu0 0
  %969 = vmatpush2.bf16.msra.mxu0 0
  %970 = vmatprep.subr.bf16.mxu0 0
  %971 = vmatpush2.bf16.msra.mxu0 0
  %972 = vmatprep.subr.bf16.mxu0 0
  %973 = vmatpush2.bf16.msra.mxu0 0
  %974 = vmatprep.subr.bf16.mxu0 0
  %975 = vmatpush2.bf16.msra.mxu0 0
  %976 = vmatprep.subr.bf16.mxu0 0
  %977 = vmatpush2.bf16.msra.mxu0 0
  %978 = vmatprep.subr.bf16.mxu0 0
  %979 = vmatpush2.bf16.msra.mxu0 0
  %980 = vmatprep.mubr.bf16.mxu0 0
  %981 = vmatmul.mubr.bf16.gmra.mxu0 %v910
  %v982 = vpop.f32.mrf.mxu0
  %v983 = vadd.f32 0.0, %v982
  %v984 = vpop.f32.mrf.mxu0
  %v985 = vpop.f32.mrf.mxu0
  %v986 = vadd.f32 0.0, %v985
  %v987 = vpop.f32.mrf.mxu0
  %988 = vmatprep.mubr.bf16.mxu0 0
  %989 = vmatmul.mubr.bf16.gmra.mxu0 %v913
  %v990 = vpop.f32.mrf.mxu0
  %v991 = vadd.f32 0.0, %v990
  %v992 = vpop.f32.mrf.mxu0
  %v993 = vpop.f32.mrf.mxu0
  %v994 = vadd.f32 0.0, %v993
  %v995 = vpop.f32.mrf.mxu0
  %996 = vmatprep.mubr.bf16.mxu0 0
  %997 = vmatmul.mubr.bf16.gmra.mxu0 %v916
  %v998 = vpop.f32.mrf.mxu0
  %v999 = vadd.f32 0.0, %v998
  %v1000 = vpop.f32.mrf.mxu0
  %v1001 = vpop.f32.mrf.mxu0
  %v1002 = vadd.f32 0.0, %v1001
  %v1003 = vpop.f32.mrf.mxu0
  %1004 = vmatprep.mubr.bf16.mxu0 0
  %1005 = vmatmul.mubr.bf16.gmra.mxu0 %v919
  %v1006 = vpop.f32.mrf.mxu0
  %v1007 = vadd.f32 0.0, %v1006
  %v1008 = vpop.f32.mrf.mxu0
  %v1009 = vpop.f32.mrf.mxu0
  %v1010 = vadd.f32 0.0, %v1009
  %v1011 = vpop.f32.mrf.mxu0
  %1012 = vmatprep.mubr.bf16.mxu0 0
  %1013 = vmatmul.mubr.bf16.gmra.mxu0 %v922
  %v1014 = vpop.f32.mrf.mxu0
  %v1015 = vadd.f32 0.0, %v1014
  %v1016 = vpop.f32.mrf.mxu0
  %v1017 = vpop.f32.mrf.mxu0
  %v1018 = vadd.f32 0.0, %v1017
  %v1019 = vpop.f32.mrf.mxu0
  %1020 = vmatprep.mubr.bf16.mxu0 0
  %1021 = vmatmul.mubr.bf16.gmra.mxu0 %v925
  %v1022 = vpop.f32.mrf.mxu0
  %v1023 = vadd.f32 0.0, %v1022
  %v1024 = vpop.f32.mrf.mxu0
  %v1025 = vpop.f32.mrf.mxu0
  %v1026 = vadd.f32 0.0, %v1025
  %v1027 = vpop.f32.mrf.mxu0
  %1028 = vmatprep.mubr.bf16.mxu0 0
  %1029 = vmatmul.mubr.bf16.gmra.mxu0 %v928
  %v1030 = vpop.f32.mrf.mxu0
  %v1031 = vadd.f32 0.0, %v1030
  %v1032 = vpop.f32.mrf.mxu0
  %v1033 = vpop.f32.mrf.mxu0
  %v1034 = vadd.f32 0.0, %v1033
  %v1035 = vpop.f32.mrf.mxu0
  %1036 = vmatprep.mubr.bf16.mxu0 0
  %1037 = vmatmul.mubr.bf16.gmra.mxu0 %v931
  %v1038 = vpop.f32.mrf.mxu0
  %v1039 = vadd.f32 0.0, %v1038
  %v1040 = vpop.f32.mrf.mxu0
  %v1041 = vpop.f32.mrf.mxu0
  %v1042 = vadd.f32 0.0, %v1041
  %v1043 = vpop.f32.mrf.mxu0
  %1044 = vmatprep.mubr.bf16.mxu0 0
  %1045 = vmatmul.mubr.bf16.gmra.mxu0 %v934
  %v1046 = vpop.f32.mrf.mxu0
  %v1047 = vadd.f32 0.0, %v1046
  %v1048 = vpop.f32.mrf.mxu0
  %v1049 = vpop.f32.mrf.mxu0
  %v1050 = vadd.f32 0.0, %v1049
  %v1051 = vpop.f32.mrf.mxu0
  %1052 = vmatprep.mubr.bf16.mxu0 0
  %1053 = vmatmul.mubr.bf16.gmra.mxu0 %v937
  %v1054 = vpop.f32.mrf.mxu0
  %v1055 = vadd.f32 0.0, %v1054
  %v1056 = vpop.f32.mrf.mxu0
  %v1057 = vpop.f32.mrf.mxu0
  %v1058 = vadd.f32 0.0, %v1057
  %v1059 = vpop.f32.mrf.mxu0
  %1060 = vmatprep.mubr.bf16.mxu0 0
  %1061 = vmatmul.mubr.bf16.gmra.mxu0 %v940
  %v1062 = vpop.f32.mrf.mxu0
  %v1063 = vadd.f32 0.0, %v1062
  %v1064 = vpop.f32.mrf.mxu0
  %v1065 = vpop.f32.mrf.mxu0
  %v1066 = vadd.f32 0.0, %v1065
  %v1067 = vpop.f32.mrf.mxu0
  %1068 = vmatprep.mubr.bf16.mxu0 0
  %1069 = vmatmul.mubr.bf16.gmra.mxu0 %v943
  %v1070 = vpop.f32.mrf.mxu0
  %v1071 = vadd.f32 0.0, %v1070
  %v1072 = vpop.f32.mrf.mxu0
  %v1073 = vpop.f32.mrf.mxu0
  %v1074 = vpop.f32.mrf.mxu0
  %1075 = vdwg.mxu0
  %v1076 = vadd.f32 %v766, %v983
  %v1077 = vadd.f32 %v767, %v986
  %v1078 = vadd.f32 %v768, %v991
  %v1079 = vadd.f32 %v769, %v994
  %v1080 = vadd.f32 %v770, %v999
  %v1081 = vadd.f32 %v771, %v1002
  %v1082 = vadd.f32 %v772, %v1007
  %v1083 = vadd.f32 %v773, %v1010
  %v1084 = vadd.f32 %v774, %v1015
  %v1085 = vadd.f32 %v775, %v1018
  %v1086 = vadd.f32 %v776, %v1023
  %v1087 = vadd.f32 %v777, %v1026
  %v1088 = vadd.f32 %v778, %v1031
  %v1089 = vadd.f32 %v779, %v1034
  %v1090 = vadd.f32 %v780, %v1039
  %v1091 = vadd.f32 %v781, %v1042
  %v1092 = vadd.f32 %v782, %v1047
  %v1093 = vadd.f32 %v783, %v1050
  %v1094 = vadd.f32 %v784, %v1055
  %v1095 = vadd.f32 %v785, %v1058
  %v1096 = vadd.f32 %v786, %v1063
  %v1097 = vadd.f32 %v787, %v1066
  %v1098 = vadd.f32 %v788, %v1071
  %v1099 = vld [vmem:[%s0 + $0x60] sm:$0x3]
  %s1100 = scalar_lea.vmem %s1, 48
  %v1101 = vld [vmem:[%s1100] sm:$0xf]
  %v1102 = vld [vmem:[%s1100 + $0x4] sm:$0xf]
  %v1103 = vld [vmem:[%s1100 + $0x8] sm:$0xf]
  %v1105 = vunpack.c.l.b16 %v1099
  %v1106 = vpack.c.b16 %v1105, %v863
  %vm1107 = vsmask.f32 6400
  %v1109 = vshrl.u32 %v865, 16
  %v1111 = vrot.slane %v1109, 1
  %v1112 = vshll.u32 %v865, 16
  %v1114 = vrot.slane %v1112, 2
  %v1115 = vor.u32 %v1111, %v1114
  %v1117 = vshrl.u32 %v866, 16
  %v1119 = vrot.slane %v1117, 1
  %v1120 = vshll.u32 %v866, 16
  %v1122 = vrot.slane %v1120, 2
  %v1123 = vor.u32 %v1119, %v1122
  %v1124 = vsel %vm1107, %v1115, %v1123
  %v1126 = vshrl.u32 %v867, 16
  %v1128 = vrot.slane %v1126, 1
  %v1129 = vshll.u32 %v867, 16
  %v1131 = vrot.slane %v1129, 2
  %v1132 = vor.u32 %v1128, %v1131
  %v1133 = vsel %vm1107, %v1123, %v1132
  %v1135 = vshrl.u32 %v868, 16
  %v1137 = vrot.slane %v1135, 1
  %v1138 = vshll.u32 %v868, 16
  %v1140 = vrot.slane %v1138, 2
  %v1141 = vor.u32 %v1137, %v1140
  %v1142 = vsel %vm1107, %v1132, %v1141
  %v1144 = vshrl.u32 %v869, 16
  %v1146 = vrot.slane %v1144, 1
  %v1147 = vshll.u32 %v869, 16
  %v1149 = vrot.slane %v1147, 2
  %v1150 = vor.u32 %v1146, %v1149
  %v1151 = vsel %vm1107, %v1141, %v1150
  %v1153 = vshrl.u32 %v870, 16
  %v1155 = vrot.slane %v1153, 1
  %v1156 = vshll.u32 %v870, 16
  %v1158 = vrot.slane %v1156, 2
  %v1159 = vor.u32 %v1155, %v1158
  %v1160 = vsel %vm1107, %v1150, %v1159
  %v1162 = vshrl.u32 %v871, 16
  %v1164 = vrot.slane %v1162, 1
  %v1165 = vshll.u32 %v871, 16
  %v1167 = vrot.slane %v1165, 2
  %v1168 = vor.u32 %v1164, %v1167
  %v1169 = vsel %vm1107, %v1159, %v1168
  %v1171 = vshrl.u32 %v872, 16
  %v1173 = vrot.slane %v1171, 1
  %v1174 = vshll.u32 %v872, 16
  %v1176 = vrot.slane %v1174, 2
  %v1177 = vor.u32 %v1173, %v1176
  %v1178 = vsel %vm1107, %v1168, %v1177
  %v1180 = vshrl.u32 %v873, 16
  %v1182 = vrot.slane %v1180, 1
  %v1183 = vshll.u32 %v873, 16
  %v1185 = vrot.slane %v1183, 2
  %v1186 = vor.u32 %v1182, %v1185
  %v1187 = vsel %vm1107, %v1177, %v1186
  %v1189 = vshrl.u32 %v874, 16
  %v1191 = vrot.slane %v1189, 1
  %v1192 = vshll.u32 %v874, 16
  %v1194 = vrot.slane %v1192, 2
  %v1195 = vor.u32 %v1191, %v1194
  %v1196 = vsel %vm1107, %v1186, %v1195
  %v1198 = vshrl.u32 %v875, 16
  %v1200 = vrot.slane %v1198, 1
  %v1201 = vshll.u32 %v875, 16
  %v1203 = vrot.slane %v1201, 2
  %v1204 = vor.u32 %v1200, %v1203
  %v1205 = vsel %vm1107, %v1195, %v1204
  %v1207 = vshrl.u32 %v1106, 16
  %v1209 = vrot.slane %v1207, 1
  %v1210 = vshll.u32 %v1106, 16
  %v1212 = vrot.slane %v1210, 2
  %v1213 = vor.u32 %v1209, %v1212
  %v1214 = vsel %vm1107, %v1204, %v1213
  %v1218 = vunpack.c.l.b16 %v1101
  %v1219 = vunpack.c.l.b16 %v1102
  %v1220 = vunpack.c.l.b16 %v1103
  %v1221 = vpack.c.b16 %v1219, %v1218
  %v1222 = vpack.c.b16 %v1220, %v1220
  %v1225 = vsel %vm223, %v1124, 0
  %v1228 = vsel %vm223, %v1133, 0
  %v1231 = vsel %vm223, %v1142, 0
  %v1234 = vsel %vm223, %v1151, 0
  %v1237 = vsel %vm223, %v1160, 0
  %v1240 = vsel %vm223, %v1169, 0
  %v1243 = vsel %vm223, %v1178, 0
  %v1246 = vsel %vm223, %v1187, 0
  %v1249 = vsel %vm223, %v1196, 0
  %v1252 = vsel %vm223, %v1205, 0
  %v1255 = vsel %vm223, %v1214, 0
  %v1258 = vsel %vm223, %v1213, 0
  %v1261 = vsel %vm260, %v1222, 0
  %1263 = vmatprep.subr.bf16.mxu0 0
  %1264 = vmatpush1.bf16.msra.mxu0 0
  %1265 = vmatprep.subr.bf16.mxu0 0
  %1266 = vmatpush1.bf16.msra.mxu0 0
  %1267 = vmatprep.subr.bf16.mxu0 0
  %1268 = vmatpush1.bf16.msra.mxu0 0
  %1269 = vmatprep.subr.bf16.mxu0 0
  %1270 = vmatpush1.bf16.msra.mxu0 0
  %1271 = vmatprep.subr.bf16.mxu0 0
  %1272 = vmatpush1.bf16.msra.mxu0 0
  %1273 = vmatprep.subr.bf16.mxu0 0
  %1274 = vmatpush1.bf16.msra.mxu0 0
  %1275 = vmatprep.subr.bf16.mxu0 0
  %1276 = vmatpush1.bf16.msra.mxu0 %v1261
  %1277 = vmatprep.subr.bf16.mxu0 0
  %1278 = vmatpush1.bf16.msra.mxu0 %v1221
  %1279 = vmatprep.subr.bf16.mxu0 0
  %1280 = vmatpush2.bf16.msra.mxu0 0
  %1281 = vmatprep.subr.bf16.mxu0 0
  %1282 = vmatpush2.bf16.msra.mxu0 0
  %1283 = vmatprep.subr.bf16.mxu0 0
  %1284 = vmatpush2.bf16.msra.mxu0 0
  %1285 = vmatprep.subr.bf16.mxu0 0
  %1286 = vmatpush2.bf16.msra.mxu0 0
  %1287 = vmatprep.subr.bf16.mxu0 0
  %1288 = vmatpush2.bf16.msra.mxu0 0
  %1289 = vmatprep.subr.bf16.mxu0 0
  %1290 = vmatpush2.bf16.msra.mxu0 0
  %1291 = vmatprep.subr.bf16.mxu0 0
  %1292 = vmatpush2.bf16.msra.mxu0 0
  %1293 = vmatprep.subr.bf16.mxu0 0
  %1294 = vmatpush2.bf16.msra.mxu0 0
  %1295 = vmatprep.mubr.bf16.mxu0 0
  %1296 = vmatmul.mubr.bf16.gmra.mxu0 %v1225
  %v1297 = vpop.f32.mrf.mxu0
  %v1298 = vadd.f32 0.0, %v1297
  %v1299 = vpop.f32.mrf.mxu0
  %v1300 = vpop.f32.mrf.mxu0
  %v1301 = vadd.f32 0.0, %v1300
  %v1302 = vpop.f32.mrf.mxu0
  %1303 = vmatprep.mubr.bf16.mxu0 0
  %1304 = vmatmul.mubr.bf16.gmra.mxu0 %v1228
  %v1305 = vpop.f32.mrf.mxu0
  %v1306 = vadd.f32 0.0, %v1305
  %v1307 = vpop.f32.mrf.mxu0
  %v1308 = vpop.f32.mrf.mxu0
  %v1309 = vadd.f32 0.0, %v1308
  %v1310 = vpop.f32.mrf.mxu0
  %1311 = vmatprep.mubr.bf16.mxu0 0
  %1312 = vmatmul.mubr.bf16.gmra.mxu0 %v1231
  %v1313 = vpop.f32.mrf.mxu0
  %v1314 = vadd.f32 0.0, %v1313
  %v1315 = vpop.f32.mrf.mxu0
  %v1316 = vpop.f32.mrf.mxu0
  %v1317 = vadd.f32 0.0, %v1316
  %v1318 = vpop.f32.mrf.mxu0
  %1319 = vmatprep.mubr.bf16.mxu0 0
  %1320 = vmatmul.mubr.bf16.gmra.mxu0 %v1234
  %v1321 = vpop.f32.mrf.mxu0
  %v1322 = vadd.f32 0.0, %v1321
  %v1323 = vpop.f32.mrf.mxu0
  %v1324 = vpop.f32.mrf.mxu0
  %v1325 = vadd.f32 0.0, %v1324
  %v1326 = vpop.f32.mrf.mxu0
  %1327 = vmatprep.mubr.bf16.mxu0 0
  %1328 = vmatmul.mubr.bf16.gmra.mxu0 %v1237
  %v1329 = vpop.f32.mrf.mxu0
  %v1330 = vadd.f32 0.0, %v1329
  %v1331 = vpop.f32.mrf.mxu0
  %v1332 = vpop.f32.mrf.mxu0
  %v1333 = vadd.f32 0.0, %v1332
  %v1334 = vpop.f32.mrf.mxu0
  %1335 = vmatprep.mubr.bf16.mxu0 0
  %1336 = vmatmul.mubr.bf16.gmra.mxu0 %v1240
  %v1337 = vpop.f32.mrf.mxu0
  %v1338 = vadd.f32 0.0, %v1337
  %v1339 = vpop.f32.mrf.mxu0
  %v1340 = vpop.f32.mrf.mxu0
  %v1341 = vadd.f32 0.0, %v1340
  %v1342 = vpop.f32.mrf.mxu0
  %1343 = vmatprep.mubr.bf16.mxu0 0
  %1344 = vmatmul.mubr.bf16.gmra.mxu0 %v1243
  %v1345 = vpop.f32.mrf.mxu0
  %v1346 = vadd.f32 0.0, %v1345
  %v1347 = vpop.f32.mrf.mxu0
  %v1348 = vpop.f32.mrf.mxu0
  %v1349 = vadd.f32 0.0, %v1348
  %v1350 = vpop.f32.mrf.mxu0
  %1351 = vmatprep.mubr.bf16.mxu0 0
  %1352 = vmatmul.mubr.bf16.gmra.mxu0 %v1246
  %v1353 = vpop.f32.mrf.mxu0
  %v1354 = vadd.f32 0.0, %v1353
  %v1355 = vpop.f32.mrf.mxu0
  %v1356 = vpop.f32.mrf.mxu0
  %v1357 = vadd.f32 0.0, %v1356
  %v1358 = vpop.f32.mrf.mxu0
  %1359 = vmatprep.mubr.bf16.mxu0 0
  %1360 = vmatmul.mubr.bf16.gmra.mxu0 %v1249
  %v1361 = vpop.f32.mrf.mxu0
  %v1362 = vadd.f32 0.0, %v1361
  %v1363 = vpop.f32.mrf.mxu0
  %v1364 = vpop.f32.mrf.mxu0
  %v1365 = vadd.f32 0.0, %v1364
  %v1366 = vpop.f32.mrf.mxu0
  %1367 = vmatprep.mubr.bf16.mxu0 0
  %1368 = vmatmul.mubr.bf16.gmra.mxu0 %v1252
  %v1369 = vpop.f32.mrf.mxu0
  %v1370 = vadd.f32 0.0, %v1369
  %v1371 = vpop.f32.mrf.mxu0
  %v1372 = vpop.f32.mrf.mxu0
  %v1373 = vadd.f32 0.0, %v1372
  %v1374 = vpop.f32.mrf.mxu0
  %1375 = vmatprep.mubr.bf16.mxu0 0
  %1376 = vmatmul.mubr.bf16.gmra.mxu0 %v1255
  %v1377 = vpop.f32.mrf.mxu0
  %v1378 = vadd.f32 0.0, %v1377
  %v1379 = vpop.f32.mrf.mxu0
  %v1380 = vpop.f32.mrf.mxu0
  %v1381 = vadd.f32 0.0, %v1380
  %v1382 = vpop.f32.mrf.mxu0
  %1383 = vmatprep.mubr.bf16.mxu0 0
  %1384 = vmatmul.mubr.bf16.gmra.mxu0 %v1258
  %v1385 = vpop.f32.mrf.mxu0
  %v1386 = vadd.f32 0.0, %v1385
  %v1387 = vpop.f32.mrf.mxu0
  %v1388 = vpop.f32.mrf.mxu0
  %v1389 = vpop.f32.mrf.mxu0
  %1390 = vdwg.mxu0
  %v1391 = vadd.f32 %v1076, %v1298
  %v1392 = vadd.f32 %v1077, %v1301
  %v1393 = vadd.f32 %v1078, %v1306
  %v1394 = vadd.f32 %v1079, %v1309
  %v1395 = vadd.f32 %v1080, %v1314
  %v1396 = vadd.f32 %v1081, %v1317
  %v1397 = vadd.f32 %v1082, %v1322
  %v1398 = vadd.f32 %v1083, %v1325
  %v1399 = vadd.f32 %v1084, %v1330
  %v1400 = vadd.f32 %v1085, %v1333
  %v1401 = vadd.f32 %v1086, %v1338
  %v1402 = vadd.f32 %v1087, %v1341
  %v1403 = vadd.f32 %v1088, %v1346
  %v1404 = vadd.f32 %v1089, %v1349
  %v1405 = vadd.f32 %v1090, %v1354
  %v1406 = vadd.f32 %v1091, %v1357
  %v1407 = vadd.f32 %v1092, %v1362
  %v1408 = vadd.f32 %v1093, %v1365
  %v1409 = vadd.f32 %v1094, %v1370
  %v1410 = vadd.f32 %v1095, %v1373
  %v1411 = vadd.f32 %v1096, %v1378
  %v1412 = vadd.f32 %v1097, %v1381
  %v1413 = vadd.f32 %v1098, %v1386
  %v1414 = vld [vmem:[%s0 + $0x4] sm:$0xc]
  %s1415 = scalar_lea.vmem %s1, 60
  %v1416 = vld [vmem:[%s1415] sm:$0xf]
  %v1417 = vld [vmem:[%s1415 + $0x4] sm:$0xf]
  %v1418 = vld [vmem:[%s1415 + $0x8] sm:$0xf]
  %v1420 = vunpack.c.l.b16 %v1414
  %v1421 = vpack.c.b16 %v842, %v1420
  %vm1422 = vcmask 1045504
  %v1423 = vrot.slane %v1421, 2
  %v1424 = vrot.slane %v866, 2
  %v1425 = vsel %vm1422, %v1423, %v1424
  %v1426 = vrot.slane %v867, 2
  %v1427 = vsel %vm1422, %v1424, %v1426
  %v1428 = vrot.slane %v868, 2
  %v1429 = vsel %vm1422, %v1426, %v1428
  %v1430 = vrot.slane %v869, 2
  %v1431 = vsel %vm1422, %v1428, %v1430
  %v1432 = vrot.slane %v870, 2
  %v1433 = vsel %vm1422, %v1430, %v1432
  %v1434 = vrot.slane %v871, 2
  %v1435 = vsel %vm1422, %v1432, %v1434
  %v1436 = vrot.slane %v872, 2
  %v1437 = vsel %vm1422, %v1434, %v1436
  %v1438 = vrot.slane %v873, 2
  %v1439 = vsel %vm1422, %v1436, %v1438
  %v1440 = vrot.slane %v874, 2
  %v1441 = vsel %vm1422, %v1438, %v1440
  %v1442 = vrot.slane %v875, 2
  %v1443 = vsel %vm1422, %v1440, %v1442
  %v1444 = vrot.slane %v1106, 2
  %v1445 = vsel %vm1422, %v1442, %v1444
  %v1449 = vunpack.c.l.b16 %v1416
  %v1450 = vunpack.c.l.b16 %v1417
  %v1451 = vunpack.c.l.b16 %v1418
  %v1452 = vpack.c.b16 %v1450, %v1449
  %v1453 = vpack.c.b16 %v1451, %v1451
  %v1456 = vsel %vm223, %v1425, 0
  %v1459 = vsel %vm223, %v1427, 0
  %v1462 = vsel %vm223, %v1429, 0
  %v1465 = vsel %vm223, %v1431, 0
  %v1468 = vsel %vm223, %v1433, 0
  %v1471 = vsel %vm223, %v1435, 0
  %v1474 = vsel %vm223, %v1437, 0
  %v1477 = vsel %vm223, %v1439, 0
  %v1480 = vsel %vm223, %v1441, 0
  %v1483 = vsel %vm223, %v1443, 0
  %v1486 = vsel %vm223, %v1445, 0
  %v1489 = vsel %vm223, %v1444, 0
  %v1492 = vsel %vm260, %v1453, 0
  %1494 = vmatprep.subr.bf16.mxu0 0
  %1495 = vmatpush1.bf16.msra.mxu0 0
  %1496 = vmatprep.subr.bf16.mxu0 0
  %1497 = vmatpush1.bf16.msra.mxu0 0
  %1498 = vmatprep.subr.bf16.mxu0 0
  %1499 = vmatpush1.bf16.msra.mxu0 0
  %1500 = vmatprep.subr.bf16.mxu0 0
  %1501 = vmatpush1.bf16.msra.mxu0 0
  %1502 = vmatprep.subr.bf16.mxu0 0
  %1503 = vmatpush1.bf16.msra.mxu0 0
  %1504 = vmatprep.subr.bf16.mxu0 0
  %1505 = vmatpush1.bf16.msra.mxu0 0
  %1506 = vmatprep.subr.bf16.mxu0 0
  %1507 = vmatpush1.bf16.msra.mxu0 %v1492
  %1508 = vmatprep.subr.bf16.mxu0 0
  %1509 = vmatpush1.bf16.msra.mxu0 %v1452
  %1510 = vmatprep.subr.bf16.mxu0 0
  %1511 = vmatpush2.bf16.msra.mxu0 0
  %1512 = vmatprep.subr.bf16.mxu0 0
  %1513 = vmatpush2.bf16.msra.mxu0 0
  %1514 = vmatprep.subr.bf16.mxu0 0
  %1515 = vmatpush2.bf16.msra.mxu0 0
  %1516 = vmatprep.subr.bf16.mxu0 0
  %1517 = vmatpush2.bf16.msra.mxu0 0
  %1518 = vmatprep.subr.bf16.mxu0 0
  %1519 = vmatpush2.bf16.msra.mxu0 0
  %1520 = vmatprep.subr.bf16.mxu0 0
  %1521 = vmatpush2.bf16.msra.mxu0 0
  %1522 = vmatprep.subr.bf16.mxu0 0
  %1523 = vmatpush2.bf16.msra.mxu0 0
  %1524 = vmatprep.subr.bf16.mxu0 0
  %1525 = vmatpush2.bf16.msra.mxu0 0
  %1526 = vmatprep.mubr.bf16.mxu0 0
  %1527 = vmatmul.mubr.bf16.gmra.mxu0 %v1456
  %v1528 = vpop.f32.mrf.mxu0
  %v1529 = vadd.f32 0.0, %v1528
  %v1530 = vpop.f32.mrf.mxu0
  %v1531 = vpop.f32.mrf.mxu0
  %v1532 = vadd.f32 0.0, %v1531
  %v1533 = vpop.f32.mrf.mxu0
  %1534 = vmatprep.mubr.bf16.mxu0 0
  %1535 = vmatmul.mubr.bf16.gmra.mxu0 %v1459
  %v1536 = vpop.f32.mrf.mxu0
  %v1537 = vadd.f32 0.0, %v1536
  %v1538 = vpop.f32.mrf.mxu0
  %v1539 = vpop.f32.mrf.mxu0
  %v1540 = vadd.f32 0.0, %v1539
  %v1541 = vpop.f32.mrf.mxu0
  %1542 = vmatprep.mubr.bf16.mxu0 0
  %1543 = vmatmul.mubr.bf16.gmra.mxu0 %v1462
  %v1544 = vpop.f32.mrf.mxu0
  %v1545 = vadd.f32 0.0, %v1544
  %v1546 = vpop.f32.mrf.mxu0
  %v1547 = vpop.f32.mrf.mxu0
  %v1548 = vadd.f32 0.0, %v1547
  %v1549 = vpop.f32.mrf.mxu0
  %1550 = vmatprep.mubr.bf16.mxu0 0
  %1551 = vmatmul.mubr.bf16.gmra.mxu0 %v1465
  %v1552 = vpop.f32.mrf.mxu0
  %v1553 = vadd.f32 0.0, %v1552
  %v1554 = vpop.f32.mrf.mxu0
  %v1555 = vpop.f32.mrf.mxu0
  %v1556 = vadd.f32 0.0, %v1555
  %v1557 = vpop.f32.mrf.mxu0
  %1558 = vmatprep.mubr.bf16.mxu0 0
  %1559 = vmatmul.mubr.bf16.gmra.mxu0 %v1468
  %v1560 = vpop.f32.mrf.mxu0
  %v1561 = vadd.f32 0.0, %v1560
  %v1562 = vpop.f32.mrf.mxu0
  %v1563 = vpop.f32.mrf.mxu0
  %v1564 = vadd.f32 0.0, %v1563
  %v1565 = vpop.f32.mrf.mxu0
  %1566 = vmatprep.mubr.bf16.mxu0 0
  %1567 = vmatmul.mubr.bf16.gmra.mxu0 %v1471
  %v1568 = vpop.f32.mrf.mxu0
  %v1569 = vadd.f32 0.0, %v1568
  %v1570 = vpop.f32.mrf.mxu0
  %v1571 = vpop.f32.mrf.mxu0
  %v1572 = vadd.f32 0.0, %v1571
  %v1573 = vpop.f32.mrf.mxu0
  %1574 = vmatprep.mubr.bf16.mxu0 0
  %1575 = vmatmul.mubr.bf16.gmra.mxu0 %v1474
  %v1576 = vpop.f32.mrf.mxu0
  %v1577 = vadd.f32 0.0, %v1576
  %v1578 = vpop.f32.mrf.mxu0
  %v1579 = vpop.f32.mrf.mxu0
  %v1580 = vadd.f32 0.0, %v1579
  %v1581 = vpop.f32.mrf.mxu0
  %1582 = vmatprep.mubr.bf16.mxu0 0
  %1583 = vmatmul.mubr.bf16.gmra.mxu0 %v1477
  %v1584 = vpop.f32.mrf.mxu0
  %v1585 = vadd.f32 0.0, %v1584
  %v1586 = vpop.f32.mrf.mxu0
  %v1587 = vpop.f32.mrf.mxu0
  %v1588 = vadd.f32 0.0, %v1587
  %v1589 = vpop.f32.mrf.mxu0
  %1590 = vmatprep.mubr.bf16.mxu0 0
  %1591 = vmatmul.mubr.bf16.gmra.mxu0 %v1480
  %v1592 = vpop.f32.mrf.mxu0
  %v1593 = vadd.f32 0.0, %v1592
  %v1594 = vpop.f32.mrf.mxu0
  %v1595 = vpop.f32.mrf.mxu0
  %v1596 = vadd.f32 0.0, %v1595
  %v1597 = vpop.f32.mrf.mxu0
  %1598 = vmatprep.mubr.bf16.mxu0 0
  %1599 = vmatmul.mubr.bf16.gmra.mxu0 %v1483
  %v1600 = vpop.f32.mrf.mxu0
  %v1601 = vadd.f32 0.0, %v1600
  %v1602 = vpop.f32.mrf.mxu0
  %v1603 = vpop.f32.mrf.mxu0
  %v1604 = vadd.f32 0.0, %v1603
  %v1605 = vpop.f32.mrf.mxu0
  %1606 = vmatprep.mubr.bf16.mxu0 0
  %1607 = vmatmul.mubr.bf16.gmra.mxu0 %v1486
  %v1608 = vpop.f32.mrf.mxu0
  %v1609 = vadd.f32 0.0, %v1608
  %v1610 = vpop.f32.mrf.mxu0
  %v1611 = vpop.f32.mrf.mxu0
  %v1612 = vadd.f32 0.0, %v1611
  %v1613 = vpop.f32.mrf.mxu0
  %1614 = vmatprep.mubr.bf16.mxu0 0
  %1615 = vmatmul.mubr.bf16.gmra.mxu0 %v1489
  %v1616 = vpop.f32.mrf.mxu0
  %v1617 = vadd.f32 0.0, %v1616
  %v1618 = vpop.f32.mrf.mxu0
  %v1619 = vpop.f32.mrf.mxu0
  %v1620 = vpop.f32.mrf.mxu0
  %1621 = vdwg.mxu0
  %v1622 = vadd.f32 %v1391, %v1529
  %v1623 = vadd.f32 %v1392, %v1532
  %v1624 = vadd.f32 %v1393, %v1537
  %v1625 = vadd.f32 %v1394, %v1540
  %v1626 = vadd.f32 %v1395, %v1545
  %v1627 = vadd.f32 %v1396, %v1548
  %v1628 = vadd.f32 %v1397, %v1553
  %v1629 = vadd.f32 %v1398, %v1556
  %v1630 = vadd.f32 %v1399, %v1561
  %v1631 = vadd.f32 %v1400, %v1564
  %v1632 = vadd.f32 %v1401, %v1569
  %v1633 = vadd.f32 %v1402, %v1572
  %v1634 = vadd.f32 %v1403, %v1577
  %v1635 = vadd.f32 %v1404, %v1580
  %v1636 = vadd.f32 %v1405, %v1585
  %v1637 = vadd.f32 %v1406, %v1588
  %v1638 = vadd.f32 %v1407, %v1593
  %v1639 = vadd.f32 %v1408, %v1596
  %v1640 = vadd.f32 %v1409, %v1601
  %v1641 = vadd.f32 %v1410, %v1604
  %v1642 = vadd.f32 %v1411, %v1609
  %v1643 = vadd.f32 %v1412, %v1612
  %v1644 = vadd.f32 %v1413, %v1617
  %v1645 = vld [vmem:[%s0 + $0x8] sm:$0xc]
  %v1646 = vld [vmem:[%s0 + $0xc] sm:$0xf]
  %v1647 = vld [vmem:[%s0 + $0x10] sm:$0xf]
  %v1648 = vld [vmem:[%s0 + $0x14] sm:$0xf]
  %v1649 = vld [vmem:[%s0 + $0x18] sm:$0xf]
  %v1650 = vld [vmem:[%s0 + $0x1c] sm:$0xf]
  %v1651 = vld [vmem:[%s0 + $0x20] sm:$0xf]
  %v1652 = vld [vmem:[%s0 + $0x24] sm:$0xf]
  %v1653 = vld [vmem:[%s0 + $0x28] sm:$0xf]
  %v1654 = vld [vmem:[%s0 + $0x2c] sm:$0xf]
  %v1655 = vld [vmem:[%s0 + $0x30] sm:$0xf]
  %v1656 = vld [vmem:[%s0 + $0x34] sm:$0xf]
  %v1657 = vld [vmem:[%s0 + $0x38] sm:$0xf]
  %v1658 = vld [vmem:[%s0 + $0x3c] sm:$0xf]
  %v1659 = vld [vmem:[%s0 + $0x40] sm:$0xf]
  %v1660 = vld [vmem:[%s0 + $0x44] sm:$0xf]
  %v1661 = vld [vmem:[%s0 + $0x48] sm:$0xf]
  %v1662 = vld [vmem:[%s0 + $0x4c] sm:$0xf]
  %v1663 = vld [vmem:[%s0 + $0x50] sm:$0xf]
  %v1664 = vld [vmem:[%s0 + $0x54] sm:$0xf]
  %v1665 = vld [vmem:[%s0 + $0x58] sm:$0xf]
  %v1666 = vld [vmem:[%s0 + $0x5c] sm:$0xf]
  %v1667 = vld [vmem:[%s0 + $0x60] sm:$0xf]
  %v1668 = vld [vmem:[%s0 + $0x64] sm:$0x3]
  %s1669 = scalar_lea.vmem %s1, 72
  %v1670 = vld [vmem:[%s1669] sm:$0xf]
  %v1671 = vld [vmem:[%s1669 + $0x4] sm:$0xf]
  %v1672 = vld [vmem:[%s1669 + $0x8] sm:$0xf]
  %v1697 = vunpack.c.l.b16 %v1645
  %v1698 = vunpack.c.l.b16 %v1646
  %v1699 = vunpack.c.l.b16 %v1647
  %v1700 = vunpack.c.l.b16 %v1648
  %v1701 = vunpack.c.l.b16 %v1649
  %v1702 = vunpack.c.l.b16 %v1650
  %v1703 = vunpack.c.l.b16 %v1651
  %v1704 = vunpack.c.l.b16 %v1652
  %v1705 = vunpack.c.l.b16 %v1653
  %v1706 = vunpack.c.l.b16 %v1654
  %v1707 = vunpack.c.l.b16 %v1655
  %v1708 = vunpack.c.l.b16 %v1656
  %v1709 = vunpack.c.l.b16 %v1657
  %v1710 = vunpack.c.l.b16 %v1658
  %v1711 = vunpack.c.l.b16 %v1659
  %v1712 = vunpack.c.l.b16 %v1660
  %v1713 = vunpack.c.l.b16 %v1661
  %v1714 = vunpack.c.l.b16 %v1662
  %v1715 = vunpack.c.l.b16 %v1663
  %v1716 = vunpack.c.l.b16 %v1664
  %v1717 = vunpack.c.l.b16 %v1665
  %v1718 = vunpack.c.l.b16 %v1666
  %v1719 = vunpack.c.l.b16 %v1667
  %v1720 = vunpack.c.l.b16 %v1668
  %v1721 = vpack.c.b16 %v1698, %v1697
  %v1722 = vpack.c.b16 %v1700, %v1699
  %v1723 = vpack.c.b16 %v1702, %v1701
  %v1724 = vpack.c.b16 %v1704, %v1703
  %v1725 = vpack.c.b16 %v1706, %v1705
  %v1726 = vpack.c.b16 %v1708, %v1707
  %v1727 = vpack.c.b16 %v1710, %v1709
  %v1728 = vpack.c.b16 %v1712, %v1711
  %v1729 = vpack.c.b16 %v1714, %v1713
  %v1730 = vpack.c.b16 %v1716, %v1715
  %v1731 = vpack.c.b16 %v1718, %v1717
  %v1732 = vpack.c.b16 %v1720, %v1719
  %v1733 = vrot.slane %v1721, 2
  %v1734 = vrot.slane %v1722, 2
  %v1735 = vsel %vm1422, %v1733, %v1734
  %v1736 = vrot.slane %v1723, 2
  %v1737 = vsel %vm1422, %v1734, %v1736
  %v1738 = vrot.slane %v1724, 2
  %v1739 = vsel %vm1422, %v1736, %v1738
  %v1740 = vrot.slane %v1725, 2
  %v1741 = vsel %vm1422, %v1738, %v1740
  %v1742 = vrot.slane %v1726, 2
  %v1743 = vsel %vm1422, %v1740, %v1742
  %v1744 = vrot.slane %v1727, 2
  %v1745 = vsel %vm1422, %v1742, %v1744
  %v1746 = vrot.slane %v1728, 2
  %v1747 = vsel %vm1422, %v1744, %v1746
  %v1748 = vrot.slane %v1729, 2
  %v1749 = vsel %vm1422, %v1746, %v1748
  %v1750 = vrot.slane %v1730, 2
  %v1751 = vsel %vm1422, %v1748, %v1750
  %v1752 = vrot.slane %v1731, 2
  %v1753 = vsel %vm1422, %v1750, %v1752
  %v1754 = vrot.slane %v1732, 2
  %v1755 = vsel %vm1422, %v1752, %v1754
  %v1759 = vunpack.c.l.b16 %v1670
  %v1760 = vunpack.c.l.b16 %v1671
  %v1761 = vunpack.c.l.b16 %v1672
  %v1762 = vpack.c.b16 %v1760, %v1759
  %v1763 = vpack.c.b16 %v1761, %v1761
  %v1766 = vsel %vm223, %v1735, 0
  %v1769 = vsel %vm223, %v1737, 0
  %v1772 = vsel %vm223, %v1739, 0
  %v1775 = vsel %vm223, %v1741, 0
  %v1778 = vsel %vm223, %v1743, 0
  %v1781 = vsel %vm223, %v1745, 0
  %v1784 = vsel %vm223, %v1747, 0
  %v1787 = vsel %vm223, %v1749, 0
  %v1790 = vsel %vm223, %v1751, 0
  %v1793 = vsel %vm223, %v1753, 0
  %v1796 = vsel %vm223, %v1755, 0
  %v1799 = vsel %vm223, %v1754, 0
  %v1802 = vsel %vm260, %v1763, 0
  %1804 = vmatprep.subr.bf16.mxu0 0
  %1805 = vmatpush1.bf16.msra.mxu0 0
  %1806 = vmatprep.subr.bf16.mxu0 0
  %1807 = vmatpush1.bf16.msra.mxu0 0
  %1808 = vmatprep.subr.bf16.mxu0 0
  %1809 = vmatpush1.bf16.msra.mxu0 0
  %1810 = vmatprep.subr.bf16.mxu0 0
  %1811 = vmatpush1.bf16.msra.mxu0 0
  %1812 = vmatprep.subr.bf16.mxu0 0
  %1813 = vmatpush1.bf16.msra.mxu0 0
  %1814 = vmatprep.subr.bf16.mxu0 0
  %1815 = vmatpush1.bf16.msra.mxu0 0
  %1816 = vmatprep.subr.bf16.mxu0 0
  %1817 = vmatpush1.bf16.msra.mxu0 %v1802
  %1818 = vmatprep.subr.bf16.mxu0 0
  %1819 = vmatpush1.bf16.msra.mxu0 %v1762
  %1820 = vmatprep.subr.bf16.mxu0 0
  %1821 = vmatpush2.bf16.msra.mxu0 0
  %1822 = vmatprep.subr.bf16.mxu0 0
  %1823 = vmatpush2.bf16.msra.mxu0 0
  %1824 = vmatprep.subr.bf16.mxu0 0
  %1825 = vmatpush2.bf16.msra.mxu0 0
  %1826 = vmatprep.subr.bf16.mxu0 0
  %1827 = vmatpush2.bf16.msra.mxu0 0
  %1828 = vmatprep.subr.bf16.mxu0 0
  %1829 = vmatpush2.bf16.msra.mxu0 0
  %1830 = vmatprep.subr.bf16.mxu0 0
  %1831 = vmatpush2.bf16.msra.mxu0 0
  %1832 = vmatprep.subr.bf16.mxu0 0
  %1833 = vmatpush2.bf16.msra.mxu0 0
  %1834 = vmatprep.subr.bf16.mxu0 0
  %1835 = vmatpush2.bf16.msra.mxu0 0
  %1836 = vmatprep.mubr.bf16.mxu0 0
  %1837 = vmatmul.mubr.bf16.gmra.mxu0 %v1766
  %v1838 = vpop.f32.mrf.mxu0
  %v1839 = vadd.f32 0.0, %v1838
  %v1840 = vpop.f32.mrf.mxu0
  %v1841 = vpop.f32.mrf.mxu0
  %v1842 = vadd.f32 0.0, %v1841
  %v1843 = vpop.f32.mrf.mxu0
  %1844 = vmatprep.mubr.bf16.mxu0 0
  %1845 = vmatmul.mubr.bf16.gmra.mxu0 %v1769
  %v1846 = vpop.f32.mrf.mxu0
  %v1847 = vadd.f32 0.0, %v1846
  %v1848 = vpop.f32.mrf.mxu0
  %v1849 = vpop.f32.mrf.mxu0
  %v1850 = vadd.f32 0.0, %v1849
  %v1851 = vpop.f32.mrf.mxu0
  %1852 = vmatprep.mubr.bf16.mxu0 0
  %1853 = vmatmul.mubr.bf16.gmra.mxu0 %v1772
  %v1854 = vpop.f32.mrf.mxu0
  %v1855 = vadd.f32 0.0, %v1854
  %v1856 = vpop.f32.mrf.mxu0
  %v1857 = vpop.f32.mrf.mxu0
  %v1858 = vadd.f32 0.0, %v1857
  %v1859 = vpop.f32.mrf.mxu0
  %1860 = vmatprep.mubr.bf16.mxu0 0
  %1861 = vmatmul.mubr.bf16.gmra.mxu0 %v1775
  %v1862 = vpop.f32.mrf.mxu0
  %v1863 = vadd.f32 0.0, %v1862
  %v1864 = vpop.f32.mrf.mxu0
  %v1865 = vpop.f32.mrf.mxu0
  %v1866 = vadd.f32 0.0, %v1865
  %v1867 = vpop.f32.mrf.mxu0
  %1868 = vmatprep.mubr.bf16.mxu0 0
  %1869 = vmatmul.mubr.bf16.gmra.mxu0 %v1778
  %v1870 = vpop.f32.mrf.mxu0
  %v1871 = vadd.f32 0.0, %v1870
  %v1872 = vpop.f32.mrf.mxu0
  %v1873 = vpop.f32.mrf.mxu0
  %v1874 = vadd.f32 0.0, %v1873
  %v1875 = vpop.f32.mrf.mxu0
  %1876 = vmatprep.mubr.bf16.mxu0 0
  %1877 = vmatmul.mubr.bf16.gmra.mxu0 %v1781
  %v1878 = vpop.f32.mrf.mxu0
  %v1879 = vadd.f32 0.0, %v1878
  %v1880 = vpop.f32.mrf.mxu0
  %v1881 = vpop.f32.mrf.mxu0
  %v1882 = vadd.f32 0.0, %v1881
  %v1883 = vpop.f32.mrf.mxu0
  %1884 = vmatprep.mubr.bf16.mxu0 0
  %1885 = vmatmul.mubr.bf16.gmra.mxu0 %v1784
  %v1886 = vpop.f32.mrf.mxu0
  %v1887 = vadd.f32 0.0, %v1886
  %v1888 = vpop.f32.mrf.mxu0
  %v1889 = vpop.f32.mrf.mxu0
  %v1890 = vadd.f32 0.0, %v1889
  %v1891 = vpop.f32.mrf.mxu0
  %1892 = vmatprep.mubr.bf16.mxu0 0
  %1893 = vmatmul.mubr.bf16.gmra.mxu0 %v1787
  %v1894 = vpop.f32.mrf.mxu0
  %v1895 = vadd.f32 0.0, %v1894
  %v1896 = vpop.f32.mrf.mxu0
  %v1897 = vpop.f32.mrf.mxu0
  %v1898 = vadd.f32 0.0, %v1897
  %v1899 = vpop.f32.mrf.mxu0
  %1900 = vmatprep.mubr.bf16.mxu0 0
  %1901 = vmatmul.mubr.bf16.gmra.mxu0 %v1790
  %v1902 = vpop.f32.mrf.mxu0
  %v1903 = vadd.f32 0.0, %v1902
  %v1904 = vpop.f32.mrf.mxu0
  %v1905 = vpop.f32.mrf.mxu0
  %v1906 = vadd.f32 0.0, %v1905
  %v1907 = vpop.f32.mrf.mxu0
  %1908 = vmatprep.mubr.bf16.mxu0 0
  %1909 = vmatmul.mubr.bf16.gmra.mxu0 %v1793
  %v1910 = vpop.f32.mrf.mxu0
  %v1911 = vadd.f32 0.0, %v1910
  %v1912 = vpop.f32.mrf.mxu0
  %v1913 = vpop.f32.mrf.mxu0
  %v1914 = vadd.f32 0.0, %v1913
  %v1915 = vpop.f32.mrf.mxu0
  %1916 = vmatprep.mubr.bf16.mxu0 0
  %1917 = vmatmul.mubr.bf16.gmra.mxu0 %v1796
  %v1918 = vpop.f32.mrf.mxu0
  %v1919 = vadd.f32 0.0, %v1918
  %v1920 = vpop.f32.mrf.mxu0
  %v1921 = vpop.f32.mrf.mxu0
  %v1922 = vadd.f32 0.0, %v1921
  %v1923 = vpop.f32.mrf.mxu0
  %1924 = vmatprep.mubr.bf16.mxu0 0
  %1925 = vmatmul.mubr.bf16.gmra.mxu0 %v1799
  %v1926 = vpop.f32.mrf.mxu0
  %v1927 = vadd.f32 0.0, %v1926
  %v1928 = vpop.f32.mrf.mxu0
  %v1929 = vpop.f32.mrf.mxu0
  %v1930 = vpop.f32.mrf.mxu0
  %1931 = vdwg.mxu0
  %v1932 = vadd.f32 %v1622, %v1839
  %v1933 = vadd.f32 %v1623, %v1842
  %v1934 = vadd.f32 %v1624, %v1847
  %v1935 = vadd.f32 %v1625, %v1850
  %v1936 = vadd.f32 %v1626, %v1855
  %v1937 = vadd.f32 %v1627, %v1858
  %v1938 = vadd.f32 %v1628, %v1863
  %v1939 = vadd.f32 %v1629, %v1866
  %v1940 = vadd.f32 %v1630, %v1871
  %v1941 = vadd.f32 %v1631, %v1874
  %v1942 = vadd.f32 %v1632, %v1879
  %v1943 = vadd.f32 %v1633, %v1882
  %v1944 = vadd.f32 %v1634, %v1887
  %v1945 = vadd.f32 %v1635, %v1890
  %v1946 = vadd.f32 %v1636, %v1895
  %v1947 = vadd.f32 %v1637, %v1898
  %v1948 = vadd.f32 %v1638, %v1903
  %v1949 = vadd.f32 %v1639, %v1906
  %v1950 = vadd.f32 %v1640, %v1911
  %v1951 = vadd.f32 %v1641, %v1914
  %v1952 = vadd.f32 %v1642, %v1919
  %v1953 = vadd.f32 %v1643, %v1922
  %v1954 = vadd.f32 %v1644, %v1927
  %v1955 = vld [vmem:[%s0 + $0x64] sm:$0x7]
  %s1956 = scalar_lea.vmem %s1, 84
  %v1957 = vld [vmem:[%s1956] sm:$0xf]
  %v1958 = vld [vmem:[%s1956 + $0x4] sm:$0xf]
  %v1959 = vld [vmem:[%s1956 + $0x8] sm:$0xf]
  %v1961 = vunpack.c.l.b16 %v1955
  %v1962 = vpack.c.b16 %v1961, %v1719
  %vm1963 = vsmask.f32 5376
  %v1965 = vshrl.u32 %v1721, 16
  %v1967 = vrot.slane %v1965, 2
  %v1968 = vshll.u32 %v1721, 16
  %v1970 = vrot.slane %v1968, 3
  %v1971 = vor.u32 %v1967, %v1970
  %v1973 = vshrl.u32 %v1722, 16
  %v1975 = vrot.slane %v1973, 2
  %v1976 = vshll.u32 %v1722, 16
  %v1978 = vrot.slane %v1976, 3
  %v1979 = vor.u32 %v1975, %v1978
  %v1980 = vsel %vm1963, %v1971, %v1979
  %v1982 = vshrl.u32 %v1723, 16
  %v1984 = vrot.slane %v1982, 2
  %v1985 = vshll.u32 %v1723, 16
  %v1987 = vrot.slane %v1985, 3
  %v1988 = vor.u32 %v1984, %v1987
  %v1989 = vsel %vm1963, %v1979, %v1988
  %v1991 = vshrl.u32 %v1724, 16
  %v1993 = vrot.slane %v1991, 2
  %v1994 = vshll.u32 %v1724, 16
  %v1996 = vrot.slane %v1994, 3
  %v1997 = vor.u32 %v1993, %v1996
  %v1998 = vsel %vm1963, %v1988, %v1997
  %v2000 = vshrl.u32 %v1725, 16
  %v2002 = vrot.slane %v2000, 2
  %v2003 = vshll.u32 %v1725, 16
  %v2005 = vrot.slane %v2003, 3
  %v2006 = vor.u32 %v2002, %v2005
  %v2007 = vsel %vm1963, %v1997, %v2006
  %v2009 = vshrl.u32 %v1726, 16
  %v2011 = vrot.slane %v2009, 2
  %v2012 = vshll.u32 %v1726, 16
  %v2014 = vrot.slane %v2012, 3
  %v2015 = vor.u32 %v2011, %v2014
  %v2016 = vsel %vm1963, %v2006, %v2015
  %v2018 = vshrl.u32 %v1727, 16
  %v2020 = vrot.slane %v2018, 2
  %v2021 = vshll.u32 %v1727, 16
  %v2023 = vrot.slane %v2021, 3
  %v2024 = vor.u32 %v2020, %v2023
  %v2025 = vsel %vm1963, %v2015, %v2024
  %v2027 = vshrl.u32 %v1728, 16
  %v2029 = vrot.slane %v2027, 2
  %v2030 = vshll.u32 %v1728, 16
  %v2032 = vrot.slane %v2030, 3
  %v2033 = vor.u32 %v2029, %v2032
  %v2034 = vsel %vm1963, %v2024, %v2033
  %v2036 = vshrl.u32 %v1729, 16
  %v2038 = vrot.slane %v2036, 2
  %v2039 = vshll.u32 %v1729, 16
  %v2041 = vrot.slane %v2039, 3
  %v2042 = vor.u32 %v2038, %v2041
  %v2043 = vsel %vm1963, %v2033, %v2042
  %v2045 = vshrl.u32 %v1730, 16
  %v2047 = vrot.slane %v2045, 2
  %v2048 = vshll.u32 %v1730, 16
  %v2050 = vrot.slane %v2048, 3
  %v2051 = vor.u32 %v2047, %v2050
  %v2052 = vsel %vm1963, %v2042, %v2051
  %v2054 = vshrl.u32 %v1731, 16
  %v2056 = vrot.slane %v2054, 2
  %v2057 = vshll.u32 %v1731, 16
  %v2059 = vrot.slane %v2057, 3
  %v2060 = vor.u32 %v2056, %v2059
  %v2061 = vsel %vm1963, %v2051, %v2060
  %v2063 = vshrl.u32 %v1962, 16
  %v2065 = vrot.slane %v2063, 2
  %v2066 = vshll.u32 %v1962, 16
  %v2068 = vrot.slane %v2066, 3
  %v2069 = vor.u32 %v2065, %v2068
  %v2070 = vsel %vm1963, %v2060, %v2069
  %v2074 = vunpack.c.l.b16 %v1957
  %v2075 = vunpack.c.l.b16 %v1958
  %v2076 = vunpack.c.l.b16 %v1959
  %v2077 = vpack.c.b16 %v2075, %v2074
  %v2078 = vpack.c.b16 %v2076, %v2076
  %v2081 = vsel %vm223, %v1980, 0
  %v2084 = vsel %vm223, %v1989, 0
  %v2087 = vsel %vm223, %v1998, 0
  %v2090 = vsel %vm223, %v2007, 0
  %v2093 = vsel %vm223, %v2016, 0
  %v2096 = vsel %vm223, %v2025, 0
  %v2099 = vsel %vm223, %v2034, 0
  %v2102 = vsel %vm223, %v2043, 0
  %v2105 = vsel %vm223, %v2052, 0
  %v2108 = vsel %vm223, %v2061, 0
  %v2111 = vsel %vm223, %v2070, 0
  %v2114 = vsel %vm223, %v2069, 0
  %v2117 = vsel %vm260, %v2078, 0
  %2119 = vmatprep.subr.bf16.mxu0 0
  %2120 = vmatpush1.bf16.msra.mxu0 0
  %2121 = vmatprep.subr.bf16.mxu0 0
  %2122 = vmatpush1.bf16.msra.mxu0 0
  %2123 = vmatprep.subr.bf16.mxu0 0
  %2124 = vmatpush1.bf16.msra.mxu0 0
  %2125 = vmatprep.subr.bf16.mxu0 0
  %2126 = vmatpush1.bf16.msra.mxu0 0
  %2127 = vmatprep.subr.bf16.mxu0 0
  %2128 = vmatpush1.bf16.msra.mxu0 0
  %2129 = vmatprep.subr.bf16.mxu0 0
  %2130 = vmatpush1.bf16.msra.mxu0 0
  %2131 = vmatprep.subr.bf16.mxu0 0
  %2132 = vmatpush1.bf16.msra.mxu0 %v2117
  %2133 = vmatprep.subr.bf16.mxu0 0
  %2134 = vmatpush1.bf16.msra.mxu0 %v2077
  %2135 = vmatprep.subr.bf16.mxu0 0
  %2136 = vmatpush2.bf16.msra.mxu0 0
  %2137 = vmatprep.subr.bf16.mxu0 0
  %2138 = vmatpush2.bf16.msra.mxu0 0
  %2139 = vmatprep.subr.bf16.mxu0 0
  %2140 = vmatpush2.bf16.msra.mxu0 0
  %2141 = vmatprep.subr.bf16.mxu0 0
  %2142 = vmatpush2.bf16.msra.mxu0 0
  %2143 = vmatprep.subr.bf16.mxu0 0
  %2144 = vmatpush2.bf16.msra.mxu0 0
  %2145 = vmatprep.subr.bf16.mxu0 0
  %2146 = vmatpush2.bf16.msra.mxu0 0
  %2147 = vmatprep.subr.bf16.mxu0 0
  %2148 = vmatpush2.bf16.msra.mxu0 0
  %2149 = vmatprep.subr.bf16.mxu0 0
  %2150 = vmatpush2.bf16.msra.mxu0 0
  %2151 = vmatprep.mubr.bf16.mxu0 0
  %2152 = vmatmul.mubr.bf16.gmra.mxu0 %v2081
  %v2153 = vpop.f32.mrf.mxu0
  %v2154 = vadd.f32 0.0, %v2153
  %v2155 = vpop.f32.mrf.mxu0
  %v2156 = vpop.f32.mrf.mxu0
  %v2157 = vadd.f32 0.0, %v2156
  %v2158 = vpop.f32.mrf.mxu0
  %2159 = vmatprep.mubr.bf16.mxu0 0
  %2160 = vmatmul.mubr.bf16.gmra.mxu0 %v2084
  %v2161 = vpop.f32.mrf.mxu0
  %v2162 = vadd.f32 0.0, %v2161
  %v2163 = vpop.f32.mrf.mxu0
  %v2164 = vpop.f32.mrf.mxu0
  %v2165 = vadd.f32 0.0, %v2164
  %v2166 = vpop.f32.mrf.mxu0
  %2167 = vmatprep.mubr.bf16.mxu0 0
  %2168 = vmatmul.mubr.bf16.gmra.mxu0 %v2087
  %v2169 = vpop.f32.mrf.mxu0
  %v2170 = vadd.f32 0.0, %v2169
  %v2171 = vpop.f32.mrf.mxu0
  %v2172 = vpop.f32.mrf.mxu0
  %v2173 = vadd.f32 0.0, %v2172
  %v2174 = vpop.f32.mrf.mxu0
  %2175 = vmatprep.mubr.bf16.mxu0 0
  %2176 = vmatmul.mubr.bf16.gmra.mxu0 %v2090
  %v2177 = vpop.f32.mrf.mxu0
  %v2178 = vadd.f32 0.0, %v2177
  %v2179 = vpop.f32.mrf.mxu0
  %v2180 = vpop.f32.mrf.mxu0
  %v2181 = vadd.f32 0.0, %v2180
  %v2182 = vpop.f32.mrf.mxu0
  %2183 = vmatprep.mubr.bf16.mxu0 0
  %2184 = vmatmul.mubr.bf16.gmra.mxu0 %v2093
  %v2185 = vpop.f32.mrf.mxu0
  %v2186 = vadd.f32 0.0, %v2185
  %v2187 = vpop.f32.mrf.mxu0
  %v2188 = vpop.f32.mrf.mxu0
  %v2189 = vadd.f32 0.0, %v2188
  %v2190 = vpop.f32.mrf.mxu0
  %2191 = vmatprep.mubr.bf16.mxu0 0
  %2192 = vmatmul.mubr.bf16.gmra.mxu0 %v2096
  %v2193 = vpop.f32.mrf.mxu0
  %v2194 = vadd.f32 0.0, %v2193
  %v2195 = vpop.f32.mrf.mxu0
  %v2196 = vpop.f32.mrf.mxu0
  %v2197 = vadd.f32 0.0, %v2196
  %v2198 = vpop.f32.mrf.mxu0
  %2199 = vmatprep.mubr.bf16.mxu0 0
  %2200 = vmatmul.mubr.bf16.gmra.mxu0 %v2099
  %v2201 = vpop.f32.mrf.mxu0
  %v2202 = vadd.f32 0.0, %v2201
  %v2203 = vpop.f32.mrf.mxu0
  %v2204 = vpop.f32.mrf.mxu0
  %v2205 = vadd.f32 0.0, %v2204
  %v2206 = vpop.f32.mrf.mxu0
  %2207 = vmatprep.mubr.bf16.mxu0 0
  %2208 = vmatmul.mubr.bf16.gmra.mxu0 %v2102
  %v2209 = vpop.f32.mrf.mxu0
  %v2210 = vadd.f32 0.0, %v2209
  %v2211 = vpop.f32.mrf.mxu0
  %v2212 = vpop.f32.mrf.mxu0
  %v2213 = vadd.f32 0.0, %v2212
  %v2214 = vpop.f32.mrf.mxu0
  %2215 = vmatprep.mubr.bf16.mxu0 0
  %2216 = vmatmul.mubr.bf16.gmra.mxu0 %v2105
  %v2217 = vpop.f32.mrf.mxu0
  %v2218 = vadd.f32 0.0, %v2217
  %v2219 = vpop.f32.mrf.mxu0
  %v2220 = vpop.f32.mrf.mxu0
  %v2221 = vadd.f32 0.0, %v2220
  %v2222 = vpop.f32.mrf.mxu0
  %2223 = vmatprep.mubr.bf16.mxu0 0
  %2224 = vmatmul.mubr.bf16.gmra.mxu0 %v2108
  %v2225 = vpop.f32.mrf.mxu0
  %v2226 = vadd.f32 0.0, %v2225
  %v2227 = vpop.f32.mrf.mxu0
  %v2228 = vpop.f32.mrf.mxu0
  %v2229 = vadd.f32 0.0, %v2228
  %v2230 = vpop.f32.mrf.mxu0
  %2231 = vmatprep.mubr.bf16.mxu0 0
  %2232 = vmatmul.mubr.bf16.gmra.mxu0 %v2111
  %v2233 = vpop.f32.mrf.mxu0
  %v2234 = vadd.f32 0.0, %v2233
  %v2235 = vpop.f32.mrf.mxu0
  %v2236 = vpop.f32.mrf.mxu0
  %v2237 = vadd.f32 0.0, %v2236
  %v2238 = vpop.f32.mrf.mxu0
  %2239 = vmatprep.mubr.bf16.mxu0 0
  %2240 = vmatmul.mubr.bf16.gmra.mxu0 %v2114
  %v2241 = vpop.f32.mrf.mxu0
  %v2242 = vadd.f32 0.0, %v2241
  %v2243 = vpop.f32.mrf.mxu0
  %v2244 = vpop.f32.mrf.mxu0
  %v2245 = vpop.f32.mrf.mxu0
  %2246 = vdwg.mxu0
  %v2247 = vadd.f32 %v1932, %v2154
  %v2248 = vadd.f32 %v1933, %v2157
  %v2249 = vadd.f32 %v1934, %v2162
  %v2250 = vadd.f32 %v1935, %v2165
  %v2251 = vadd.f32 %v1936, %v2170
  %v2252 = vadd.f32 %v1937, %v2173
  %v2253 = vadd.f32 %v1938, %v2178
  %v2254 = vadd.f32 %v1939, %v2181
  %v2255 = vadd.f32 %v1940, %v2186
  %v2256 = vadd.f32 %v1941, %v2189
  %v2257 = vadd.f32 %v1942, %v2194
  %v2258 = vadd.f32 %v1943, %v2197
  %v2259 = vadd.f32 %v1944, %v2202
  %v2260 = vadd.f32 %v1945, %v2205
  %v2261 = vadd.f32 %v1946, %v2210
  %v2262 = vadd.f32 %v1947, %v2213
  %v2263 = vadd.f32 %v1948, %v2218
  %v2264 = vadd.f32 %v1949, %v2221
  %v2265 = vadd.f32 %v1950, %v2226
  %v2266 = vadd.f32 %v1951, %v2229
  %v2267 = vadd.f32 %v1952, %v2234
  %v2268 = vadd.f32 %v1953, %v2237
  %v2269 = vadd.f32 %v1954, %v2242
  %v2270 = vld [vmem:[%s0 + $0x8] sm:$0x8]
  %s2271 = scalar_lea.vmem %s1, 96
  %v2272 = vld [vmem:[%s2271] sm:$0xf]
  %v2273 = vld [vmem:[%s2271 + $0x4] sm:$0xf]
  %v2274 = vld [vmem:[%s2271 + $0x8] sm:$0xf]
  %v2276 = vunpack.c.l.b16 %v2270
  %v2277 = vpack.c.b16 %v1698, %v2276
  %vm2278 = vcmask 1044480
  %v2279 = vrot.slane %v2277, 3
  %v2280 = vrot.slane %v1722, 3
  %v2281 = vsel %vm2278, %v2279, %v2280
  %v2282 = vrot.slane %v1723, 3
  %v2283 = vsel %vm2278, %v2280, %v2282
  %v2284 = vrot.slane %v1724, 3
  %v2285 = vsel %vm2278, %v2282, %v2284
  %v2286 = vrot.slane %v1725, 3
  %v2287 = vsel %vm2278, %v2284, %v2286
  %v2288 = vrot.slane %v1726, 3
  %v2289 = vsel %vm2278, %v2286, %v2288
  %v2290 = vrot.slane %v1727, 3
  %v2291 = vsel %vm2278, %v2288, %v2290
  %v2292 = vrot.slane %v1728, 3
  %v2293 = vsel %vm2278, %v2290, %v2292
  %v2294 = vrot.slane %v1729, 3
  %v2295 = vsel %vm2278, %v2292, %v2294
  %v2296 = vrot.slane %v1730, 3
  %v2297 = vsel %vm2278, %v2294, %v2296
  %v2298 = vrot.slane %v1731, 3
  %v2299 = vsel %vm2278, %v2296, %v2298
  %v2300 = vrot.slane %v1962, 3
  %v2301 = vsel %vm2278, %v2298, %v2300
  %v2305 = vunpack.c.l.b16 %v2272
  %v2306 = vunpack.c.l.b16 %v2273
  %v2307 = vunpack.c.l.b16 %v2274
  %v2308 = vpack.c.b16 %v2306, %v2305
  %v2309 = vpack.c.b16 %v2307, %v2307
  %v2312 = vsel %vm223, %v2281, 0
  %v2315 = vsel %vm223, %v2283, 0
  %v2318 = vsel %vm223, %v2285, 0
  %v2321 = vsel %vm223, %v2287, 0
  %v2324 = vsel %vm223, %v2289, 0
  %v2327 = vsel %vm223, %v2291, 0
  %v2330 = vsel %vm223, %v2293, 0
  %v2333 = vsel %vm223, %v2295, 0
  %v2336 = vsel %vm223, %v2297, 0
  %v2339 = vsel %vm223, %v2299, 0
  %v2342 = vsel %vm223, %v2301, 0
  %v2345 = vsel %vm223, %v2300, 0
  %v2348 = vsel %vm260, %v2309, 0
  %2350 = vmatprep.subr.bf16.mxu0 0
  %2351 = vmatpush1.bf16.msra.mxu0 0
  %2352 = vmatprep.subr.bf16.mxu0 0
  %2353 = vmatpush1.bf16.msra.mxu0 0
  %2354 = vmatprep.subr.bf16.mxu0 0
  %2355 = vmatpush1.bf16.msra.mxu0 0
  %2356 = vmatprep.subr.bf16.mxu0 0
  %2357 = vmatpush1.bf16.msra.mxu0 0
  %2358 = vmatprep.subr.bf16.mxu0 0
  %2359 = vmatpush1.bf16.msra.mxu0 0
  %2360 = vmatprep.subr.bf16.mxu0 0
  %2361 = vmatpush1.bf16.msra.mxu0 0
  %2362 = vmatprep.subr.bf16.mxu0 0
  %2363 = vmatpush1.bf16.msra.mxu0 %v2348
  %2364 = vmatprep.subr.bf16.mxu0 0
  %2365 = vmatpush1.bf16.msra.mxu0 %v2308
  %2366 = vmatprep.subr.bf16.mxu0 0
  %2367 = vmatpush2.bf16.msra.mxu0 0
  %2368 = vmatprep.subr.bf16.mxu0 0
  %2369 = vmatpush2.bf16.msra.mxu0 0
  %2370 = vmatprep.subr.bf16.mxu0 0
  %2371 = vmatpush2.bf16.msra.mxu0 0
  %2372 = vmatprep.subr.bf16.mxu0 0
  %2373 = vmatpush2.bf16.msra.mxu0 0
  %2374 = vmatprep.subr.bf16.mxu0 0
  %2375 = vmatpush2.bf16.msra.mxu0 0
  %2376 = vmatprep.subr.bf16.mxu0 0
  %2377 = vmatpush2.bf16.msra.mxu0 0
  %2378 = vmatprep.subr.bf16.mxu0 0
  %2379 = vmatpush2.bf16.msra.mxu0 0
  %2380 = vmatprep.subr.bf16.mxu0 0
  %2381 = vmatpush2.bf16.msra.mxu0 0
  %2382 = vmatprep.mubr.bf16.mxu0 0
  %2383 = vmatmul.mubr.bf16.gmra.mxu0 %v2312
  %v2384 = vpop.f32.mrf.mxu0
  %v2385 = vadd.f32 0.0, %v2384
  %v2386 = vpop.f32.mrf.mxu0
  %v2387 = vpop.f32.mrf.mxu0
  %v2388 = vadd.f32 0.0, %v2387
  %v2389 = vpop.f32.mrf.mxu0
  %2390 = vmatprep.mubr.bf16.mxu0 0
  %2391 = vmatmul.mubr.bf16.gmra.mxu0 %v2315
  %v2392 = vpop.f32.mrf.mxu0
  %v2393 = vadd.f32 0.0, %v2392
  %v2394 = vpop.f32.mrf.mxu0
  %v2395 = vpop.f32.mrf.mxu0
  %v2396 = vadd.f32 0.0, %v2395
  %v2397 = vpop.f32.mrf.mxu0
  %2398 = vmatprep.mubr.bf16.mxu0 0
  %2399 = vmatmul.mubr.bf16.gmra.mxu0 %v2318
  %v2400 = vpop.f32.mrf.mxu0
  %v2401 = vadd.f32 0.0, %v2400
  %v2402 = vpop.f32.mrf.mxu0
  %v2403 = vpop.f32.mrf.mxu0
  %v2404 = vadd.f32 0.0, %v2403
  %v2405 = vpop.f32.mrf.mxu0
  %2406 = vmatprep.mubr.bf16.mxu0 0
  %2407 = vmatmul.mubr.bf16.gmra.mxu0 %v2321
  %v2408 = vpop.f32.mrf.mxu0
  %v2409 = vadd.f32 0.0, %v2408
  %v2410 = vpop.f32.mrf.mxu0
  %v2411 = vpop.f32.mrf.mxu0
  %v2412 = vadd.f32 0.0, %v2411
  %v2413 = vpop.f32.mrf.mxu0
  %2414 = vmatprep.mubr.bf16.mxu0 0
  %2415 = vmatmul.mubr.bf16.gmra.mxu0 %v2324
  %v2416 = vpop.f32.mrf.mxu0
  %v2417 = vadd.f32 0.0, %v2416
  %v2418 = vpop.f32.mrf.mxu0
  %v2419 = vpop.f32.mrf.mxu0
  %v2420 = vadd.f32 0.0, %v2419
  %v2421 = vpop.f32.mrf.mxu0
  %2422 = vmatprep.mubr.bf16.mxu0 0
  %2423 = vmatmul.mubr.bf16.gmra.mxu0 %v2327
  %v2424 = vpop.f32.mrf.mxu0
  %v2425 = vadd.f32 0.0, %v2424
  %v2426 = vpop.f32.mrf.mxu0
  %v2427 = vpop.f32.mrf.mxu0
  %v2428 = vadd.f32 0.0, %v2427
  %v2429 = vpop.f32.mrf.mxu0
  %2430 = vmatprep.mubr.bf16.mxu0 0
  %2431 = vmatmul.mubr.bf16.gmra.mxu0 %v2330
  %v2432 = vpop.f32.mrf.mxu0
  %v2433 = vadd.f32 0.0, %v2432
  %v2434 = vpop.f32.mrf.mxu0
  %v2435 = vpop.f32.mrf.mxu0
  %v2436 = vadd.f32 0.0, %v2435
  %v2437 = vpop.f32.mrf.mxu0
  %2438 = vmatprep.mubr.bf16.mxu0 0
  %2439 = vmatmul.mubr.bf16.gmra.mxu0 %v2333
  %v2440 = vpop.f32.mrf.mxu0
  %v2441 = vadd.f32 0.0, %v2440
  %v2442 = vpop.f32.mrf.mxu0
  %v2443 = vpop.f32.mrf.mxu0
  %v2444 = vadd.f32 0.0, %v2443
  %v2445 = vpop.f32.mrf.mxu0
  %2446 = vmatprep.mubr.bf16.mxu0 0
  %2447 = vmatmul.mubr.bf16.gmra.mxu0 %v2336
  %v2448 = vpop.f32.mrf.mxu0
  %v2449 = vadd.f32 0.0, %v2448
  %v2450 = vpop.f32.mrf.mxu0
  %v2451 = vpop.f32.mrf.mxu0
  %v2452 = vadd.f32 0.0, %v2451
  %v2453 = vpop.f32.mrf.mxu0
  %2454 = vmatprep.mubr.bf16.mxu0 0
  %2455 = vmatmul.mubr.bf16.gmra.mxu0 %v2339
  %v2456 = vpop.f32.mrf.mxu0
  %v2457 = vadd.f32 0.0, %v2456
  %v2458 = vpop.f32.mrf.mxu0
  %v2459 = vpop.f32.mrf.mxu0
  %v2460 = vadd.f32 0.0, %v2459
  %v2461 = vpop.f32.mrf.mxu0
  %2462 = vmatprep.mubr.bf16.mxu0 0
  %2463 = vmatmul.mubr.bf16.gmra.mxu0 %v2342
  %v2464 = vpop.f32.mrf.mxu0
  %v2465 = vadd.f32 0.0, %v2464
  %v2466 = vpop.f32.mrf.mxu0
  %v2467 = vpop.f32.mrf.mxu0
  %v2468 = vadd.f32 0.0, %v2467
  %v2469 = vpop.f32.mrf.mxu0
  %2470 = vmatprep.mubr.bf16.mxu0 0
  %2471 = vmatmul.mubr.bf16.gmra.mxu0 %v2345
  %v2472 = vpop.f32.mrf.mxu0
  %v2473 = vadd.f32 0.0, %v2472
  %v2474 = vpop.f32.mrf.mxu0
  %v2475 = vpop.f32.mrf.mxu0
  %v2476 = vpop.f32.mrf.mxu0
  %2477 = vdwg.mxu0
  %v2478 = vadd.f32 %v2247, %v2385
  %v2479 = vadd.f32 %v2248, %v2388
  %v2480 = vadd.f32 %v2249, %v2393
  %v2481 = vadd.f32 %v2250, %v2396
  %v2482 = vadd.f32 %v2251, %v2401
  %v2483 = vadd.f32 %v2252, %v2404
  %v2484 = vadd.f32 %v2253, %v2409
  %v2485 = vadd.f32 %v2254, %v2412
  %v2486 = vadd.f32 %v2255, %v2417
  %v2487 = vadd.f32 %v2256, %v2420
  %v2488 = vadd.f32 %v2257, %v2425
  %v2489 = vadd.f32 %v2258, %v2428
  %v2490 = vadd.f32 %v2259, %v2433
  %v2491 = vadd.f32 %v2260, %v2436
  %v2492 = vadd.f32 %v2261, %v2441
  %v2493 = vadd.f32 %v2262, %v2444
  %v2494 = vadd.f32 %v2263, %v2449
  %v2495 = vadd.f32 %v2264, %v2452
  %v2496 = vadd.f32 %v2265, %v2457
  %v2497 = vadd.f32 %v2266, %v2460
  %v2498 = vadd.f32 %v2267, %v2465
  %v2499 = vadd.f32 %v2268, %v2468
  %v2500 = vadd.f32 %v2269, %v2473
  %v2501 = vld [vmem:[%s2] sm:$0x1]
  %v2503 = vlaneseq
  %v2504 = vshrl.u32 %v2503, 7
  %v2505 = vsub.s32 0, %v2504
  %v2506 = vrot.slane %v2501, %v2505
  %v2508 = vadd.f32 %v2478, %v2506
  %v2509 = vadd.f32 %v2479, %v2506
  %v2510 = vadd.f32 %v2480, %v2506
  %v2511 = vadd.f32 %v2481, %v2506
  %v2512 = vadd.f32 %v2482, %v2506
  %v2513 = vadd.f32 %v2483, %v2506
  %v2514 = vadd.f32 %v2484, %v2506
  %v2515 = vadd.f32 %v2485, %v2506
  %v2516 = vadd.f32 %v2486, %v2506
  %v2517 = vadd.f32 %v2487, %v2506
  %v2518 = vadd.f32 %v2488, %v2506
  %v2519 = vadd.f32 %v2489, %v2506
  %v2520 = vadd.f32 %v2490, %v2506
  %v2521 = vadd.f32 %v2491, %v2506
  %v2522 = vadd.f32 %v2492, %v2506
  %v2523 = vadd.f32 %v2493, %v2506
  %v2524 = vadd.f32 %v2494, %v2506
  %v2525 = vadd.f32 %v2495, %v2506
  %v2526 = vadd.f32 %v2496, %v2506
  %v2527 = vadd.f32 %v2497, %v2506
  %v2528 = vadd.f32 %v2498, %v2506
  %v2529 = vadd.f32 %v2499, %v2506
  %v2530 = vadd.f32 %v2500, %v2506
  %s2531 = sld [smem:[#allocation3]]
  %vm2532 = vcmp.gt.f32.partialorder %v2508, 0.0
  %vm2533 = vcmp.gt.f32.partialorder %v2509, 0.0
  %vm2534 = vcmp.gt.f32.partialorder %v2510, 0.0
  %vm2535 = vcmp.gt.f32.partialorder %v2511, 0.0
  %vm2536 = vcmp.gt.f32.partialorder %v2512, 0.0
  %vm2537 = vcmp.gt.f32.partialorder %v2513, 0.0
  %vm2538 = vcmp.gt.f32.partialorder %v2514, 0.0
  %vm2539 = vcmp.gt.f32.partialorder %v2515, 0.0
  %vm2540 = vcmp.gt.f32.partialorder %v2516, 0.0
  %vm2541 = vcmp.gt.f32.partialorder %v2517, 0.0
  %vm2542 = vcmp.gt.f32.partialorder %v2518, 0.0
  %vm2543 = vcmp.gt.f32.partialorder %v2519, 0.0
  %vm2544 = vcmp.gt.f32.partialorder %v2520, 0.0
  %vm2545 = vcmp.gt.f32.partialorder %v2521, 0.0
  %vm2546 = vcmp.gt.f32.partialorder %v2522, 0.0
  %vm2547 = vcmp.gt.f32.partialorder %v2523, 0.0
  %vm2548 = vcmp.gt.f32.partialorder %v2524, 0.0
  %vm2549 = vcmp.gt.f32.partialorder %v2525, 0.0
  %vm2550 = vcmp.gt.f32.partialorder %v2526, 0.0
  %vm2551 = vcmp.gt.f32.partialorder %v2527, 0.0
  %vm2552 = vcmp.gt.f32.partialorder %v2528, 0.0
  %vm2553 = vcmp.gt.f32.partialorder %v2529, 0.0
  %vm2554 = vcmp.gt.f32.partialorder %v2530, 0.0
  %v2555 = vstv %s2531
  %v2556 = vmul.f32 %v2508, %v2555
  %v2557 = vmul.f32 %v2509, %v2555
  %v2558 = vmul.f32 %v2510, %v2555
  %v2559 = vmul.f32 %v2511, %v2555
  %v2560 = vmul.f32 %v2512, %v2555
  %v2561 = vmul.f32 %v2513, %v2555
  %v2562 = vmul.f32 %v2514, %v2555
  %v2563 = vmul.f32 %v2515, %v2555
  %v2564 = vmul.f32 %v2516, %v2555
  %v2565 = vmul.f32 %v2517, %v2555
  %v2566 = vmul.f32 %v2518, %v2555
  %v2567 = vmul.f32 %v2519, %v2555
  %v2568 = vmul.f32 %v2520, %v2555
  %v2569 = vmul.f32 %v2521, %v2555
  %v2570 = vmul.f32 %v2522, %v2555
  %v2571 = vmul.f32 %v2523, %v2555
  %v2572 = vmul.f32 %v2524, %v2555
  %v2573 = vmul.f32 %v2525, %v2555
  %v2574 = vmul.f32 %v2526, %v2555
  %v2575 = vmul.f32 %v2527, %v2555
  %v2576 = vmul.f32 %v2528, %v2555
  %v2577 = vmul.f32 %v2529, %v2555
  %v2578 = vmul.f32 %v2530, %v2555
  %v2579 = vsel %vm2532, %v2508, %v2556
  %v2580 = vsel %vm2533, %v2509, %v2557
  %v2581 = vsel %vm2534, %v2510, %v2558
  %v2582 = vsel %vm2535, %v2511, %v2559
  %v2583 = vsel %vm2536, %v2512, %v2560
  %v2584 = vsel %vm2537, %v2513, %v2561
  %v2585 = vsel %vm2538, %v2514, %v2562
  %v2586 = vsel %vm2539, %v2515, %v2563
  %v2587 = vsel %vm2540, %v2516, %v2564
  %v2588 = vsel %vm2541, %v2517, %v2565
  %v2589 = vsel %vm2542, %v2518, %v2566
  %v2590 = vsel %vm2543, %v2519, %v2567
  %v2591 = vsel %vm2544, %v2520, %v2568
  %v2592 = vsel %vm2545, %v2521, %v2569
  %v2593 = vsel %vm2546, %v2522, %v2570
  %v2594 = vsel %vm2547, %v2523, %v2571
  %v2595 = vsel %vm2548, %v2524, %v2572
  %v2596 = vsel %vm2549, %v2525, %v2573
  %v2597 = vsel %vm2550, %v2526, %v2574
  %v2598 = vsel %vm2551, %v2527, %v2575
  %v2599 = vsel %vm2552, %v2528, %v2576
  %v2600 = vsel %vm2553, %v2529, %v2577
  %v2601 = vsel %vm2554, %v2530, %v2578
  %v2602 = vpack.c.bf16 %v2580, %v2579
  %v2603 = vpack.c.bf16 %v2582, %v2581
  %v2604 = vpack.c.bf16 %v2584, %v2583
  %v2605 = vpack.c.bf16 %v2586, %v2585
  %v2606 = vpack.c.bf16 %v2588, %v2587
  %v2607 = vpack.c.bf16 %v2590, %v2589
  %v2608 = vpack.c.bf16 %v2592, %v2591
  %v2609 = vpack.c.bf16 %v2594, %v2593
  %v2610 = vpack.c.bf16 %v2596, %v2595
  %v2611 = vpack.c.bf16 %v2598, %v2597
  %v2612 = vpack.c.bf16 %v2600, %v2599
  %v2613 = vpack.c.bf16 %v2601, %v2601
  %vm2614 = vcmask 191488
  %2615 = vst.msk [vmem:[#allocation2] sm:$0xf] %vm2614, 0
  %2616 = vst.msk [vmem:[#allocation2 + $0x4] sm:$0xf] %vm2614, 0
  %2617 = vst.msk [vmem:[#allocation2 + $0x8] sm:$0xf] %vm2614, 0
  %2618 = vst.msk [vmem:[#allocation2 + $0xc] sm:$0xf] %vm2614, 0
  %2619 = vst.msk [vmem:[#allocation2 + $0x10] sm:$0xf] %vm2614, 0
  %2620 = vst.msk [vmem:[#allocation2 + $0x14] sm:$0xf] %vm2614, 0
  %2621 = vst.msk [vmem:[#allocation2 + $0x18] sm:$0xf] %vm2614, 0
  %2622 = vst.msk [vmem:[#allocation2 + $0x1c] sm:$0xf] %vm2614, 0
  %2623 = vst.msk [vmem:[#allocation2 + $0x20] sm:$0xf] %vm2614, 0
  %2624 = vst.msk [vmem:[#allocation2 + $0x24] sm:$0xf] %vm2614, 0
  %2625 = vst.msk [vmem:[#allocation2 + $0x28] sm:$0xf] %vm2614, 0
  %2626 = vst.msk [vmem:[#allocation2 + $0x2c] sm:$0xf] %vm2614, 0
  %2627 = vst.msk [vmem:[#allocation2 + $0x30] sm:$0xf] %vm2614, 0
  %2628 = vst.msk [vmem:[#allocation2 + $0x34] sm:$0xf] %vm2614, 0
  %2629 = vst.msk [vmem:[#allocation2 + $0x38] sm:$0xf] %vm2614, 0
  %2630 = vst.msk [vmem:[#allocation2 + $0x3c] sm:$0xf] %vm2614, 0
  %2631 = vst.msk [vmem:[#allocation2 + $0x40] sm:$0xf] %vm2614, 0
  %2632 = vst.msk [vmem:[#allocation2 + $0x44] sm:$0xf] %vm2614, 0
  %2633 = vst.msk [vmem:[#allocation2 + $0x48] sm:$0xf] %vm2614, 0
  %2634 = vst.msk [vmem:[#allocation2 + $0x4c] sm:$0xf] %vm2614, 0
  %2635 = vst.msk [vmem:[#allocation2 + $0x50] sm:$0xf] %vm2614, 0
  %2636 = vst.msk [vmem:[#allocation2 + $0x54] sm:$0xf] %vm2614, 0
  %2637 = vst.msk [vmem:[#allocation2 + $0x58] sm:$0xf] %vm2614, 0
  %2638 = vst.msk [vmem:[#allocation2 + $0x5c] sm:$0xf] %vm2614, 0
  %2639 = vst.msk [vmem:[#allocation2 + $0x60] sm:$0xf] %vm2614, 0
  %2640 = vst.msk [vmem:[#allocation2 + $0x64] sm:$0xf] %vm2614, 0
  %v2653 = vunpack.c.l.b16 %v2602
  %v2654 = vunpack.c.h.b16 %v2602
  %v2655 = vunpack.c.l.b16 %v2603
  %v2656 = vunpack.c.h.b16 %v2603
  %v2657 = vunpack.c.l.b16 %v2604
  %v2658 = vunpack.c.h.b16 %v2604
  %v2659 = vunpack.c.l.b16 %v2605
  %v2660 = vunpack.c.h.b16 %v2605
  %v2661 = vunpack.c.l.b16 %v2606
  %v2662 = vunpack.c.h.b16 %v2606
  %v2663 = vunpack.c.l.b16 %v2607
  %v2664 = vunpack.c.h.b16 %v2607
  %v2665 = vunpack.c.l.b16 %v2608
  %v2666 = vunpack.c.h.b16 %v2608
  %v2667 = vunpack.c.l.b16 %v2609
  %v2668 = vunpack.c.h.b16 %v2609
  %v2669 = vunpack.c.l.b16 %v2610
  %v2670 = vunpack.c.h.b16 %v2610
  %v2671 = vunpack.c.l.b16 %v2611
  %v2672 = vunpack.c.h.b16 %v2611
  %v2673 = vunpack.c.l.b16 %v2612
  %v2674 = vunpack.c.h.b16 %v2612
  %v2675 = vunpack.c.l.b16 %v2613
  %v2676 = vpack.c.b16 %v2653, %v2653
  %v2677 = vpack.c.b16 %v2654, %v2654
  %v2678 = vpack.c.b16 %v2655, %v2655
  %v2679 = vpack.c.b16 %v2656, %v2656
  %v2680 = vpack.c.b16 %v2657, %v2657
  %v2681 = vpack.c.b16 %v2658, %v2658
  %v2682 = vpack.c.b16 %v2659, %v2659
  %v2683 = vpack.c.b16 %v2660, %v2660
  %v2684 = vpack.c.b16 %v2661, %v2661
  %v2685 = vpack.c.b16 %v2662, %v2662
  %v2686 = vpack.c.b16 %v2663, %v2663
  %v2687 = vpack.c.b16 %v2664, %v2664
  %v2688 = vpack.c.b16 %v2665, %v2665
  %v2689 = vpack.c.b16 %v2666, %v2666
  %v2690 = vpack.c.b16 %v2667, %v2667
  %v2691 = vpack.c.b16 %v2668, %v2668
  %v2692 = vpack.c.b16 %v2669, %v2669
  %v2693 = vpack.c.b16 %v2670, %v2670
  %v2694 = vpack.c.b16 %v2671, %v2671
  %v2695 = vpack.c.b16 %v2672, %v2672
  %v2696 = vpack.c.b16 %v2673, %v2673
  %v2697 = vpack.c.b16 %v2674, %v2674
  %v2698 = vpack.c.b16 %v2675, %v2675
  %vm2699 = vsmask.f32 1280
  %vm2700 = vsmask.f32 5392
  %vm2701 = vmor %vm2699, %vm2700
  %v2703 = vshrl.u32 %v2676, 16
  %v2705 = vrot.slane %v2703, 6
  %v2706 = vshll.u32 %v2676, 16
  %v2708 = vrot.slane %v2706, 7
  %v2709 = vor.u32 %v2705, %v2708
  %v2710 = vrot.slane %v2709, 4
  %v2712 = vshrl.u32 %v2677, 16
  %v2714 = vrot.slane %v2712, 6
  %v2715 = vshll.u32 %v2677, 16
  %v2717 = vrot.slane %v2715, 7
  %v2718 = vor.u32 %v2714, %v2717
  %v2719 = vsel %vm2701, %v2710, %v2718
  %v2720 = vrot.slane %v2718, 4
  %v2722 = vshrl.u32 %v2678, 16
  %v2724 = vrot.slane %v2722, 6
  %v2725 = vshll.u32 %v2678, 16
  %v2727 = vrot.slane %v2725, 7
  %v2728 = vor.u32 %v2724, %v2727
  %v2729 = vsel %vm2701, %v2720, %v2728
  %v2730 = vrot.slane %v2728, 4
  %v2732 = vshrl.u32 %v2679, 16
  %v2734 = vrot.slane %v2732, 6
  %v2735 = vshll.u32 %v2679, 16
  %v2737 = vrot.slane %v2735, 7
  %v2738 = vor.u32 %v2734, %v2737
  %v2739 = vsel %vm2701, %v2730, %v2738
  %v2740 = vrot.slane %v2738, 4
  %v2742 = vshrl.u32 %v2680, 16
  %v2744 = vrot.slane %v2742, 6
  %v2745 = vshll.u32 %v2680, 16
  %v2747 = vrot.slane %v2745, 7
  %v2748 = vor.u32 %v2744, %v2747
  %v2749 = vsel %vm2701, %v2740, %v2748
  %v2750 = vrot.slane %v2748, 4
  %v2752 = vshrl.u32 %v2681, 16
  %v2754 = vrot.slane %v2752, 6
  %v2755 = vshll.u32 %v2681, 16
  %v2757 = vrot.slane %v2755, 7
  %v2758 = vor.u32 %v2754, %v2757
  %v2759 = vsel %vm2701, %v2750, %v2758
  %v2760 = vrot.slane %v2758, 4
  %v2762 = vshrl.u32 %v2682, 16
  %v2764 = vrot.slane %v2762, 6
  %v2765 = vshll.u32 %v2682, 16
  %v2767 = vrot.slane %v2765, 7
  %v2768 = vor.u32 %v2764, %v2767
  %v2769 = vsel %vm2701, %v2760, %v2768
  %v2770 = vrot.slane %v2768, 4
  %v2772 = vshrl.u32 %v2683, 16
  %v2774 = vrot.slane %v2772, 6
  %v2775 = vshll.u32 %v2683, 16
  %v2777 = vrot.slane %v2775, 7
  %v2778 = vor.u32 %v2774, %v2777
  %v2779 = vsel %vm2701, %v2770, %v2778
  %v2780 = vrot.slane %v2778, 4
  %v2782 = vshrl.u32 %v2684, 16
  %v2784 = vrot.slane %v2782, 6
  %v2785 = vshll.u32 %v2684, 16
  %v2787 = vrot.slane %v2785, 7
  %v2788 = vor.u32 %v2784, %v2787
  %v2789 = vsel %vm2701, %v2780, %v2788
  %v2790 = vrot.slane %v2788, 4
  %v2792 = vshrl.u32 %v2685, 16
  %v2794 = vrot.slane %v2792, 6
  %v2795 = vshll.u32 %v2685, 16
  %v2797 = vrot.slane %v2795, 7
  %v2798 = vor.u32 %v2794, %v2797
  %v2799 = vsel %vm2701, %v2790, %v2798
  %v2800 = vrot.slane %v2798, 4
  %v2802 = vshrl.u32 %v2686, 16
  %v2804 = vrot.slane %v2802, 6
  %v2805 = vshll.u32 %v2686, 16
  %v2807 = vrot.slane %v2805, 7
  %v2808 = vor.u32 %v2804, %v2807
  %v2809 = vsel %vm2701, %v2800, %v2808
  %v2810 = vrot.slane %v2808, 4
  %v2812 = vshrl.u32 %v2687, 16
  %v2814 = vrot.slane %v2812, 6
  %v2815 = vshll.u32 %v2687, 16
  %v2817 = vrot.slane %v2815, 7
  %v2818 = vor.u32 %v2814, %v2817
  %v2819 = vsel %vm2701, %v2810, %v2818
  %v2820 = vrot.slane %v2818, 4
  %v2822 = vshrl.u32 %v2688, 16
  %v2824 = vrot.slane %v2822, 6
  %v2825 = vshll.u32 %v2688, 16
  %v2827 = vrot.slane %v2825, 7
  %v2828 = vor.u32 %v2824, %v2827
  %v2829 = vsel %vm2701, %v2820, %v2828
  %v2830 = vrot.slane %v2828, 4
  %v2832 = vshrl.u32 %v2689, 16
  %v2834 = vrot.slane %v2832, 6
  %v2835 = vshll.u32 %v2689, 16
  %v2837 = vrot.slane %v2835, 7
  %v2838 = vor.u32 %v2834, %v2837
  %v2839 = vsel %vm2701, %v2830, %v2838
  %v2840 = vrot.slane %v2838, 4
  %v2842 = vshrl.u32 %v2690, 16
  %v2844 = vrot.slane %v2842, 6
  %v2845 = vshll.u32 %v2690, 16
  %v2847 = vrot.slane %v2845, 7
  %v2848 = vor.u32 %v2844, %v2847
  %v2849 = vsel %vm2701, %v2840, %v2848
  %v2850 = vrot.slane %v2848, 4
  %v2852 = vshrl.u32 %v2691, 16
  %v2854 = vrot.slane %v2852, 6
  %v2855 = vshll.u32 %v2691, 16
  %v2857 = vrot.slane %v2855, 7
  %v2858 = vor.u32 %v2854, %v2857
  %v2859 = vsel %vm2701, %v2850, %v2858
  %v2860 = vrot.slane %v2858, 4
  %v2862 = vshrl.u32 %v2692, 16
  %v2864 = vrot.slane %v2862, 6
  %v2865 = vshll.u32 %v2692, 16
  %v2867 = vrot.slane %v2865, 7
  %v2868 = vor.u32 %v2864, %v2867
  %v2869 = vsel %vm2701, %v2860, %v2868
  %v2870 = vrot.slane %v2868, 4
  %v2872 = vshrl.u32 %v2693, 16
  %v2874 = vrot.slane %v2872, 6
  %v2875 = vshll.u32 %v2693, 16
  %v2877 = vrot.slane %v2875, 7
  %v2878 = vor.u32 %v2874, %v2877
  %v2879 = vsel %vm2701, %v2870, %v2878
  %v2880 = vrot.slane %v2878, 4
  %v2882 = vshrl.u32 %v2694, 16
  %v2884 = vrot.slane %v2882, 6
  %v2885 = vshll.u32 %v2694, 16
  %v2887 = vrot.slane %v2885, 7
  %v2888 = vor.u32 %v2884, %v2887
  %v2889 = vsel %vm2701, %v2880, %v2888
  %v2890 = vrot.slane %v2888, 4
  %v2892 = vshrl.u32 %v2695, 16
  %v2894 = vrot.slane %v2892, 6
  %v2895 = vshll.u32 %v2695, 16
  %v2897 = vrot.slane %v2895, 7
  %v2898 = vor.u32 %v2894, %v2897
  %v2899 = vsel %vm2701, %v2890, %v2898
  %v2900 = vrot.slane %v2898, 4
  %v2902 = vshrl.u32 %v2696, 16
  %v2904 = vrot.slane %v2902, 6
  %v2905 = vshll.u32 %v2696, 16
  %v2907 = vrot.slane %v2905, 7
  %v2908 = vor.u32 %v2904, %v2907
  %v2909 = vsel %vm2701, %v2900, %v2908
  %v2910 = vrot.slane %v2908, 4
  %v2912 = vshrl.u32 %v2697, 16
  %v2914 = vrot.slane %v2912, 6
  %v2915 = vshll.u32 %v2697, 16
  %v2917 = vrot.slane %v2915, 7
  %v2918 = vor.u32 %v2914, %v2917
  %v2919 = vsel %vm2701, %v2910, %v2918
  %v2920 = vrot.slane %v2918, 4
  %v2922 = vshrl.u32 %v2698, 16
  %v2924 = vrot.slane %v2922, 6
  %v2925 = vshll.u32 %v2698, 16
  %v2927 = vrot.slane %v2925, 7
  %v2928 = vor.u32 %v2924, %v2927
  %v2929 = vsel %vm2701, %v2920, %v2928
  %v2930 = vrot.slane %v2928, 4
  %vm2955 = vcmask 191489
  %vm2956 = vsmask.f32 7942
  %vm2957 = vmand %vm2955, %vm2956
  %v2958 = vld [vmem:[#allocation2 + $0x4] sm:$0xe]
  %v2959 = vsel %vm2957, %v2709, %v2958
  %2960 = vst [vmem:[#allocation2 + $0x4] sm:$0xe] %v2959
  %2961 = vst.msk [vmem:[#allocation2 + $0x8] sm:$0xf] %vm2614, %v2719
  %2962 = vst.msk [vmem:[#allocation2 + $0xc] sm:$0xf] %vm2614, %v2729
  %2963 = vst.msk [vmem:[#allocation2 + $0x10] sm:$0xf] %vm2614, %v2739
  %2964 = vst.msk [vmem:[#allocation2 + $0x14] sm:$0xf] %vm2614, %v2749
  %2965 = vst.msk [vmem:[#allocation2 + $0x18] sm:$0xf] %vm2614, %v2759
  %2966 = vst.msk [vmem:[#allocation2 + $0x1c] sm:$0xf] %vm2614, %v2769
  %2967 = vst.msk [vmem:[#allocation2 + $0x20] sm:$0xf] %vm2614, %v2779
  %2968 = vst.msk [vmem:[#allocation2 + $0x24] sm:$0xf] %vm2614, %v2789
  %2969 = vst.msk [vmem:[#allocation2 + $0x28] sm:$0xf] %vm2614, %v2799
  %2970 = vst.msk [vmem:[#allocation2 + $0x2c] sm:$0xf] %vm2614, %v2809
  %2971 = vst.msk [vmem:[#allocation2 + $0x30] sm:$0xf] %vm2614, %v2819
  %2972 = vst.msk [vmem:[#allocation2 + $0x34] sm:$0xf] %vm2614, %v2829
  %2973 = vst.msk [vmem:[#allocation2 + $0x38] sm:$0xf] %vm2614, %v2839
  %2974 = vst.msk [vmem:[#allocation2 + $0x3c] sm:$0xf] %vm2614, %v2849
  %2975 = vst.msk [vmem:[#allocation2 + $0x40] sm:$0xf] %vm2614, %v2859
  %2976 = vst.msk [vmem:[#allocation2 + $0x44] sm:$0xf] %vm2614, %v2869
  %2977 = vst.msk [vmem:[#allocation2 + $0x48] sm:$0xf] %vm2614, %v2879
  %2978 = vst.msk [vmem:[#allocation2 + $0x4c] sm:$0xf] %vm2614, %v2889
  %2979 = vst.msk [vmem:[#allocation2 + $0x50] sm:$0xf] %vm2614, %v2899
  %2980 = vst.msk [vmem:[#allocation2 + $0x54] sm:$0xf] %vm2614, %v2909
  %2981 = vst.msk [vmem:[#allocation2 + $0x58] sm:$0xf] %vm2614, %v2919
  %2982 = vst.msk [vmem:[#allocation2 + $0x5c] sm:$0xf] %vm2614, %v2929
  %vm2983 = vcmask 189440
  %vm2984 = vmand %vm2983, %vm2699
  %v2985 = vld [vmem:[#allocation2 + $0x60] sm:$0x3]
  %v2986 = vsel %vm2984, %v2930, %v2985
  %2987 = vst [vmem:[#allocation2 + $0x60] sm:$0x3] %v2986
  %v2988 = vlaneseq
  %v2989 = vshrl.u32 %v2988, 7
  %v2990 = vadd.s32 %v2989, 8
  %v2991 = vadd.s32 %v2989, 16
  %v2992 = vadd.s32 %v2989, 24
  %v2993 = vadd.s32 %v2989, 32
  %v2994 = vadd.s32 %v2989, 40
  %v2995 = vadd.s32 %v2989, 48
  %v2996 = vadd.s32 %v2989, 56
  %v2997 = vadd.s32 %v2989, 64
  %v2998 = vadd.s32 %v2989, 72
  %v2999 = vadd.s32 %v2989, 80
  %v3000 = vadd.s32 %v2989, 88
  %v3001 = vadd.s32 %v2989, 96
  %v3002 = vadd.s32 %v2989, 104
  %v3003 = vadd.s32 %v2989, 112
  %v3004 = vadd.s32 %v2989, 120
  %v3005 = vadd.s32 %v2989, 128
  %v3006 = vadd.s32 %v2989, 136
  %v3007 = vadd.s32 %v2989, 144
  %v3008 = vadd.s32 %v2989, 152
  %v3009 = vadd.s32 %v2989, 160
  %v3010 = vadd.s32 %v2989, 168
  %v3011 = vadd.s32 %v2989, 176
  %vm3012 = vcmp.lt.s32.totalorder %v2989, 0
  %v3013 = vsub.s32 0, %v2989
  %v3014 = vsel %vm3012, %v3013, %v2989
  %v3015 = vmul.u32.u64.compose %v3014, 3435973837
  %v3016 = vextract.low.u32 %v3015
  %v3017 = vextract.high.u32 %v3015
  %v3018 = vshrl.u32 %v3017, 3
  %v3019 = vmul.u32 %v3018, 10
  %v3020 = vsub.s32 %v3014, %v3019
  %v3021 = vsub.s32 0, %v3020
  %v3022 = vsel %vm3012, %v3021, %v3020
  %vm3023 = vcmp.lt.s32.totalorder %v2990, 0
  %v3024 = vsub.s32 0, %v2990
  %v3025 = vsel %vm3023, %v3024, %v2990
  %v3026 = vmul.u32.u64.compose %v3025, 3435973837
  %v3027 = vextract.low.u32 %v3026
  %v3028 = vextract.high.u32 %v3026
  %v3029 = vshrl.u32 %v3028, 3
  %v3030 = vmul.u32 %v3029, 10
  %v3031 = vsub.s32 %v3025, %v3030
  %v3032 = vsub.s32 0, %v3031
  %v3033 = vsel %vm3023, %v3032, %v3031
  %vm3034 = vcmp.lt.s32.totalorder %v2991, 0
  %v3035 = vsub.s32 0, %v2991
  %v3036 = vsel %vm3034, %v3035, %v2991
  %v3037 = vmul.u32.u64.compose %v3036, 3435973837
  %v3038 = vextract.low.u32 %v3037
  %v3039 = vextract.high.u32 %v3037
  %v3040 = vshrl.u32 %v3039, 3
  %v3041 = vmul.u32 %v3040, 10
  %v3042 = vsub.s32 %v3036, %v3041
  %v3043 = vsub.s32 0, %v3042
  %v3044 = vsel %vm3034, %v3043, %v3042
  %vm3045 = vcmp.lt.s32.totalorder %v2992, 0
  %v3046 = vsub.s32 0, %v2992
  %v3047 = vsel %vm3045, %v3046, %v2992
  %v3048 = vmul.u32.u64.compose %v3047, 3435973837
  %v3049 = vextract.low.u32 %v3048
  %v3050 = vextract.high.u32 %v3048
  %v3051 = vshrl.u32 %v3050, 3
  %v3052 = vmul.u32 %v3051, 10
  %v3053 = vsub.s32 %v3047, %v3052
  %v3054 = vsub.s32 0, %v3053
  %v3055 = vsel %vm3045, %v3054, %v3053
  %vm3056 = vcmp.lt.s32.totalorder %v2993, 0
  %v3057 = vsub.s32 0, %v2993
  %v3058 = vsel %vm3056, %v3057, %v2993
  %v3059 = vmul.u32.u64.compose %v3058, 3435973837
  %v3060 = vextract.low.u32 %v3059
  %v3061 = vextract.high.u32 %v3059
  %v3062 = vshrl.u32 %v3061, 3
  %v3063 = vmul.u32 %v3062, 10
  %v3064 = vsub.s32 %v3058, %v3063
  %v3065 = vsub.s32 0, %v3064
  %v3066 = vsel %vm3056, %v3065, %v3064
  %vm3067 = vcmp.lt.s32.totalorder %v2994, 0
  %v3068 = vsub.s32 0, %v2994
  %v3069 = vsel %vm3067, %v3068, %v2994
  %v3070 = vmul.u32.u64.compose %v3069, 3435973837
  %v3071 = vextract.low.u32 %v3070
  %v3072 = vextract.high.u32 %v3070
  %v3073 = vshrl.u32 %v3072, 3
  %v3074 = vmul.u32 %v3073, 10
  %v3075 = vsub.s32 %v3069, %v3074
  %v3076 = vsub.s32 0, %v3075
  %v3077 = vsel %vm3067, %v3076, %v3075
  %vm3078 = vcmp.lt.s32.totalorder %v2995, 0
  %v3079 = vsub.s32 0, %v2995
  %v3080 = vsel %vm3078, %v3079, %v2995
  %v3081 = vmul.u32.u64.compose %v3080, 3435973837
  %v3082 = vextract.low.u32 %v3081
  %v3083 = vextract.high.u32 %v3081
  %v3084 = vshrl.u32 %v3083, 3
  %v3085 = vmul.u32 %v3084, 10
  %v3086 = vsub.s32 %v3080, %v3085
  %v3087 = vsub.s32 0, %v3086
  %v3088 = vsel %vm3078, %v3087, %v3086
  %vm3089 = vcmp.lt.s32.totalorder %v2996, 0
  %v3090 = vsub.s32 0, %v2996
  %v3091 = vsel %vm3089, %v3090, %v2996
  %v3092 = vmul.u32.u64.compose %v3091, 3435973837
  %v3093 = vextract.low.u32 %v3092
  %v3094 = vextract.high.u32 %v3092
  %v3095 = vshrl.u32 %v3094, 3
  %v3096 = vmul.u32 %v3095, 10
  %v3097 = vsub.s32 %v3091, %v3096
  %v3098 = vsub.s32 0, %v3097
  %v3099 = vsel %vm3089, %v3098, %v3097
  %vm3100 = vcmp.lt.s32.totalorder %v2997, 0
  %v3101 = vsub.s32 0, %v2997
  %v3102 = vsel %vm3100, %v3101, %v2997
  %v3103 = vmul.u32.u64.compose %v3102, 3435973837
  %v3104 = vextract.low.u32 %v3103
  %v3105 = vextract.high.u32 %v3103
  %v3106 = vshrl.u32 %v3105, 3
  %v3107 = vmul.u32 %v3106, 10
  %v3108 = vsub.s32 %v3102, %v3107
  %v3109 = vsub.s32 0, %v3108
  %v3110 = vsel %vm3100, %v3109, %v3108
  %vm3111 = vcmp.lt.s32.totalorder %v2998, 0
  %v3112 = vsub.s32 0, %v2998
  %v3113 = vsel %vm3111, %v3112, %v2998
  %v3114 = vmul.u32.u64.compose %v3113, 3435973837
  %v3115 = vextract.low.u32 %v3114
  %v3116 = vextract.high.u32 %v3114
  %v3117 = vshrl.u32 %v3116, 3
  %v3118 = vmul.u32 %v3117, 10
  %v3119 = vsub.s32 %v3113, %v3118
  %v3120 = vsub.s32 0, %v3119
  %v3121 = vsel %vm3111, %v3120, %v3119
  %vm3122 = vcmp.lt.s32.totalorder %v2999, 0
  %v3123 = vsub.s32 0, %v2999
  %v3124 = vsel %vm3122, %v3123, %v2999
  %v3125 = vmul.u32.u64.compose %v3124, 3435973837
  %v3126 = vextract.low.u32 %v3125
  %v3127 = vextract.high.u32 %v3125
  %v3128 = vshrl.u32 %v3127, 3
  %v3129 = vmul.u32 %v3128, 10
  %v3130 = vsub.s32 %v3124, %v3129
  %v3131 = vsub.s32 0, %v3130
  %v3132 = vsel %vm3122, %v3131, %v3130
  %vm3133 = vcmp.lt.s32.totalorder %v3000, 0
  %v3134 = vsub.s32 0, %v3000
  %v3135 = vsel %vm3133, %v3134, %v3000
  %v3136 = vmul.u32.u64.compose %v3135, 3435973837
  %v3137 = vextract.low.u32 %v3136
  %v3138 = vextract.high.u32 %v3136
  %v3139 = vshrl.u32 %v3138, 3
  %v3140 = vmul.u32 %v3139, 10
  %v3141 = vsub.s32 %v3135, %v3140
  %v3142 = vsub.s32 0, %v3141
  %v3143 = vsel %vm3133, %v3142, %v3141
  %vm3144 = vcmp.lt.s32.totalorder %v3001, 0
  %v3145 = vsub.s32 0, %v3001
  %v3146 = vsel %vm3144, %v3145, %v3001
  %v3147 = vmul.u32.u64.compose %v3146, 3435973837
  %v3148 = vextract.low.u32 %v3147
  %v3149 = vextract.high.u32 %v3147
  %v3150 = vshrl.u32 %v3149, 3
  %v3151 = vmul.u32 %v3150, 10
  %v3152 = vsub.s32 %v3146, %v3151
  %v3153 = vsub.s32 0, %v3152
  %v3154 = vsel %vm3144, %v3153, %v3152
  %vm3155 = vcmp.lt.s32.totalorder %v3002, 0
  %v3156 = vsub.s32 0, %v3002
  %v3157 = vsel %vm3155, %v3156, %v3002
  %v3158 = vmul.u32.u64.compose %v3157, 3435973837
  %v3159 = vextract.low.u32 %v3158
  %v3160 = vextract.high.u32 %v3158
  %v3161 = vshrl.u32 %v3160, 3
  %v3162 = vmul.u32 %v3161, 10
  %v3163 = vsub.s32 %v3157, %v3162
  %v3164 = vsub.s32 0, %v3163
  %v3165 = vsel %vm3155, %v3164, %v3163
  %vm3166 = vcmp.lt.s32.totalorder %v3003, 0
  %v3167 = vsub.s32 0, %v3003
  %v3168 = vsel %vm3166, %v3167, %v3003
  %v3169 = vmul.u32.u64.compose %v3168, 3435973837
  %v3170 = vextract.low.u32 %v3169
  %v3171 = vextract.high.u32 %v3169
  %v3172 = vshrl.u32 %v3171, 3
  %v3173 = vmul.u32 %v3172, 10
  %v3174 = vsub.s32 %v3168, %v3173
  %v3175 = vsub.s32 0, %v3174
  %v3176 = vsel %vm3166, %v3175, %v3174
  %vm3177 = vcmp.lt.s32.totalorder %v3004, 0
  %v3178 = vsub.s32 0, %v3004
  %v3179 = vsel %vm3177, %v3178, %v3004
  %v3180 = vmul.u32.u64.compose %v3179, 3435973837
  %v3181 = vextract.low.u32 %v3180
  %v3182 = vextract.high.u32 %v3180
  %v3183 = vshrl.u32 %v3182, 3
  %v3184 = vmul.u32 %v3183, 10
  %v3185 = vsub.s32 %v3179, %v3184
  %v3186 = vsub.s32 0, %v3185
  %v3187 = vsel %vm3177, %v3186, %v3185
  %vm3188 = vcmp.lt.s32.totalorder %v3005, 0
  %v3189 = vsub.s32 0, %v3005
  %v3190 = vsel %vm3188, %v3189, %v3005
  %v3191 = vmul.u32.u64.compose %v3190, 3435973837
  %v3192 = vextract.low.u32 %v3191
  %v3193 = vextract.high.u32 %v3191
  %v3194 = vshrl.u32 %v3193, 3
  %v3195 = vmul.u32 %v3194, 10
  %v3196 = vsub.s32 %v3190, %v3195
  %v3197 = vsub.s32 0, %v3196
  %v3198 = vsel %vm3188, %v3197, %v3196
  %vm3199 = vcmp.lt.s32.totalorder %v3006, 0
  %v3200 = vsub.s32 0, %v3006
  %v3201 = vsel %vm3199, %v3200, %v3006
  %v3202 = vmul.u32.u64.compose %v3201, 3435973837
  %v3203 = vextract.low.u32 %v3202
  %v3204 = vextract.high.u32 %v3202
  %v3205 = vshrl.u32 %v3204, 3
  %v3206 = vmul.u32 %v3205, 10
  %v3207 = vsub.s32 %v3201, %v3206
  %v3208 = vsub.s32 0, %v3207
  %v3209 = vsel %vm3199, %v3208, %v3207
  %vm3210 = vcmp.lt.s32.totalorder %v3007, 0
  %v3211 = vsub.s32 0, %v3007
  %v3212 = vsel %vm3210, %v3211, %v3007
  %v3213 = vmul.u32.u64.compose %v3212, 3435973837
  %v3214 = vextract.low.u32 %v3213
  %v3215 = vextract.high.u32 %v3213
  %v3216 = vshrl.u32 %v3215, 3
  %v3217 = vmul.u32 %v3216, 10
  %v3218 = vsub.s32 %v3212, %v3217
  %v3219 = vsub.s32 0, %v3218
  %v3220 = vsel %vm3210, %v3219, %v3218
  %vm3221 = vcmp.lt.s32.totalorder %v3008, 0
  %v3222 = vsub.s32 0, %v3008
  %v3223 = vsel %vm3221, %v3222, %v3008
  %v3224 = vmul.u32.u64.compose %v3223, 3435973837
  %v3225 = vextract.low.u32 %v3224
  %v3226 = vextract.high.u32 %v3224
  %v3227 = vshrl.u32 %v3226, 3
  %v3228 = vmul.u32 %v3227, 10
  %v3229 = vsub.s32 %v3223, %v3228
  %v3230 = vsub.s32 0, %v3229
  %v3231 = vsel %vm3221, %v3230, %v3229
  %vm3232 = vcmp.lt.s32.totalorder %v3009, 0
  %v3233 = vsub.s32 0, %v3009
  %v3234 = vsel %vm3232, %v3233, %v3009
  %v3235 = vmul.u32.u64.compose %v3234, 3435973837
  %v3236 = vextract.low.u32 %v3235
  %v3237 = vextract.high.u32 %v3235
  %v3238 = vshrl.u32 %v3237, 3
  %v3239 = vmul.u32 %v3238, 10
  %v3240 = vsub.s32 %v3234, %v3239
  %v3241 = vsub.s32 0, %v3240
  %v3242 = vsel %vm3232, %v3241, %v3240
  %vm3243 = vcmp.lt.s32.totalorder %v3010, 0
  %v3244 = vsub.s32 0, %v3010
  %v3245 = vsel %vm3243, %v3244, %v3010
  %v3246 = vmul.u32.u64.compose %v3245, 3435973837
  %v3247 = vextract.low.u32 %v3246
  %v3248 = vextract.high.u32 %v3246
  %v3249 = vshrl.u32 %v3248, 3
  %v3250 = vmul.u32 %v3249, 10
  %v3251 = vsub.s32 %v3245, %v3250
  %v3252 = vsub.s32 0, %v3251
  %v3253 = vsel %vm3243, %v3252, %v3251
  %vm3254 = vcmp.lt.s32.totalorder %v3011, 0
  %v3255 = vsub.s32 0, %v3011
  %v3256 = vsel %vm3254, %v3255, %v3011
  %v3257 = vmul.u32.u64.compose %v3256, 3435973837
  %v3258 = vextract.low.u32 %v3257
  %v3259 = vextract.high.u32 %v3257
  %v3260 = vshrl.u32 %v3259, 3
  %v3261 = vmul.u32 %v3260, 10
  %v3262 = vsub.s32 %v3256, %v3261
  %v3263 = vsub.s32 0, %v3262
  %v3264 = vsel %vm3254, %v3263, %v3262
  %vm3265 = vcmp.ne.s32.totalorder %v3022, 0
  %vm3266 = vcmp.ne.s32.totalorder %v3033, 0
  %vm3267 = vcmp.ne.s32.totalorder %v3044, 0
  %vm3268 = vcmp.ne.s32.totalorder %v3055, 0
  %vm3269 = vcmp.ne.s32.totalorder %v3066, 0
  %vm3270 = vcmp.ne.s32.totalorder %v3077, 0
  %vm3271 = vcmp.ne.s32.totalorder %v3088, 0
  %vm3272 = vcmp.ne.s32.totalorder %v3099, 0
  %vm3273 = vcmp.ne.s32.totalorder %v3110, 0
  %vm3274 = vcmp.ne.s32.totalorder %v3121, 0
  %vm3275 = vcmp.ne.s32.totalorder %v3132, 0
  %vm3276 = vcmp.ne.s32.totalorder %v3143, 0
  %vm3277 = vcmp.ne.s32.totalorder %v3154, 0
  %vm3278 = vcmp.ne.s32.totalorder %v3165, 0
  %vm3279 = vcmp.ne.s32.totalorder %v3176, 0
  %vm3280 = vcmp.ne.s32.totalorder %v3187, 0
  %vm3281 = vcmp.ne.s32.totalorder %v3198, 0
  %vm3282 = vcmp.ne.s32.totalorder %v3209, 0
  %vm3283 = vcmp.ne.s32.totalorder %v3220, 0
  %vm3284 = vcmp.ne.s32.totalorder %v3231, 0
  %vm3285 = vcmp.ne.s32.totalorder %v3242, 0
  %vm3286 = vcmp.ne.s32.totalorder %v3253, 0
  %vm3287 = vcmp.ne.s32.totalorder %v3264, 0
  %vm3288 = vcmp.lt.s32.totalorder %v3022, 0
  %vm3289 = vcmp.lt.s32.totalorder %v3033, 0
  %vm3290 = vcmp.lt.s32.totalorder %v3044, 0
  %vm3291 = vcmp.lt.s32.totalorder %v3055, 0
  %vm3292 = vcmp.lt.s32.totalorder %v3066, 0
  %vm3293 = vcmp.lt.s32.totalorder %v3077, 0
  %vm3294 = vcmp.lt.s32.totalorder %v3088, 0
  %vm3295 = vcmp.lt.s32.totalorder %v3099, 0
  %vm3296 = vcmp.lt.s32.totalorder %v3110, 0
  %vm3297 = vcmp.lt.s32.totalorder %v3121, 0
  %vm3298 = vcmp.lt.s32.totalorder %v3132, 0
  %vm3299 = vcmp.lt.s32.totalorder %v3143, 0
  %vm3300 = vcmp.lt.s32.totalorder %v3154, 0
  %vm3301 = vcmp.lt.s32.totalorder %v3165, 0
  %vm3302 = vcmp.lt.s32.totalorder %v3176, 0
  %vm3303 = vcmp.lt.s32.totalorder %v3187, 0
  %vm3304 = vcmp.lt.s32.totalorder %v3198, 0
  %vm3305 = vcmp.lt.s32.totalorder %v3209, 0
  %vm3306 = vcmp.lt.s32.totalorder %v3220, 0
  %vm3307 = vcmp.lt.s32.totalorder %v3231, 0
  %vm3308 = vcmp.lt.s32.totalorder %v3242, 0
  %vm3309 = vcmp.lt.s32.totalorder %v3253, 0
  %vm3310 = vcmp.lt.s32.totalorder %v3264, 0
  %vm3311 = vmand %vm3288, %vm3265
  %vm3312 = vmand %vm3289, %vm3266
  %vm3313 = vmand %vm3290, %vm3267
  %vm3314 = vmand %vm3291, %vm3268
  %vm3315 = vmand %vm3292, %vm3269
  %vm3316 = vmand %vm3293, %vm3270
  %vm3317 = vmand %vm3294, %vm3271
  %vm3318 = vmand %vm3295, %vm3272
  %vm3319 = vmand %vm3296, %vm3273
  %vm3320 = vmand %vm3297, %vm3274
  %vm3321 = vmand %vm3298, %vm3275
  %vm3322 = vmand %vm3299, %vm3276
  %vm3323 = vmand %vm3300, %vm3277
  %vm3324 = vmand %vm3301, %vm3278
  %vm3325 = vmand %vm3302, %vm3279
  %vm3326 = vmand %vm3303, %vm3280
  %vm3327 = vmand %vm3304, %vm3281
  %vm3328 = vmand %vm3305, %vm3282
  %vm3329 = vmand %vm3306, %vm3283
  %vm3330 = vmand %vm3307, %vm3284
  %vm3331 = vmand %vm3308, %vm3285
  %vm3332 = vmand %vm3309, %vm3286
  %vm3333 = vmand %vm3310, %vm3287
  %v3334 = vadd.s32 %v3022, 10
  %v3335 = vadd.s32 %v3033, 10
  %v3336 = vadd.s32 %v3044, 10
  %v3337 = vadd.s32 %v3055, 10
  %v3338 = vadd.s32 %v3066, 10
  %v3339 = vadd.s32 %v3077, 10
  %v3340 = vadd.s32 %v3088, 10
  %v3341 = vadd.s32 %v3099, 10
  %v3342 = vadd.s32 %v3110, 10
  %v3343 = vadd.s32 %v3121, 10
  %v3344 = vadd.s32 %v3132, 10
  %v3345 = vadd.s32 %v3143, 10
  %v3346 = vadd.s32 %v3154, 10
  %v3347 = vadd.s32 %v3165, 10
  %v3348 = vadd.s32 %v3176, 10
  %v3349 = vadd.s32 %v3187, 10
  %v3350 = vadd.s32 %v3198, 10
  %v3351 = vadd.s32 %v3209, 10
  %v3352 = vadd.s32 %v3220, 10
  %v3353 = vadd.s32 %v3231, 10
  %v3354 = vadd.s32 %v3242, 10
  %v3355 = vadd.s32 %v3253, 10
  %v3356 = vadd.s32 %v3264, 10
  %v3357 = vsel %vm3311, %v3334, %v3022
  %v3358 = vsel %vm3312, %v3335, %v3033
  %v3359 = vsel %vm3313, %v3336, %v3044
  %v3360 = vsel %vm3314, %v3337, %v3055
  %v3361 = vsel %vm3315, %v3338, %v3066
  %v3362 = vsel %vm3316, %v3339, %v3077
  %v3363 = vsel %vm3317, %v3340, %v3088
  %v3364 = vsel %vm3318, %v3341, %v3099
  %v3365 = vsel %vm3319, %v3342, %v3110
  %v3366 = vsel %vm3320, %v3343, %v3121
  %v3367 = vsel %vm3321, %v3344, %v3132
  %v3368 = vsel %vm3322, %v3345, %v3143
  %v3369 = vsel %vm3323, %v3346, %v3154
  %v3370 = vsel %vm3324, %v3347, %v3165
  %v3371 = vsel %vm3325, %v3348, %v3176
  %v3372 = vsel %vm3326, %v3349, %v3187
  %v3373 = vsel %vm3327, %v3350, %v3198
  %v3374 = vsel %vm3328, %v3351, %v3209
  %v3375 = vsel %vm3329, %v3352, %v3220
  %v3376 = vsel %vm3330, %v3353, %v3231
  %v3377 = vsel %vm3331, %v3354, %v3242
  %v3378 = vsel %vm3332, %v3355, %v3253
  %v3379 = vsel %vm3333, %v3356, %v3264
  %v3380 = vld [vmem:[#allocation2 + $0x4] sm:$0xe]
  %v3381 = vld [vmem:[#allocation2 + $0x8] sm:$0xf]
  %v3382 = vld [vmem:[#allocation2 + $0xc] sm:$0xf]
  %v3383 = vld [vmem:[#allocation2 + $0x10] sm:$0xf]
  %v3384 = vld [vmem:[#allocation2 + $0x14] sm:$0xf]
  %v3385 = vld [vmem:[#allocation2 + $0x18] sm:$0xf]
  %v3386 = vld [vmem:[#allocation2 + $0x1c] sm:$0xf]
  %v3387 = vld [vmem:[#allocation2 + $0x20] sm:$0xf]
  %v3388 = vld [vmem:[#allocation2 + $0x24] sm:$0xf]
  %v3389 = vld [vmem:[#allocation2 + $0x28] sm:$0xf]
  %v3390 = vld [vmem:[#allocation2 + $0x2c] sm:$0xf]
  %v3391 = vld [vmem:[#allocation2 + $0x30] sm:$0xf]
  %v3392 = vld [vmem:[#allocation2 + $0x34] sm:$0xf]
  %v3393 = vld [vmem:[#allocation2 + $0x38] sm:$0xf]
  %v3394 = vld [vmem:[#allocation2 + $0x3c] sm:$0xf]
  %v3395 = vld [vmem:[#allocation2 + $0x40] sm:$0xf]
  %v3396 = vld [vmem:[#allocation2 + $0x44] sm:$0xf]
  %v3397 = vld [vmem:[#allocation2 + $0x48] sm:$0xf]
  %v3398 = vld [vmem:[#allocation2 + $0x4c] sm:$0xf]
  %v3399 = vld [vmem:[#allocation2 + $0x50] sm:$0xf]
  %v3400 = vld [vmem:[#allocation2 + $0x54] sm:$0xf]
  %v3401 = vld [vmem:[#allocation2 + $0x58] sm:$0xf]
  %v3402 = vld [vmem:[#allocation2 + $0x5c] sm:$0xf]
  %v3403 = vld [vmem:[#allocation2 + $0x60] sm:$0x1]
  %v3404 = vld [vmem:[#allocation2 + $0x4] sm:$0xc]
  %v3405 = vld [vmem:[#allocation2 + $0x60] sm:$0x3]
  %vm3406 = vcmp.eq.s32.totalorder %v3357, 8
  %vm3407 = vcmp.eq.s32.totalorder %v3358, 8
  %vm3408 = vcmp.eq.s32.totalorder %v3359, 8
  %vm3409 = vcmp.eq.s32.totalorder %v3360, 8
  %vm3410 = vcmp.eq.s32.totalorder %v3361, 8
  %vm3411 = vcmp.eq.s32.totalorder %v3362, 8
  %vm3412 = vcmp.eq.s32.totalorder %v3363, 8
  %vm3413 = vcmp.eq.s32.totalorder %v3364, 8
  %vm3414 = vcmp.eq.s32.totalorder %v3365, 8
  %vm3415 = vcmp.eq.s32.totalorder %v3366, 8
  %vm3416 = vcmp.eq.s32.totalorder %v3367, 8
  %vm3417 = vcmp.eq.s32.totalorder %v3368, 8
  %vm3418 = vcmp.eq.s32.totalorder %v3369, 8
  %vm3419 = vcmp.eq.s32.totalorder %v3370, 8
  %vm3420 = vcmp.eq.s32.totalorder %v3371, 8
  %vm3421 = vcmp.eq.s32.totalorder %v3372, 8
  %vm3422 = vcmp.eq.s32.totalorder %v3373, 8
  %vm3423 = vcmp.eq.s32.totalorder %v3374, 8
  %vm3424 = vcmp.eq.s32.totalorder %v3375, 8
  %vm3425 = vcmp.eq.s32.totalorder %v3376, 8
  %vm3426 = vcmp.eq.s32.totalorder %v3377, 8
  %vm3427 = vcmp.eq.s32.totalorder %v3378, 8
  %vm3428 = vcmp.eq.s32.totalorder %v3379, 8
  %v3429 = vsel %vm3406, 1, 0
  %v3430 = vsel %vm3407, 1, 0
  %v3431 = vsel %vm3408, 1, 0
  %v3432 = vsel %vm3409, 1, 0
  %v3433 = vsel %vm3410, 1, 0
  %v3434 = vsel %vm3411, 1, 0
  %v3435 = vsel %vm3412, 1, 0
  %v3436 = vsel %vm3413, 1, 0
  %v3437 = vsel %vm3414, 1, 0
  %v3438 = vsel %vm3415, 1, 0
  %v3439 = vsel %vm3416, 1, 0
  %v3440 = vsel %vm3417, 1, 0
  %v3441 = vsel %vm3418, 1, 0
  %v3442 = vsel %vm3419, 1, 0
  %v3443 = vsel %vm3420, 1, 0
  %v3444 = vsel %vm3421, 1, 0
  %v3445 = vsel %vm3422, 1, 0
  %v3446 = vsel %vm3423, 1, 0
  %v3447 = vsel %vm3424, 1, 0
  %v3448 = vsel %vm3425, 1, 0
  %v3449 = vsel %vm3426, 1, 0
  %v3450 = vsel %vm3427, 1, 0
  %v3451 = vsel %vm3428, 1, 0
  %vm3452 = vcmp.eq.s32.totalorder %v3429, 1
  %vm3453 = vcmp.eq.s32.totalorder %v3430, 1
  %vm3454 = vcmp.eq.s32.totalorder %v3431, 1
  %vm3455 = vcmp.eq.s32.totalorder %v3432, 1
  %vm3456 = vcmp.eq.s32.totalorder %v3433, 1
  %vm3457 = vcmp.eq.s32.totalorder %v3434, 1
  %vm3458 = vcmp.eq.s32.totalorder %v3435, 1
  %vm3459 = vcmp.eq.s32.totalorder %v3436, 1
  %vm3460 = vcmp.eq.s32.totalorder %v3437, 1
  %vm3461 = vcmp.eq.s32.totalorder %v3438, 1
  %vm3462 = vcmp.eq.s32.totalorder %v3439, 1
  %vm3463 = vcmp.eq.s32.totalorder %v3440, 1
  %vm3464 = vcmp.eq.s32.totalorder %v3441, 1
  %vm3465 = vcmp.eq.s32.totalorder %v3442, 1
  %vm3466 = vcmp.eq.s32.totalorder %v3443, 1
  %vm3467 = vcmp.eq.s32.totalorder %v3444, 1
  %vm3468 = vcmp.eq.s32.totalorder %v3445, 1
  %vm3469 = vcmp.eq.s32.totalorder %v3446, 1
  %vm3470 = vcmp.eq.s32.totalorder %v3447, 1
  %vm3471 = vcmp.eq.s32.totalorder %v3448, 1
  %vm3472 = vcmp.eq.s32.totalorder %v3449, 1
  %vm3473 = vcmp.eq.s32.totalorder %v3450, 1
  %vm3474 = vcmp.eq.s32.totalorder %v3451, 1
  %vm3475 = vmpackc.low %vm3452, %vm3452
  %vm3476 = vmpackc.low %vm3453, %vm3453
  %vm3477 = vmpackc.low %vm3454, %vm3454
  %vm3478 = vmpackc.low %vm3455, %vm3455
  %vm3479 = vmpackc.low %vm3456, %vm3456
  %vm3480 = vmpackc.low %vm3457, %vm3457
  %vm3481 = vmpackc.low %vm3458, %vm3458
  %vm3482 = vmpackc.low %vm3459, %vm3459
  %vm3483 = vmpackc.low %vm3460, %vm3460
  %vm3484 = vmpackc.low %vm3461, %vm3461
  %vm3485 = vmpackc.low %vm3462, %vm3462
  %vm3486 = vmpackc.low %vm3463, %vm3463
  %vm3487 = vmpackc.low %vm3464, %vm3464
  %vm3488 = vmpackc.low %vm3465, %vm3465
  %vm3489 = vmpackc.low %vm3466, %vm3466
  %vm3490 = vmpackc.low %vm3467, %vm3467
  %vm3491 = vmpackc.low %vm3468, %vm3468
  %vm3492 = vmpackc.low %vm3469, %vm3469
  %vm3493 = vmpackc.low %vm3470, %vm3470
  %vm3494 = vmpackc.low %vm3471, %vm3471
  %vm3495 = vmpackc.low %vm3472, %vm3472
  %vm3496 = vmpackc.low %vm3473, %vm3473
  %vm3497 = vmpackc.low %vm3474, %vm3474
  %v3498 = vsel %vm3475, 65537, 0
  %v3499 = vsel %vm3476, 65537, 0
  %v3500 = vsel %vm3477, 65537, 0
  %v3501 = vsel %vm3478, 65537, 0
  %v3502 = vsel %vm3479, 65537, 0
  %v3503 = vsel %vm3480, 65537, 0
  %v3504 = vsel %vm3481, 65537, 0
  %v3505 = vsel %vm3482, 65537, 0
  %v3506 = vsel %vm3483, 65537, 0
  %v3507 = vsel %vm3484, 65537, 0
  %v3508 = vsel %vm3485, 65537, 0
  %v3509 = vsel %vm3486, 65537, 0
  %v3510 = vsel %vm3487, 65537, 0
  %v3511 = vsel %vm3488, 65537, 0
  %v3512 = vsel %vm3489, 65537, 0
  %v3513 = vsel %vm3490, 65537, 0
  %v3514 = vsel %vm3491, 65537, 0
  %v3515 = vsel %vm3492, 65537, 0
  %v3516 = vsel %vm3493, 65537, 0
  %v3517 = vsel %vm3494, 65537, 0
  %v3518 = vsel %vm3495, 65537, 0
  %v3519 = vsel %vm3496, 65537, 0
  %v3520 = vsel %vm3497, 65537, 0
  %vm3521 = vcmask 1040384
  %vm3522 = vcmask 1044484
  %vm3523 = vmor %vm3521, %vm3522
  %v3524 = vrot.slane %v3498, 7
  %v3525 = vrot.slane %v3524, 4
  %v3526 = vrot.slane %v3499, 7
  %v3527 = vsel %vm3523, %v3525, %v3526
  %v3528 = vrot.slane %v3526, 4
  %v3529 = vrot.slane %v3500, 7
  %v3530 = vsel %vm3523, %v3528, %v3529
  %v3531 = vrot.slane %v3529, 4
  %v3532 = vrot.slane %v3501, 7
  %v3533 = vsel %vm3523, %v3531, %v3532
  %v3534 = vrot.slane %v3532, 4
  %v3535 = vrot.slane %v3502, 7
  %v3536 = vsel %vm3523, %v3534, %v3535
  %v3537 = vrot.slane %v3535, 4
  %v3538 = vrot.slane %v3503, 7
  %v3539 = vsel %vm3523, %v3537, %v3538
  %v3540 = vrot.slane %v3538, 4
  %v3541 = vrot.slane %v3504, 7
  %v3542 = vsel %vm3523, %v3540, %v3541
  %v3543 = vrot.slane %v3541, 4
  %v3544 = vrot.slane %v3505, 7
  %v3545 = vsel %vm3523, %v3543, %v3544
  %v3546 = vrot.slane %v3544, 4
  %v3547 = vrot.slane %v3506, 7
  %v3548 = vsel %vm3523, %v3546, %v3547
  %v3549 = vrot.slane %v3547, 4
  %v3550 = vrot.slane %v3507, 7
  %v3551 = vsel %vm3523, %v3549, %v3550
  %v3552 = vrot.slane %v3550, 4
  %v3553 = vrot.slane %v3508, 7
  %v3554 = vsel %vm3523, %v3552, %v3553
  %v3555 = vrot.slane %v3553, 4
  %v3556 = vrot.slane %v3509, 7
  %v3557 = vsel %vm3523, %v3555, %v3556
  %v3558 = vrot.slane %v3556, 4
  %v3559 = vrot.slane %v3510, 7
  %v3560 = vsel %vm3523, %v3558, %v3559
  %v3561 = vrot.slane %v3559, 4
  %v3562 = vrot.slane %v3511, 7
  %v3563 = vsel %vm3523, %v3561, %v3562
  %v3564 = vrot.slane %v3562, 4
  %v3565 = vrot.slane %v3512, 7
  %v3566 = vsel %vm3523, %v3564, %v3565
  %v3567 = vrot.slane %v3565, 4
  %v3568 = vrot.slane %v3513, 7
  %v3569 = vsel %vm3523, %v3567, %v3568
  %v3570 = vrot.slane %v3568, 4
  %v3571 = vrot.slane %v3514, 7
  %v3572 = vsel %vm3523, %v3570, %v3571
  %v3573 = vrot.slane %v3571, 4
  %v3574 = vrot.slane %v3515, 7
  %v3575 = vsel %vm3523, %v3573, %v3574
  %v3576 = vrot.slane %v3574, 4
  %v3577 = vrot.slane %v3516, 7
  %v3578 = vsel %vm3523, %v3576, %v3577
  %v3579 = vrot.slane %v3577, 4
  %v3580 = vrot.slane %v3517, 7
  %v3581 = vsel %vm3523, %v3579, %v3580
  %v3582 = vrot.slane %v3580, 4
  %v3583 = vrot.slane %v3518, 7
  %v3584 = vsel %vm3523, %v3582, %v3583
  %v3585 = vrot.slane %v3583, 4
  %v3586 = vrot.slane %v3519, 7
  %v3587 = vsel %vm3523, %v3585, %v3586
  %v3588 = vrot.slane %v3586, 4
  %v3589 = vrot.slane %v3520, 7
  %v3590 = vsel %vm3523, %v3588, %v3589
  %v3591 = vrot.slane %v3589, 4
  %vm3592 = vcmp.ne.s16.totalorder %v3524, 0
  %vm3593 = vcmp.ne.s16.totalorder %v3527, 0
  %vm3594 = vcmp.ne.s16.totalorder %v3530, 0
  %vm3595 = vcmp.ne.s16.totalorder %v3533, 0
  %vm3596 = vcmp.ne.s16.totalorder %v3536, 0
  %vm3597 = vcmp.ne.s16.totalorder %v3539, 0
  %vm3598 = vcmp.ne.s16.totalorder %v3542, 0
  %vm3599 = vcmp.ne.s16.totalorder %v3545, 0
  %vm3600 = vcmp.ne.s16.totalorder %v3548, 0
  %vm3601 = vcmp.ne.s16.totalorder %v3551, 0
  %vm3602 = vcmp.ne.s16.totalorder %v3554, 0
  %vm3603 = vcmp.ne.s16.totalorder %v3557, 0
  %vm3604 = vcmp.ne.s16.totalorder %v3560, 0
  %vm3605 = vcmp.ne.s16.totalorder %v3563, 0
  %vm3606 = vcmp.ne.s16.totalorder %v3566, 0
  %vm3607 = vcmp.ne.s16.totalorder %v3569, 0
  %vm3608 = vcmp.ne.s16.totalorder %v3572, 0
  %vm3609 = vcmp.ne.s16.totalorder %v3575, 0
  %vm3610 = vcmp.ne.s16.totalorder %v3578, 0
  %vm3611 = vcmp.ne.s16.totalorder %v3581, 0
  %vm3612 = vcmp.ne.s16.totalorder %v3584, 0
  %vm3613 = vcmp.ne.s16.totalorder %v3587, 0
  %vm3614 = vcmp.ne.s16.totalorder %v3590, 0
  %vm3615 = vcmp.ne.s16.totalorder %v3591, 0
  %v3616 = vrot.slane %v2676, 7
  %v3617 = vrot.slane %v3616, 4
  %v3618 = vrot.slane %v2677, 7
  %v3619 = vsel %vm3523, %v3617, %v3618
  %v3620 = vrot.slane %v3618, 4
  %v3621 = vrot.slane %v2678, 7
  %v3622 = vsel %vm3523, %v3620, %v3621
  %v3623 = vrot.slane %v3621, 4
  %v3624 = vrot.slane %v2679, 7
  %v3625 = vsel %vm3523, %v3623, %v3624
  %v3626 = vrot.slane %v3624, 4
  %v3627 = vrot.slane %v2680, 7
  %v3628 = vsel %vm3523, %v3626, %v3627
  %v3629 = vrot.slane %v3627, 4
  %v3630 = vrot.slane %v2681, 7
  %v3631 = vsel %vm3523, %v3629, %v3630
  %v3632 = vrot.slane %v3630, 4
  %v3633 = vrot.slane %v2682, 7
  %v3634 = vsel %vm3523, %v3632, %v3633
  %v3635 = vrot.slane %v3633, 4
  %v3636 = vrot.slane %v2683, 7
  %v3637 = vsel %vm3523, %v3635, %v3636
  %v3638 = vrot.slane %v3636, 4
  %v3639 = vrot.slane %v2684, 7
  %v3640 = vsel %vm3523, %v3638, %v3639
  %v3641 = vrot.slane %v3639, 4
  %v3642 = vrot.slane %v2685, 7
  %v3643 = vsel %vm3523, %v3641, %v3642
  %v3644 = vrot.slane %v3642, 4
  %v3645 = vrot.slane %v2686, 7
  %v3646 = vsel %vm3523, %v3644, %v3645
  %v3647 = vrot.slane %v3645, 4
  %v3648 = vrot.slane %v2687, 7
  %v3649 = vsel %vm3523, %v3647, %v3648
  %v3650 = vrot.slane %v3648, 4
  %v3651 = vrot.slane %v2688, 7
  %v3652 = vsel %vm3523, %v3650, %v3651
  %v3653 = vrot.slane %v3651, 4
  %v3654 = vrot.slane %v2689, 7
  %v3655 = vsel %vm3523, %v3653, %v3654
  %v3656 = vrot.slane %v3654, 4
  %v3657 = vrot.slane %v2690, 7
  %v3658 = vsel %vm3523, %v3656, %v3657
  %v3659 = vrot.slane %v3657, 4
  %v3660 = vrot.slane %v2691, 7
  %v3661 = vsel %vm3523, %v3659, %v3660
  %v3662 = vrot.slane %v3660, 4
  %v3663 = vrot.slane %v2692, 7
  %v3664 = vsel %vm3523, %v3662, %v3663
  %v3665 = vrot.slane %v3663, 4
  %v3666 = vrot.slane %v2693, 7
  %v3667 = vsel %vm3523, %v3665, %v3666
  %v3668 = vrot.slane %v3666, 4
  %v3669 = vrot.slane %v2694, 7
  %v3670 = vsel %vm3523, %v3668, %v3669
  %v3671 = vrot.slane %v3669, 4
  %v3672 = vrot.slane %v2695, 7
  %v3673 = vsel %vm3523, %v3671, %v3672
  %v3674 = vrot.slane %v3672, 4
  %v3675 = vrot.slane %v2696, 7
  %v3676 = vsel %vm3523, %v3674, %v3675
  %v3677 = vrot.slane %v3675, 4
  %v3678 = vrot.slane %v2697, 7
  %v3679 = vsel %vm3523, %v3677, %v3678
  %v3680 = vrot.slane %v3678, 4
  %v3681 = vrot.slane %v2698, 7
  %v3682 = vsel %vm3523, %v3680, %v3681
  %v3683 = vrot.slane %v3681, 4
  %v3708 = vsel %vm3592, %v3380, %v3616
  %v3709 = vsel %vm3593, %v3381, %v3619
  %v3710 = vsel %vm3594, %v3382, %v3622
  %v3711 = vsel %vm3595, %v3383, %v3625
  %v3712 = vsel %vm3596, %v3384, %v3628
  %v3713 = vsel %vm3597, %v3385, %v3631
  %v3714 = vsel %vm3598, %v3386, %v3634
  %v3715 = vsel %vm3599, %v3387, %v3637
  %v3716 = vsel %vm3600, %v3388, %v3640
  %v3717 = vsel %vm3601, %v3389, %v3643
  %v3718 = vsel %vm3602, %v3390, %v3646
  %v3719 = vsel %vm3603, %v3391, %v3649
  %v3720 = vsel %vm3604, %v3392, %v3652
  %v3721 = vsel %vm3605, %v3393, %v3655
  %v3722 = vsel %vm3606, %v3394, %v3658
  %v3723 = vsel %vm3607, %v3395, %v3661
  %v3724 = vsel %vm3608, %v3396, %v3664
  %v3725 = vsel %vm3609, %v3397, %v3667
  %v3726 = vsel %vm3610, %v3398, %v3670
  %v3727 = vsel %vm3611, %v3399, %v3673
  %v3728 = vsel %vm3612, %v3400, %v3676
  %v3729 = vsel %vm3613, %v3401, %v3679
  %v3730 = vsel %vm3614, %v3402, %v3682
  %v3731 = vsel %vm3615, %v3403, %v3683
  %vm3732 = vcmp.eq.s32.totalorder %v3357, 9
  %vm3733 = vcmp.eq.s32.totalorder %v3358, 9
  %vm3734 = vcmp.eq.s32.totalorder %v3359, 9
  %vm3735 = vcmp.eq.s32.totalorder %v3360, 9
  %vm3736 = vcmp.eq.s32.totalorder %v3361, 9
  %vm3737 = vcmp.eq.s32.totalorder %v3362, 9
  %vm3738 = vcmp.eq.s32.totalorder %v3363, 9
  %vm3739 = vcmp.eq.s32.totalorder %v3364, 9
  %vm3740 = vcmp.eq.s32.totalorder %v3365, 9
  %vm3741 = vcmp.eq.s32.totalorder %v3366, 9
  %vm3742 = vcmp.eq.s32.totalorder %v3367, 9
  %vm3743 = vcmp.eq.s32.totalorder %v3368, 9
  %vm3744 = vcmp.eq.s32.totalorder %v3369, 9
  %vm3745 = vcmp.eq.s32.totalorder %v3370, 9
  %vm3746 = vcmp.eq.s32.totalorder %v3371, 9
  %vm3747 = vcmp.eq.s32.totalorder %v3372, 9
  %vm3748 = vcmp.eq.s32.totalorder %v3373, 9
  %vm3749 = vcmp.eq.s32.totalorder %v3374, 9
  %vm3750 = vcmp.eq.s32.totalorder %v3375, 9
  %vm3751 = vcmp.eq.s32.totalorder %v3376, 9
  %vm3752 = vcmp.eq.s32.totalorder %v3377, 9
  %vm3753 = vcmp.eq.s32.totalorder %v3378, 9
  %vm3754 = vcmp.eq.s32.totalorder %v3379, 9
  %v3755 = vsel %vm3732, 1, 0
  %v3756 = vsel %vm3733, 1, 0
  %v3757 = vsel %vm3734, 1, 0
  %v3758 = vsel %vm3735, 1, 0
  %v3759 = vsel %vm3736, 1, 0
  %v3760 = vsel %vm3737, 1, 0
  %v3761 = vsel %vm3738, 1, 0
  %v3762 = vsel %vm3739, 1, 0
  %v3763 = vsel %vm3740, 1, 0
  %v3764 = vsel %vm3741, 1, 0
  %v3765 = vsel %vm3742, 1, 0
  %v3766 = vsel %vm3743, 1, 0
  %v3767 = vsel %vm3744, 1, 0
  %v3768 = vsel %vm3745, 1, 0
  %v3769 = vsel %vm3746, 1, 0
  %v3770 = vsel %vm3747, 1, 0
  %v3771 = vsel %vm3748, 1, 0
  %v3772 = vsel %vm3749, 1, 0
  %v3773 = vsel %vm3750, 1, 0
  %v3774 = vsel %vm3751, 1, 0
  %v3775 = vsel %vm3752, 1, 0
  %v3776 = vsel %vm3753, 1, 0
  %v3777 = vsel %vm3754, 1, 0
  %vm3778 = vcmp.eq.s32.totalorder %v3755, 1
  %vm3779 = vcmp.eq.s32.totalorder %v3756, 1
  %vm3780 = vcmp.eq.s32.totalorder %v3757, 1
  %vm3781 = vcmp.eq.s32.totalorder %v3758, 1
  %vm3782 = vcmp.eq.s32.totalorder %v3759, 1
  %vm3783 = vcmp.eq.s32.totalorder %v3760, 1
  %vm3784 = vcmp.eq.s32.totalorder %v3761, 1
  %vm3785 = vcmp.eq.s32.totalorder %v3762, 1
  %vm3786 = vcmp.eq.s32.totalorder %v3763, 1
  %vm3787 = vcmp.eq.s32.totalorder %v3764, 1
  %vm3788 = vcmp.eq.s32.totalorder %v3765, 1
  %vm3789 = vcmp.eq.s32.totalorder %v3766, 1
  %vm3790 = vcmp.eq.s32.totalorder %v3767, 1
  %vm3791 = vcmp.eq.s32.totalorder %v3768, 1
  %vm3792 = vcmp.eq.s32.totalorder %v3769, 1
  %vm3793 = vcmp.eq.s32.totalorder %v3770, 1
  %vm3794 = vcmp.eq.s32.totalorder %v3771, 1
  %vm3795 = vcmp.eq.s32.totalorder %v3772, 1
  %vm3796 = vcmp.eq.s32.totalorder %v3773, 1
  %vm3797 = vcmp.eq.s32.totalorder %v3774, 1
  %vm3798 = vcmp.eq.s32.totalorder %v3775, 1
  %vm3799 = vcmp.eq.s32.totalorder %v3776, 1
  %vm3800 = vcmp.eq.s32.totalorder %v3777, 1
  %vm3801 = vmpackc.low %vm3778, %vm3778
  %vm3802 = vmpackc.low %vm3779, %vm3779
  %vm3803 = vmpackc.low %vm3780, %vm3780
  %vm3804 = vmpackc.low %vm3781, %vm3781
  %vm3805 = vmpackc.low %vm3782, %vm3782
  %vm3806 = vmpackc.low %vm3783, %vm3783
  %vm3807 = vmpackc.low %vm3784, %vm3784
  %vm3808 = vmpackc.low %vm3785, %vm3785
  %vm3809 = vmpackc.low %vm3786, %vm3786
  %vm3810 = vmpackc.low %vm3787, %vm3787
  %vm3811 = vmpackc.low %vm3788, %vm3788
  %vm3812 = vmpackc.low %vm3789, %vm3789
  %vm3813 = vmpackc.low %vm3790, %vm3790
  %vm3814 = vmpackc.low %vm3791, %vm3791
  %vm3815 = vmpackc.low %vm3792, %vm3792
  %vm3816 = vmpackc.low %vm3793, %vm3793
  %vm3817 = vmpackc.low %vm3794, %vm3794
  %vm3818 = vmpackc.low %vm3795, %vm3795
  %vm3819 = vmpackc.low %vm3796, %vm3796
  %vm3820 = vmpackc.low %vm3797, %vm3797
  %vm3821 = vmpackc.low %vm3798, %vm3798
  %vm3822 = vmpackc.low %vm3799, %vm3799
  %vm3823 = vmpackc.low %vm3800, %vm3800
  %v3824 = vsel %vm3801, 65537, 0
  %v3825 = vsel %vm3802, 65537, 0
  %v3826 = vsel %vm3803, 65537, 0
  %v3827 = vsel %vm3804, 65537, 0
  %v3828 = vsel %vm3805, 65537, 0
  %v3829 = vsel %vm3806, 65537, 0
  %v3830 = vsel %vm3807, 65537, 0
  %v3831 = vsel %vm3808, 65537, 0
  %v3832 = vsel %vm3809, 65537, 0
  %v3833 = vsel %vm3810, 65537, 0
  %v3834 = vsel %vm3811, 65537, 0
  %v3835 = vsel %vm3812, 65537, 0
  %v3836 = vsel %vm3813, 65537, 0
  %v3837 = vsel %vm3814, 65537, 0
  %v3838 = vsel %vm3815, 65537, 0
  %v3839 = vsel %vm3816, 65537, 0
  %v3840 = vsel %vm3817, 65537, 0
  %v3841 = vsel %vm3818, 65537, 0
  %v3842 = vsel %vm3819, 65537, 0
  %v3843 = vsel %vm3820, 65537, 0
  %v3844 = vsel %vm3821, 65537, 0
  %v3845 = vsel %vm3822, 65537, 0
  %v3846 = vsel %vm3823, 65537, 0
  %vm3847 = vcmask 1041408
  %vm3848 = vcmask 1045508
  %vm3849 = vmor %vm3847, %vm3848
  %v3850 = vrot.slane %v3824, 6
  %v3851 = vrot.slane %v3850, 4
  %v3852 = vrot.slane %v3825, 6
  %v3853 = vsel %vm3849, %v3851, %v3852
  %v3854 = vrot.slane %v3852, 4
  %v3855 = vrot.slane %v3826, 6
  %v3856 = vsel %vm3849, %v3854, %v3855
  %v3857 = vrot.slane %v3855, 4
  %v3858 = vrot.slane %v3827, 6
  %v3859 = vsel %vm3849, %v3857, %v3858
  %v3860 = vrot.slane %v3858, 4
  %v3861 = vrot.slane %v3828, 6
  %v3862 = vsel %vm3849, %v3860, %v3861
  %v3863 = vrot.slane %v3861, 4
  %v3864 = vrot.slane %v3829, 6
  %v3865 = vsel %vm3849, %v3863, %v3864
  %v3866 = vrot.slane %v3864, 4
  %v3867 = vrot.slane %v3830, 6
  %v3868 = vsel %vm3849, %v3866, %v3867
  %v3869 = vrot.slane %v3867, 4
  %v3870 = vrot.slane %v3831, 6
  %v3871 = vsel %vm3849, %v3869, %v3870
  %v3872 = vrot.slane %v3870, 4
  %v3873 = vrot.slane %v3832, 6
  %v3874 = vsel %vm3849, %v3872, %v3873
  %v3875 = vrot.slane %v3873, 4
  %v3876 = vrot.slane %v3833, 6
  %v3877 = vsel %vm3849, %v3875, %v3876
  %v3878 = vrot.slane %v3876, 4
  %v3879 = vrot.slane %v3834, 6
  %v3880 = vsel %vm3849, %v3878, %v3879
  %v3881 = vrot.slane %v3879, 4
  %v3882 = vrot.slane %v3835, 6
  %v3883 = vsel %vm3849, %v3881, %v3882
  %v3884 = vrot.slane %v3882, 4
  %v3885 = vrot.slane %v3836, 6
  %v3886 = vsel %vm3849, %v3884, %v3885
  %v3887 = vrot.slane %v3885, 4
  %v3888 = vrot.slane %v3837, 6
  %v3889 = vsel %vm3849, %v3887, %v3888
  %v3890 = vrot.slane %v3888, 4
  %v3891 = vrot.slane %v3838, 6
  %v3892 = vsel %vm3849, %v3890, %v3891
  %v3893 = vrot.slane %v3891, 4
  %v3894 = vrot.slane %v3839, 6
  %v3895 = vsel %vm3849, %v3893, %v3894
  %v3896 = vrot.slane %v3894, 4
  %v3897 = vrot.slane %v3840, 6
  %v3898 = vsel %vm3849, %v3896, %v3897
  %v3899 = vrot.slane %v3897, 4
  %v3900 = vrot.slane %v3841, 6
  %v3901 = vsel %vm3849, %v3899, %v3900
  %v3902 = vrot.slane %v3900, 4
  %v3903 = vrot.slane %v3842, 6
  %v3904 = vsel %vm3849, %v3902, %v3903
  %v3905 = vrot.slane %v3903, 4
  %v3906 = vrot.slane %v3843, 6
  %v3907 = vsel %vm3849, %v3905, %v3906
  %v3908 = vrot.slane %v3906, 4
  %v3909 = vrot.slane %v3844, 6
  %v3910 = vsel %vm3849, %v3908, %v3909
  %v3911 = vrot.slane %v3909, 4
  %v3912 = vrot.slane %v3845, 6
  %v3913 = vsel %vm3849, %v3911, %v3912
  %v3914 = vrot.slane %v3912, 4
  %v3915 = vrot.slane %v3846, 6
  %v3916 = vsel %vm3849, %v3914, %v3915
  %v3917 = vrot.slane %v3915, 4
  %vm3918 = vcmp.ne.s16.totalorder %v3850, 0
  %vm3919 = vcmp.ne.s16.totalorder %v3853, 0
  %vm3920 = vcmp.ne.s16.totalorder %v3856, 0
  %vm3921 = vcmp.ne.s16.totalorder %v3859, 0
  %vm3922 = vcmp.ne.s16.totalorder %v3862, 0
  %vm3923 = vcmp.ne.s16.totalorder %v3865, 0
  %vm3924 = vcmp.ne.s16.totalorder %v3868, 0
  %vm3925 = vcmp.ne.s16.totalorder %v3871, 0
  %vm3926 = vcmp.ne.s16.totalorder %v3874, 0
  %vm3927 = vcmp.ne.s16.totalorder %v3877, 0
  %vm3928 = vcmp.ne.s16.totalorder %v3880, 0
  %vm3929 = vcmp.ne.s16.totalorder %v3883, 0
  %vm3930 = vcmp.ne.s16.totalorder %v3886, 0
  %vm3931 = vcmp.ne.s16.totalorder %v3889, 0
  %vm3932 = vcmp.ne.s16.totalorder %v3892, 0
  %vm3933 = vcmp.ne.s16.totalorder %v3895, 0
  %vm3934 = vcmp.ne.s16.totalorder %v3898, 0
  %vm3935 = vcmp.ne.s16.totalorder %v3901, 0
  %vm3936 = vcmp.ne.s16.totalorder %v3904, 0
  %vm3937 = vcmp.ne.s16.totalorder %v3907, 0
  %vm3938 = vcmp.ne.s16.totalorder %v3910, 0
  %vm3939 = vcmp.ne.s16.totalorder %v3913, 0
  %vm3940 = vcmp.ne.s16.totalorder %v3916, 0
  %vm3941 = vcmp.ne.s16.totalorder %v3917, 0
  %v3966 = vrot.slane %v3708, 7
  %v3967 = vrot.slane %v3966, 4
  %v3968 = vrot.slane %v3709, 7
  %v3969 = vsel %vm3523, %v3967, %v3968
  %v3970 = vrot.slane %v3968, 4
  %v3971 = vrot.slane %v3710, 7
  %v3972 = vsel %vm3523, %v3970, %v3971
  %v3973 = vrot.slane %v3971, 4
  %v3974 = vrot.slane %v3711, 7
  %v3975 = vsel %vm3523, %v3973, %v3974
  %v3976 = vrot.slane %v3974, 4
  %v3977 = vrot.slane %v3712, 7
  %v3978 = vsel %vm3523, %v3976, %v3977
  %v3979 = vrot.slane %v3977, 4
  %v3980 = vrot.slane %v3713, 7
  %v3981 = vsel %vm3523, %v3979, %v3980
  %v3982 = vrot.slane %v3980, 4
  %v3983 = vrot.slane %v3714, 7
  %v3984 = vsel %vm3523, %v3982, %v3983
  %v3985 = vrot.slane %v3983, 4
  %v3986 = vrot.slane %v3715, 7
  %v3987 = vsel %vm3523, %v3985, %v3986
  %v3988 = vrot.slane %v3986, 4
  %v3989 = vrot.slane %v3716, 7
  %v3990 = vsel %vm3523, %v3988, %v3989
  %v3991 = vrot.slane %v3989, 4
  %v3992 = vrot.slane %v3717, 7
  %v3993 = vsel %vm3523, %v3991, %v3992
  %v3994 = vrot.slane %v3992, 4
  %v3995 = vrot.slane %v3718, 7
  %v3996 = vsel %vm3523, %v3994, %v3995
  %v3997 = vrot.slane %v3995, 4
  %v3998 = vrot.slane %v3719, 7
  %v3999 = vsel %vm3523, %v3997, %v3998
  %v4000 = vrot.slane %v3998, 4
  %v4001 = vrot.slane %v3720, 7
  %v4002 = vsel %vm3523, %v4000, %v4001
  %v4003 = vrot.slane %v4001, 4
  %v4004 = vrot.slane %v3721, 7
  %v4005 = vsel %vm3523, %v4003, %v4004
  %v4006 = vrot.slane %v4004, 4
  %v4007 = vrot.slane %v3722, 7
  %v4008 = vsel %vm3523, %v4006, %v4007
  %v4009 = vrot.slane %v4007, 4
  %v4010 = vrot.slane %v3723, 7
  %v4011 = vsel %vm3523, %v4009, %v4010
  %v4012 = vrot.slane %v4010, 4
  %v4013 = vrot.slane %v3724, 7
  %v4014 = vsel %vm3523, %v4012, %v4013
  %v4015 = vrot.slane %v4013, 4
  %v4016 = vrot.slane %v3725, 7
  %v4017 = vsel %vm3523, %v4015, %v4016
  %v4018 = vrot.slane %v4016, 4
  %v4019 = vrot.slane %v3726, 7
  %v4020 = vsel %vm3523, %v4018, %v4019
  %v4021 = vrot.slane %v4019, 4
  %v4022 = vrot.slane %v3727, 7
  %v4023 = vsel %vm3523, %v4021, %v4022
  %v4024 = vrot.slane %v4022, 4
  %v4025 = vrot.slane %v3728, 7
  %v4026 = vsel %vm3523, %v4024, %v4025
  %v4027 = vrot.slane %v4025, 4
  %v4028 = vrot.slane %v3729, 7
  %v4029 = vsel %vm3523, %v4027, %v4028
  %v4030 = vrot.slane %v4028, 4
  %v4031 = vrot.slane %v3730, 7
  %v4032 = vsel %vm3523, %v4030, %v4031
  %v4033 = vrot.slane %v4031, 4
  %v4034 = vrot.slane %v3731, 7
  %v4035 = vsel %vm3523, %v4033, %v4034
  %v4060 = vsel %vm3918, %v3404, %v3966
  %v4061 = vsel %vm3919, %v3381, %v3969
  %v4062 = vsel %vm3920, %v3382, %v3972
  %v4063 = vsel %vm3921, %v3383, %v3975
  %v4064 = vsel %vm3922, %v3384, %v3978
  %v4065 = vsel %vm3923, %v3385, %v3981
  %v4066 = vsel %vm3924, %v3386, %v3984
  %v4067 = vsel %vm3925, %v3387, %v3987
  %v4068 = vsel %vm3926, %v3388, %v3990
  %v4069 = vsel %vm3927, %v3389, %v3993
  %v4070 = vsel %vm3928, %v3390, %v3996
  %v4071 = vsel %vm3929, %v3391, %v3999
  %v4072 = vsel %vm3930, %v3392, %v4002
  %v4073 = vsel %vm3931, %v3393, %v4005
  %v4074 = vsel %vm3932, %v3394, %v4008
  %v4075 = vsel %vm3933, %v3395, %v4011
  %v4076 = vsel %vm3934, %v3396, %v4014
  %v4077 = vsel %vm3935, %v3397, %v4017
  %v4078 = vsel %vm3936, %v3398, %v4020
  %v4079 = vsel %vm3937, %v3399, %v4023
  %v4080 = vsel %vm3938, %v3400, %v4026
  %v4081 = vsel %vm3939, %v3401, %v4029
  %v4082 = vsel %vm3940, %v3402, %v4032
  %v4083 = vsel %vm3941, %v3405, %v4035
  %vm4084 = vsmask.f32 3328
  %vm4085 = vsmask.f32 7440
  %vm4086 = vmor %vm4084, %vm4085
  %v4088 = vshrl.u32 %v4060, 16
  %v4090 = vrot.slane %v4088, 4
  %v4091 = vshll.u32 %v4060, 16
  %v4093 = vrot.slane %v4091, 5
  %v4094 = vor.u32 %v4090, %v4093
  %v4095 = vrot.slane %v4094, 4
  %v4097 = vshll.u32 %v4061, 16
  %v4099 = vrot.slane %v4097, 5
  %v4100 = vsel %vm4086, %v4095, %v4099
  %v4101 = vshrl.u32 %v4061, 16
  %v4103 = vrot.slane %v4101, 4
  %v4104 = vor.u32 %v4103, %v4099
  %v4105 = vrot.slane %v4104, 4
  %v4107 = vshll.u32 %v4062, 16
  %v4109 = vrot.slane %v4107, 5
  %v4110 = vsel %vm4086, %v4105, %v4109
  %v4111 = vshrl.u32 %v4062, 16
  %v4113 = vrot.slane %v4111, 4
  %v4114 = vor.u32 %v4113, %v4109
  %v4115 = vrot.slane %v4114, 4
  %v4117 = vshll.u32 %v4063, 16
  %v4119 = vrot.slane %v4117, 5
  %v4120 = vsel %vm4086, %v4115, %v4119
  %v4121 = vshrl.u32 %v4063, 16
  %v4123 = vrot.slane %v4121, 4
  %v4124 = vor.u32 %v4123, %v4119
  %v4125 = vrot.slane %v4124, 4
  %v4127 = vshll.u32 %v4064, 16
  %v4129 = vrot.slane %v4127, 5
  %v4130 = vsel %vm4086, %v4125, %v4129
  %v4131 = vshrl.u32 %v4064, 16
  %v4133 = vrot.slane %v4131, 4
  %v4134 = vor.u32 %v4133, %v4129
  %v4135 = vrot.slane %v4134, 4
  %v4137 = vshll.u32 %v4065, 16
  %v4139 = vrot.slane %v4137, 5
  %v4140 = vsel %vm4086, %v4135, %v4139
  %v4141 = vshrl.u32 %v4065, 16
  %v4143 = vrot.slane %v4141, 4
  %v4144 = vor.u32 %v4143, %v4139
  %v4145 = vrot.slane %v4144, 4
  %v4147 = vshll.u32 %v4066, 16
  %v4149 = vrot.slane %v4147, 5
  %v4150 = vsel %vm4086, %v4145, %v4149
  %v4151 = vshrl.u32 %v4066, 16
  %v4153 = vrot.slane %v4151, 4
  %v4154 = vor.u32 %v4153, %v4149
  %v4155 = vrot.slane %v4154, 4
  %v4157 = vshll.u32 %v4067, 16
  %v4159 = vrot.slane %v4157, 5
  %v4160 = vsel %vm4086, %v4155, %v4159
  %v4161 = vshrl.u32 %v4067, 16
  %v4163 = vrot.slane %v4161, 4
  %v4164 = vor.u32 %v4163, %v4159
  %v4165 = vrot.slane %v4164, 4
  %v4167 = vshll.u32 %v4068, 16
  %v4169 = vrot.slane %v4167, 5
  %v4170 = vsel %vm4086, %v4165, %v4169
  %v4171 = vshrl.u32 %v4068, 16
  %v4173 = vrot.slane %v4171, 4
  %v4174 = vor.u32 %v4173, %v4169
  %v4175 = vrot.slane %v4174, 4
  %v4177 = vshll.u32 %v4069, 16
  %v4179 = vrot.slane %v4177, 5
  %v4180 = vsel %vm4086, %v4175, %v4179
  %v4181 = vshrl.u32 %v4069, 16
  %v4183 = vrot.slane %v4181, 4
  %v4184 = vor.u32 %v4183, %v4179
  %v4185 = vrot.slane %v4184, 4
  %v4187 = vshll.u32 %v4070, 16
  %v4189 = vrot.slane %v4187, 5
  %v4190 = vsel %vm4086, %v4185, %v4189
  %v4191 = vshrl.u32 %v4070, 16
  %v4193 = vrot.slane %v4191, 4
  %v4194 = vor.u32 %v4193, %v4189
  %v4195 = vrot.slane %v4194, 4
  %v4197 = vshll.u32 %v4071, 16
  %v4199 = vrot.slane %v4197, 5
  %v4200 = vsel %vm4086, %v4195, %v4199
  %v4201 = vshrl.u32 %v4071, 16
  %v4203 = vrot.slane %v4201, 4
  %v4204 = vor.u32 %v4203, %v4199
  %v4205 = vrot.slane %v4204, 4
  %v4207 = vshll.u32 %v4072, 16
  %v4209 = vrot.slane %v4207, 5
  %v4210 = vsel %vm4086, %v4205, %v4209
  %v4211 = vshrl.u32 %v4072, 16
  %v4213 = vrot.slane %v4211, 4
  %v4214 = vor.u32 %v4213, %v4209
  %v4215 = vrot.slane %v4214, 4
  %v4217 = vshll.u32 %v4073, 16
  %v4219 = vrot.slane %v4217, 5
  %v4220 = vsel %vm4086, %v4215, %v4219
  %v4221 = vshrl.u32 %v4073, 16
  %v4223 = vrot.slane %v4221, 4
  %v4224 = vor.u32 %v4223, %v4219
  %v4225 = vrot.slane %v4224, 4
  %v4227 = vshll.u32 %v4074, 16
  %v4229 = vrot.slane %v4227, 5
  %v4230 = vsel %vm4086, %v4225, %v4229
  %v4231 = vshrl.u32 %v4074, 16
  %v4233 = vrot.slane %v4231, 4
  %v4234 = vor.u32 %v4233, %v4229
  %v4235 = vrot.slane %v4234, 4
  %v4237 = vshll.u32 %v4075, 16
  %v4239 = vrot.slane %v4237, 5
  %v4240 = vsel %vm4086, %v4235, %v4239
  %v4241 = vshrl.u32 %v4075, 16
  %v4243 = vrot.slane %v4241, 4
  %v4244 = vor.u32 %v4243, %v4239
  %v4245 = vrot.slane %v4244, 4
  %v4247 = vshll.u32 %v4076, 16
  %v4249 = vrot.slane %v4247, 5
  %v4250 = vsel %vm4086, %v4245, %v4249
  %v4251 = vshrl.u32 %v4076, 16
  %v4253 = vrot.slane %v4251, 4
  %v4254 = vor.u32 %v4253, %v4249
  %v4255 = vrot.slane %v4254, 4
  %v4257 = vshll.u32 %v4077, 16
  %v4259 = vrot.slane %v4257, 5
  %v4260 = vsel %vm4086, %v4255, %v4259
  %v4261 = vshrl.u32 %v4077, 16
  %v4263 = vrot.slane %v4261, 4
  %v4264 = vor.u32 %v4263, %v4259
  %v4265 = vrot.slane %v4264, 4
  %v4267 = vshll.u32 %v4078, 16
  %v4269 = vrot.slane %v4267, 5
  %v4270 = vsel %vm4086, %v4265, %v4269
  %v4271 = vshrl.u32 %v4078, 16
  %v4273 = vrot.slane %v4271, 4
  %v4274 = vor.u32 %v4273, %v4269
  %v4275 = vrot.slane %v4274, 4
  %v4277 = vshll.u32 %v4079, 16
  %v4279 = vrot.slane %v4277, 5
  %v4280 = vsel %vm4086, %v4275, %v4279
  %v4281 = vshrl.u32 %v4079, 16
  %v4283 = vrot.slane %v4281, 4
  %v4284 = vor.u32 %v4283, %v4279
  %v4285 = vrot.slane %v4284, 4
  %v4287 = vshll.u32 %v4080, 16
  %v4289 = vrot.slane %v4287, 5
  %v4290 = vsel %vm4086, %v4285, %v4289
  %v4291 = vshrl.u32 %v4080, 16
  %v4293 = vrot.slane %v4291, 4
  %v4294 = vor.u32 %v4293, %v4289
  %v4295 = vrot.slane %v4294, 4
  %v4297 = vshll.u32 %v4081, 16
  %v4299 = vrot.slane %v4297, 5
  %v4300 = vsel %vm4086, %v4295, %v4299
  %v4301 = vshrl.u32 %v4081, 16
  %v4303 = vrot.slane %v4301, 4
  %v4304 = vor.u32 %v4303, %v4299
  %v4305 = vrot.slane %v4304, 4
  %v4307 = vshll.u32 %v4082, 16
  %v4309 = vrot.slane %v4307, 5
  %v4310 = vsel %vm4086, %v4305, %v4309
  %v4311 = vshrl.u32 %v4082, 16
  %v4313 = vrot.slane %v4311, 4
  %v4314 = vor.u32 %v4313, %v4309
  %v4315 = vrot.slane %v4314, 4
  %v4317 = vshll.u32 %v4083, 16
  %v4319 = vrot.slane %v4317, 5
  %v4320 = vsel %vm4086, %v4315, %v4319
  %v4321 = vshrl.u32 %v4083, 16
  %v4323 = vrot.slane %v4321, 4
  %v4324 = vor.u32 %v4323, %v4319
  %v4325 = vrot.slane %v4324, 4
  %v4350 = vsel %vm2957, %v4100, %v3380
  %4351 = vst [vmem:[#allocation2 + $0x4] sm:$0xe] %v4350
  %4352 = vst.msk [vmem:[#allocation2 + $0x8] sm:$0xf] %vm2614, %v4110
  %4353 = vst.msk [vmem:[#allocation2 + $0xc] sm:$0xf] %vm2614, %v4120
  %4354 = vst.msk [vmem:[#allocation2 + $0x10] sm:$0xf] %vm2614, %v4130
  %4355 = vst.msk [vmem:[#allocation2 + $0x14] sm:$0xf] %vm2614, %v4140
  %4356 = vst.msk [vmem:[#allocation2 + $0x18] sm:$0xf] %vm2614, %v4150
  %4357 = vst.msk [vmem:[#allocation2 + $0x1c] sm:$0xf] %vm2614, %v4160
  %4358 = vst.msk [vmem:[#allocation2 + $0x20] sm:$0xf] %vm2614, %v4170
  %4359 = vst.msk [vmem:[#allocation2 + $0x24] sm:$0xf] %vm2614, %v4180
  %4360 = vst.msk [vmem:[#allocation2 + $0x28] sm:$0xf] %vm2614, %v4190
  %4361 = vst.msk [vmem:[#allocation2 + $0x2c] sm:$0xf] %vm2614, %v4200
  %4362 = vst.msk [vmem:[#allocation2 + $0x30] sm:$0xf] %vm2614, %v4210
  %4363 = vst.msk [vmem:[#allocation2 + $0x34] sm:$0xf] %vm2614, %v4220
  %4364 = vst.msk [vmem:[#allocation2 + $0x38] sm:$0xf] %vm2614, %v4230
  %4365 = vst.msk [vmem:[#allocation2 + $0x3c] sm:$0xf] %vm2614, %v4240
  %4366 = vst.msk [vmem:[#allocation2 + $0x40] sm:$0xf] %vm2614, %v4250
  %4367 = vst.msk [vmem:[#allocation2 + $0x44] sm:$0xf] %vm2614, %v4260
  %4368 = vst.msk [vmem:[#allocation2 + $0x48] sm:$0xf] %vm2614, %v4270
  %4369 = vst.msk [vmem:[#allocation2 + $0x4c] sm:$0xf] %vm2614, %v4280
  %4370 = vst.msk [vmem:[#allocation2 + $0x50] sm:$0xf] %vm2614, %v4290
  %4371 = vst.msk [vmem:[#allocation2 + $0x54] sm:$0xf] %vm2614, %v4300
  %4372 = vst.msk [vmem:[#allocation2 + $0x58] sm:$0xf] %vm2614, %v4310
  %4373 = vst.msk [vmem:[#allocation2 + $0x5c] sm:$0xf] %vm2614, %v4320
  %v4374 = vld [vmem:[#allocation2 + $0x60] sm:$0x3]
  %v4375 = vsel %vm2984, %v4325, %v4374
  %4376 = vst [vmem:[#allocation2 + $0x60] sm:$0x3] %v4375
  %v4377 = vld [vmem:[#allocation2 + $0x4] sm:$0x2]
  %v4379 = vshrl.u32 %v4377, 16
  %v4381 = vrot.slane %v4379, 4
  %v4382 = vrot.slane %v4381, 4
  %vm4384 = vcmask 189441
  %vm4385 = vmand %vm4384, %vm2699
  %v4386 = vsel %vm4385, %v4382, %v4377
  %4387 = vst [vmem:[#allocation2 + $0x4] sm:$0x2] %v4386
  %v4388 = vld [vmem:[#allocation2 + $0x4] sm:$0xe]
  %v4389 = vld [vmem:[#allocation2 + $0x8] sm:$0x3]
  %vm4392 = vcmask 1042432
  %vm4393 = vcmask 1046532
  %vm4394 = vmor %vm4392, %vm4393
  %v4395 = vrot.slane %v4388, 5
  %v4396 = vrot.slane %v4395, 4
  %v4397 = vrot.slane %v4389, 5
  %v4398 = vsel %vm4394, %v4396, %v4397
  %v4399 = vrot.slane %v4397, 4
  %4402 = vst.msk [vmem:[#allocation2] sm:$0xf] %vm2614, %v4398
  %vm4403 = vcmask 188416
  %4404 = vst.msk [vmem:[#allocation2 + $0x4] sm:$0x1] %vm4403, %v4399
  %v4405 = vld [vmem:[#allocation2 + $0x28] sm:$0xf]
  %v4406 = vld [vmem:[#allocation2 + $0x2c] sm:$0x1]
  %v4409 = vrot.slane %v4405, 7
  %v4410 = vrot.slane %v4409, 4
  %v4411 = vrot.slane %v4406, 7
  %v4412 = vsel %vm3523, %v4410, %v4411
  %vm4415 = vcmask 191489
  %4416 = vst.msk [vmem:[#allocation2 + $0x2c] sm:$0xe] %vm4415, %v4409
  %vm4417 = vcmask 189440
  %4418 = vst.msk [vmem:[#allocation2 + $0x30] sm:$0x3] %vm4417, %v4412
  %v4419 = vld [vmem:[#allocation2 + $0x34] sm:$0x8]
  %v4420 = vld [vmem:[#allocation2 + $0x38] sm:$0xf]
  %v4423 = vrot.slane %v4419, 5
  %v4424 = vrot.slane %v4423, 4
  %v4425 = vrot.slane %v4420, 5
  %v4426 = vsel %vm4394, %v4424, %v4425
  %v4427 = vrot.slane %v4425, 4
  %vm4430 = vcmask 191490
  %4431 = vst.msk [vmem:[#allocation2 + $0x30] sm:$0xc] %vm4430, %v4426
  %vm4432 = vcmask 190464
  %4433 = vst.msk [vmem:[#allocation2 + $0x34] sm:$0x7] %vm4432, %v4427
  %v4434 = vld [vmem:[#allocation2 + $0x58] sm:$0xc]
  %v4435 = vld [vmem:[#allocation2 + $0x5c] sm:$0x7]
  %v4438 = vrot.slane %v4434, 7
  %v4439 = vrot.slane %v4438, 4
  %v4440 = vrot.slane %v4435, 7
  %v4441 = vsel %vm3523, %v4439, %v4440
  %vm4444 = vcmask 191491
  %4445 = vst.msk [vmem:[#allocation2 + $0x5c] sm:$0x8] %vm4444, %v4438
  %4446 = vst.msk [vmem:[#allocation2 + $0x60] sm:$0xf] %vm2614, %v4441
  %v4447 = vld [vmem:[#allocation2] sm:$0xf]
  %v4448 = vld [vmem:[#allocation2 + $0x4] sm:$0xf]
  %v4449 = vld [vmem:[#allocation2 + $0x8] sm:$0xf]
  %v4450 = vld [vmem:[#allocation2 + $0xc] sm:$0xf]
  %v4451 = vld [vmem:[#allocation2 + $0x10] sm:$0xf]
  %v4452 = vld [vmem:[#allocation2 + $0x14] sm:$0xf]
  %v4453 = vld [vmem:[#allocation2 + $0x18] sm:$0xf]
  %v4454 = vld [vmem:[#allocation2 + $0x1c] sm:$0xf]
  %v4455 = vld [vmem:[#allocation2 + $0x20] sm:$0xf]
  %v4456 = vld [vmem:[#allocation2 + $0x24] sm:$0xf]
  %v4457 = vld [vmem:[#allocation2 + $0x28] sm:$0xf]
  %v4458 = vld [vmem:[#allocation2 + $0x2c] sm:$0xf]
  %v4459 = vld [vmem:[#allocation2 + $0x30] sm:$0xf]
  %v4460 = vld [vmem:[#allocation2 + $0x34] sm:$0xf]
  %v4461 = vld [vmem:[#allocation2 + $0x38] sm:$0xf]
  %v4462 = vld [vmem:[#allocation2 + $0x3c] sm:$0xf]
  %v4463 = vld [vmem:[#allocation2 + $0x40] sm:$0xf]
  %v4464 = vld [vmem:[#allocation2 + $0x44] sm:$0xf]
  %v4465 = vld [vmem:[#allocation2 + $0x48] sm:$0xf]
  %v4466 = vld [vmem:[#allocation2 + $0x4c] sm:$0xf]
  %v4467 = vld [vmem:[#allocation2 + $0x50] sm:$0xf]
  %v4468 = vld [vmem:[#allocation2 + $0x54] sm:$0xf]
  %v4469 = vld [vmem:[#allocation2 + $0x58] sm:$0xf]
  %v4470 = vld [vmem:[%s4] sm:$0xf]
  %v4471 = vld [vmem:[%s4 + $0x4] sm:$0xf]
  %v4472 = vld [vmem:[%s4 + $0x8] sm:$0xf]
  %v4473 = vld [vmem:[#allocation2 + $0x5c] sm:$0x1]
  %s4474 = scalar_lea.vmem %s4, 12
  %v4475 = vld [vmem:[%s4474] sm:$0xf]
  %v4476 = vld [vmem:[%s4474 + $0x4] sm:$0xf]
  %v4477 = vld [vmem:[%s4474 + $0x8] sm:$0xf]
  %v4502 = vunpack.c.l.b16 %v4447
  %v4503 = vunpack.c.l.b16 %v4448
  %v4504 = vunpack.c.l.b16 %v4449
  %v4505 = vunpack.c.l.b16 %v4450
  %v4506 = vunpack.c.l.b16 %v4451
  %v4507 = vunpack.c.l.b16 %v4452
  %v4508 = vunpack.c.l.b16 %v4453
  %v4509 = vunpack.c.l.b16 %v4454
  %v4510 = vunpack.c.l.b16 %v4455
  %v4511 = vunpack.c.l.b16 %v4456
  %v4512 = vunpack.c.l.b16 %v4457
  %v4513 = vunpack.c.l.b16 %v4458
  %v4514 = vunpack.c.l.b16 %v4459
  %v4515 = vunpack.c.l.b16 %v4460
  %v4516 = vunpack.c.l.b16 %v4461
  %v4517 = vunpack.c.l.b16 %v4462
  %v4518 = vunpack.c.l.b16 %v4463
  %v4519 = vunpack.c.l.b16 %v4464
  %v4520 = vunpack.c.l.b16 %v4465
  %v4521 = vunpack.c.l.b16 %v4466
  %v4522 = vunpack.c.l.b16 %v4467
  %v4523 = vunpack.c.l.b16 %v4468
  %v4524 = vunpack.c.l.b16 %v4469
  %v4525 = vunpack.c.l.b16 %v4473
  %v4526 = vpack.c.b16 %v4503, %v4502
  %v4527 = vpack.c.b16 %v4505, %v4504
  %v4528 = vpack.c.b16 %v4507, %v4506
  %v4529 = vpack.c.b16 %v4509, %v4508
  %v4530 = vpack.c.b16 %v4511, %v4510
  %v4531 = vpack.c.b16 %v4513, %v4512
  %v4532 = vpack.c.b16 %v4515, %v4514
  %v4533 = vpack.c.b16 %v4517, %v4516
  %v4534 = vpack.c.b16 %v4519, %v4518
  %v4535 = vpack.c.b16 %v4521, %v4520
  %v4536 = vpack.c.b16 %v4523, %v4522
  %v4537 = vpack.c.b16 %v4525, %v4524
  %v4539 = vshrl.u32 %v4526, 16
  %v4541 = vshll.u32 %v4526, 16
  %v4543 = vrot.slane %v4541, 1
  %v4544 = vor.u32 %v4539, %v4543
  %v4546 = vshll.u32 %v4527, 16
  %v4548 = vrot.slane %v4546, 1
  %v4549 = vsel %vm118, %v4544, %v4548
  %v4550 = vshrl.u32 %v4527, 16
  %v4552 = vor.u32 %v4550, %v4548
  %v4554 = vshll.u32 %v4528, 16
  %v4556 = vrot.slane %v4554, 1
  %v4557 = vsel %vm118, %v4552, %v4556
  %v4558 = vshrl.u32 %v4528, 16
  %v4560 = vor.u32 %v4558, %v4556
  %v4562 = vshll.u32 %v4529, 16
  %v4564 = vrot.slane %v4562, 1
  %v4565 = vsel %vm118, %v4560, %v4564
  %v4566 = vshrl.u32 %v4529, 16
  %v4568 = vor.u32 %v4566, %v4564
  %v4570 = vshll.u32 %v4530, 16
  %v4572 = vrot.slane %v4570, 1
  %v4573 = vsel %vm118, %v4568, %v4572
  %v4574 = vshrl.u32 %v4530, 16
  %v4576 = vor.u32 %v4574, %v4572
  %v4578 = vshll.u32 %v4531, 16
  %v4580 = vrot.slane %v4578, 1
  %v4581 = vsel %vm118, %v4576, %v4580
  %v4582 = vshrl.u32 %v4531, 16
  %v4584 = vor.u32 %v4582, %v4580
  %v4586 = vshll.u32 %v4532, 16
  %v4588 = vrot.slane %v4586, 1
  %v4589 = vsel %vm118, %v4584, %v4588
  %v4590 = vshrl.u32 %v4532, 16
  %v4592 = vor.u32 %v4590, %v4588
  %v4594 = vshll.u32 %v4533, 16
  %v4596 = vrot.slane %v4594, 1
  %v4597 = vsel %vm118, %v4592, %v4596
  %v4598 = vshrl.u32 %v4533, 16
  %v4600 = vor.u32 %v4598, %v4596
  %v4602 = vshll.u32 %v4534, 16
  %v4604 = vrot.slane %v4602, 1
  %v4605 = vsel %vm118, %v4600, %v4604
  %v4606 = vshrl.u32 %v4534, 16
  %v4608 = vor.u32 %v4606, %v4604
  %v4610 = vshll.u32 %v4535, 16
  %v4612 = vrot.slane %v4610, 1
  %v4613 = vsel %vm118, %v4608, %v4612
  %v4614 = vshrl.u32 %v4535, 16
  %v4616 = vor.u32 %v4614, %v4612
  %v4618 = vshll.u32 %v4536, 16
  %v4620 = vrot.slane %v4618, 1
  %v4621 = vsel %vm118, %v4616, %v4620
  %v4622 = vshrl.u32 %v4536, 16
  %v4624 = vor.u32 %v4622, %v4620
  %v4626 = vshll.u32 %v4537, 16
  %v4628 = vrot.slane %v4626, 1
  %v4629 = vsel %vm118, %v4624, %v4628
  %v4630 = vshrl.u32 %v4537, 16
  %v4632 = vor.u32 %v4630, %v4628
  %v4636 = vunpack.c.l.b16 %v4475
  %v4637 = vunpack.c.l.b16 %v4476
  %v4638 = vunpack.c.l.b16 %v4477
  %v4639 = vpack.c.b16 %v4637, %v4636
  %v4640 = vpack.c.b16 %v4638, %v4638
  %v4643 = vsel %vm223, %v4549, 0
  %v4646 = vsel %vm223, %v4557, 0
  %v4649 = vsel %vm223, %v4565, 0
  %v4652 = vsel %vm223, %v4573, 0
  %v4655 = vsel %vm223, %v4581, 0
  %v4658 = vsel %vm223, %v4589, 0
  %v4661 = vsel %vm223, %v4597, 0
  %v4664 = vsel %vm223, %v4605, 0
  %v4667 = vsel %vm223, %v4613, 0
  %v4670 = vsel %vm223, %v4621, 0
  %v4673 = vsel %vm223, %v4629, 0
  %v4676 = vsel %vm223, %v4632, 0
  %v4679 = vsel %vm260, %v4640, 0
  %4681 = vmatprep.subr.bf16.mxu0 0
  %4682 = vmatpush1.bf16.msra.mxu0 0
  %4683 = vmatprep.subr.bf16.mxu0 0
  %4684 = vmatpush1.bf16.msra.mxu0 0
  %4685 = vmatprep.subr.bf16.mxu0 0
  %4686 = vmatpush1.bf16.msra.mxu0 0
  %4687 = vmatprep.subr.bf16.mxu0 0
  %4688 = vmatpush1.bf16.msra.mxu0 0
  %4689 = vmatprep.subr.bf16.mxu0 0
  %4690 = vmatpush1.bf16.msra.mxu0 0
  %4691 = vmatprep.subr.bf16.mxu0 0
  %4692 = vmatpush1.bf16.msra.mxu0 0
  %4693 = vmatprep.subr.bf16.mxu0 0
  %4694 = vmatpush1.bf16.msra.mxu0 %v4679
  %4695 = vmatprep.subr.bf16.mxu0 0
  %4696 = vmatpush1.bf16.msra.mxu0 %v4639
  %4697 = vmatprep.subr.bf16.mxu0 0
  %4698 = vmatpush2.bf16.msra.mxu0 0
  %4699 = vmatprep.subr.bf16.mxu0 0
  %4700 = vmatpush2.bf16.msra.mxu0 0
  %4701 = vmatprep.subr.bf16.mxu0 0
  %4702 = vmatpush2.bf16.msra.mxu0 0
  %4703 = vmatprep.subr.bf16.mxu0 0
  %4704 = vmatpush2.bf16.msra.mxu0 0
  %4705 = vmatprep.subr.bf16.mxu0 0
  %4706 = vmatpush2.bf16.msra.mxu0 0
  %4707 = vmatprep.subr.bf16.mxu0 0
  %4708 = vmatpush2.bf16.msra.mxu0 0
  %4709 = vmatprep.subr.bf16.mxu0 0
  %4710 = vmatpush2.bf16.msra.mxu0 0
  %4711 = vmatprep.subr.bf16.mxu0 0
  %4712 = vmatpush2.bf16.msra.mxu0 0
  %4713 = vmatprep.mubr.bf16.mxu0 0
  %4714 = vmatmul.mubr.bf16.gmra.mxu0 %v4643
  %v4715 = vpop.f32.mrf.mxu0
  %v4716 = vadd.f32 0.0, %v4715
  %v4717 = vpop.f32.mrf.mxu0
  %v4718 = vpop.f32.mrf.mxu0
  %v4719 = vadd.f32 0.0, %v4718
  %v4720 = vpop.f32.mrf.mxu0
  %4721 = vmatprep.mubr.bf16.mxu0 0
  %4722 = vmatmul.mubr.bf16.gmra.mxu0 %v4646
  %v4723 = vpop.f32.mrf.mxu0
  %v4724 = vadd.f32 0.0, %v4723
  %v4725 = vpop.f32.mrf.mxu0
  %v4726 = vpop.f32.mrf.mxu0
  %v4727 = vadd.f32 0.0, %v4726
  %v4728 = vpop.f32.mrf.mxu0
  %4729 = vmatprep.mubr.bf16.mxu0 0
  %4730 = vmatmul.mubr.bf16.gmra.mxu0 %v4649
  %v4731 = vpop.f32.mrf.mxu0
  %v4732 = vadd.f32 0.0, %v4731
  %v4733 = vpop.f32.mrf.mxu0
  %v4734 = vpop.f32.mrf.mxu0
  %v4735 = vadd.f32 0.0, %v4734
  %v4736 = vpop.f32.mrf.mxu0
  %4737 = vmatprep.mubr.bf16.mxu0 0
  %4738 = vmatmul.mubr.bf16.gmra.mxu0 %v4652
  %v4739 = vpop.f32.mrf.mxu0
  %v4740 = vadd.f32 0.0, %v4739
  %v4741 = vpop.f32.mrf.mxu0
  %v4742 = vpop.f32.mrf.mxu0
  %v4743 = vadd.f32 0.0, %v4742
  %v4744 = vpop.f32.mrf.mxu0
  %4745 = vmatprep.mubr.bf16.mxu0 0
  %4746 = vmatmul.mubr.bf16.gmra.mxu0 %v4655
  %v4747 = vpop.f32.mrf.mxu0
  %v4748 = vadd.f32 0.0, %v4747
  %v4749 = vpop.f32.mrf.mxu0
  %v4750 = vpop.f32.mrf.mxu0
  %v4751 = vadd.f32 0.0, %v4750
  %v4752 = vpop.f32.mrf.mxu0
  %4753 = vmatprep.mubr.bf16.mxu0 0
  %4754 = vmatmul.mubr.bf16.gmra.mxu0 %v4658
  %v4755 = vpop.f32.mrf.mxu0
  %v4756 = vpop.f32.mrf.mxu0
  %v4757 = vpop.f32.mrf.mxu0
  %v4758 = vpop.f32.mrf.mxu0
  %4759 = vmatprep.mubr.bf16.mxu0 0
  %4760 = vmatmul.mubr.bf16.gmra.mxu0 %v4661
  %v4761 = vpop.f32.mrf.mxu0
  %v4762 = vadd.f32 0.0, %v4761
  %v4763 = vpop.f32.mrf.mxu0
  %v4764 = vpop.f32.mrf.mxu0
  %v4765 = vadd.f32 0.0, %v4764
  %v4766 = vpop.f32.mrf.mxu0
  %4767 = vmatprep.mubr.bf16.mxu0 0
  %4768 = vmatmul.mubr.bf16.gmra.mxu0 %v4664
  %v4769 = vpop.f32.mrf.mxu0
  %v4770 = vadd.f32 0.0, %v4769
  %v4771 = vpop.f32.mrf.mxu0
  %v4772 = vpop.f32.mrf.mxu0
  %v4773 = vadd.f32 0.0, %v4772
  %v4774 = vpop.f32.mrf.mxu0
  %4775 = vmatprep.mubr.bf16.mxu0 0
  %4776 = vmatmul.mubr.bf16.gmra.mxu0 %v4667
  %v4777 = vpop.f32.mrf.mxu0
  %v4778 = vadd.f32 0.0, %v4777
  %v4779 = vpop.f32.mrf.mxu0
  %v4780 = vpop.f32.mrf.mxu0
  %v4781 = vadd.f32 0.0, %v4780
  %v4782 = vpop.f32.mrf.mxu0
  %4783 = vmatprep.mubr.bf16.mxu0 0
  %4784 = vmatmul.mubr.bf16.gmra.mxu0 %v4670
  %v4785 = vpop.f32.mrf.mxu0
  %v4786 = vadd.f32 0.0, %v4785
  %v4787 = vpop.f32.mrf.mxu0
  %v4788 = vpop.f32.mrf.mxu0
  %v4789 = vadd.f32 0.0, %v4788
  %v4790 = vpop.f32.mrf.mxu0
  %4791 = vmatprep.mubr.bf16.mxu0 0
  %4792 = vmatmul.mubr.bf16.gmra.mxu0 %v4673
  %v4793 = vpop.f32.mrf.mxu0
  %v4794 = vadd.f32 0.0, %v4793
  %v4795 = vpop.f32.mrf.mxu0
  %v4796 = vpop.f32.mrf.mxu0
  %v4797 = vadd.f32 0.0, %v4796
  %v4798 = vpop.f32.mrf.mxu0
  %4799 = vmatprep.mubr.bf16.mxu0 0
  %4800 = vmatmul.mubr.bf16.gmra.mxu0 %v4676
  %v4801 = vpop.f32.mrf.mxu0
  %v4802 = vadd.f32 0.0, %v4801
  %v4803 = vpop.f32.mrf.mxu0
  %v4804 = vpop.f32.mrf.mxu0
  %v4805 = vpop.f32.mrf.mxu0
  %4806 = vdwg.mxu0
  %v4807 = vpack.c.b16 %v4524, %v4524
  %v4811 = vunpack.c.l.b16 %v4470
  %v4812 = vunpack.c.l.b16 %v4471
  %v4813 = vunpack.c.l.b16 %v4472
  %v4814 = vpack.c.b16 %v4812, %v4811
  %v4815 = vpack.c.b16 %v4813, %v4813
  %v4817 = vsel %vm223, %v4526, 0
  %v4819 = vsel %vm223, %v4527, 0
  %v4821 = vsel %vm223, %v4528, 0
  %v4823 = vsel %vm223, %v4529, 0
  %v4825 = vsel %vm223, %v4530, 0
  %v4827 = vsel %vm223, %v4531, 0
  %v4829 = vsel %vm223, %v4532, 0
  %v4831 = vsel %vm223, %v4533, 0
  %v4833 = vsel %vm223, %v4534, 0
  %v4835 = vsel %vm223, %v4535, 0
  %v4837 = vsel %vm223, %v4536, 0
  %v4840 = vsel %vm223, %v4807, 0
  %v4843 = vsel %vm260, %v4815, 0
  %4845 = vmatprep.subr.bf16.mxu0 0
  %4846 = vmatpush1.bf16.msra.mxu0 0
  %4847 = vmatprep.subr.bf16.mxu0 0
  %4848 = vmatpush1.bf16.msra.mxu0 0
  %4849 = vmatprep.subr.bf16.mxu0 0
  %4850 = vmatpush1.bf16.msra.mxu0 0
  %4851 = vmatprep.subr.bf16.mxu0 0
  %4852 = vmatpush1.bf16.msra.mxu0 0
  %4853 = vmatprep.subr.bf16.mxu0 0
  %4854 = vmatpush1.bf16.msra.mxu0 0
  %4855 = vmatprep.subr.bf16.mxu0 0
  %4856 = vmatpush1.bf16.msra.mxu0 0
  %4857 = vmatprep.subr.bf16.mxu0 0
  %4858 = vmatpush1.bf16.msra.mxu0 %v4843
  %4859 = vmatprep.subr.bf16.mxu0 0
  %4860 = vmatpush1.bf16.msra.mxu0 %v4814
  %4861 = vmatprep.subr.bf16.mxu0 0
  %4862 = vmatpush2.bf16.msra.mxu0 0
  %4863 = vmatprep.subr.bf16.mxu0 0
  %4864 = vmatpush2.bf16.msra.mxu0 0
  %4865 = vmatprep.subr.bf16.mxu0 0
  %4866 = vmatpush2.bf16.msra.mxu0 0
  %4867 = vmatprep.subr.bf16.mxu0 0
  %4868 = vmatpush2.bf16.msra.mxu0 0
  %4869 = vmatprep.subr.bf16.mxu0 0
  %4870 = vmatpush2.bf16.msra.mxu0 0
  %4871 = vmatprep.subr.bf16.mxu0 0
  %4872 = vmatpush2.bf16.msra.mxu0 0
  %4873 = vmatprep.subr.bf16.mxu0 0
  %4874 = vmatpush2.bf16.msra.mxu0 0
  %4875 = vmatprep.subr.bf16.mxu0 0
  %4876 = vmatpush2.bf16.msra.mxu0 0
  %4877 = vmatprep.mubr.bf16.mxu0 0
  %4878 = vmatmul.mubr.bf16.gmra.mxu0 %v4817
  %v4879 = vpop.f32.mrf.mxu0
  %v4880 = vadd.f32 %v4716, %v4879
  %v4881 = vpop.f32.mrf.mxu0
  %v4882 = vpop.f32.mrf.mxu0
  %v4883 = vadd.f32 %v4719, %v4882
  %v4884 = vpop.f32.mrf.mxu0
  %4885 = vmatprep.mubr.bf16.mxu0 0
  %4886 = vmatmul.mubr.bf16.gmra.mxu0 %v4819
  %v4887 = vpop.f32.mrf.mxu0
  %v4888 = vadd.f32 %v4724, %v4887
  %v4889 = vpop.f32.mrf.mxu0
  %v4890 = vpop.f32.mrf.mxu0
  %v4891 = vadd.f32 %v4727, %v4890
  %v4892 = vpop.f32.mrf.mxu0
  %4893 = vmatprep.mubr.bf16.mxu0 0
  %4894 = vmatmul.mubr.bf16.gmra.mxu0 %v4821
  %v4895 = vpop.f32.mrf.mxu0
  %v4896 = vadd.f32 %v4732, %v4895
  %v4897 = vpop.f32.mrf.mxu0
  %v4898 = vpop.f32.mrf.mxu0
  %v4899 = vadd.f32 %v4735, %v4898
  %v4900 = vpop.f32.mrf.mxu0
  %4901 = vmatprep.mubr.bf16.mxu0 0
  %4902 = vmatmul.mubr.bf16.gmra.mxu0 %v4823
  %v4903 = vpop.f32.mrf.mxu0
  %v4904 = vadd.f32 %v4740, %v4903
  %v4905 = vpop.f32.mrf.mxu0
  %v4906 = vpop.f32.mrf.mxu0
  %v4907 = vadd.f32 %v4743, %v4906
  %v4908 = vpop.f32.mrf.mxu0
  %4909 = vmatprep.mubr.bf16.mxu0 0
  %4910 = vmatmul.mubr.bf16.gmra.mxu0 %v4825
  %v4911 = vpop.f32.mrf.mxu0
  %v4912 = vadd.f32 %v4748, %v4911
  %v4913 = vpop.f32.mrf.mxu0
  %v4914 = vpop.f32.mrf.mxu0
  %v4915 = vadd.f32 %v4751, %v4914
  %v4916 = vpop.f32.mrf.mxu0
  %4917 = vmatprep.mubr.bf16.mxu0 0
  %4918 = vmatmul.mubr.bf16.gmra.mxu0 %v4827
  %v4919 = vpop.f32.mrf.mxu0
  %v4920 = vpop.f32.mrf.mxu0
  %v4921 = vpop.f32.mrf.mxu0
  %v4922 = vpop.f32.mrf.mxu0
  %4923 = vmatprep.mubr.bf16.mxu0 0
  %4924 = vmatmul.mubr.bf16.gmra.mxu0 %v4829
  %v4925 = vpop.f32.mrf.mxu0
  %v4926 = vadd.f32 %v4762, %v4925
  %v4927 = vpop.f32.mrf.mxu0
  %v4928 = vpop.f32.mrf.mxu0
  %v4929 = vadd.f32 %v4765, %v4928
  %v4930 = vpop.f32.mrf.mxu0
  %4931 = vmatprep.mubr.bf16.mxu0 0
  %4932 = vmatmul.mubr.bf16.gmra.mxu0 %v4831
  %v4933 = vpop.f32.mrf.mxu0
  %v4934 = vadd.f32 %v4770, %v4933
  %v4935 = vpop.f32.mrf.mxu0
  %v4936 = vpop.f32.mrf.mxu0
  %v4937 = vadd.f32 %v4773, %v4936
  %v4938 = vpop.f32.mrf.mxu0
  %4939 = vmatprep.mubr.bf16.mxu0 0
  %4940 = vmatmul.mubr.bf16.gmra.mxu0 %v4833
  %v4941 = vpop.f32.mrf.mxu0
  %v4942 = vadd.f32 %v4778, %v4941
  %v4943 = vpop.f32.mrf.mxu0
  %v4944 = vpop.f32.mrf.mxu0
  %v4945 = vadd.f32 %v4781, %v4944
  %v4946 = vpop.f32.mrf.mxu0
  %4947 = vmatprep.mubr.bf16.mxu0 0
  %4948 = vmatmul.mubr.bf16.gmra.mxu0 %v4835
  %v4949 = vpop.f32.mrf.mxu0
  %v4950 = vadd.f32 %v4786, %v4949
  %v4951 = vpop.f32.mrf.mxu0
  %v4952 = vpop.f32.mrf.mxu0
  %v4953 = vadd.f32 %v4789, %v4952
  %v4954 = vpop.f32.mrf.mxu0
  %4955 = vmatprep.mubr.bf16.mxu0 0
  %4956 = vmatmul.mubr.bf16.gmra.mxu0 %v4837
  %v4957 = vpop.f32.mrf.mxu0
  %v4958 = vadd.f32 %v4794, %v4957
  %v4959 = vpop.f32.mrf.mxu0
  %v4960 = vpop.f32.mrf.mxu0
  %v4961 = vadd.f32 %v4797, %v4960
  %v4962 = vpop.f32.mrf.mxu0
  %4963 = vmatprep.mubr.bf16.mxu0 0
  %4964 = vmatmul.mubr.bf16.gmra.mxu0 %v4840
  %v4965 = vpop.f32.mrf.mxu0
  %v4966 = vadd.f32 %v4802, %v4965
  %v4967 = vpop.f32.mrf.mxu0
  %v4968 = vpop.f32.mrf.mxu0
  %v4969 = vpop.f32.mrf.mxu0
  %4970 = vdwg.mxu0
  %v4971 = vld [vmem:[#allocation2] sm:$0xe]
  %s4972 = scalar_lea.vmem %s4, 24
  %v4973 = vld [vmem:[%s4972] sm:$0xf]
  %v4974 = vld [vmem:[%s4972 + $0x4] sm:$0xf]
  %v4975 = vld [vmem:[%s4972 + $0x8] sm:$0xf]
  %v4977 = vunpack.c.l.b16 %v4971
  %v4978 = vpack.c.b16 %v4503, %v4977
  %v4979 = vrot.slane %v4978, 1
  %v4980 = vrot.slane %v4527, 1
  %v4981 = vsel %vm566, %v4979, %v4980
  %v4982 = vrot.slane %v4528, 1
  %v4983 = vsel %vm566, %v4980, %v4982
  %v4984 = vrot.slane %v4529, 1
  %v4985 = vsel %vm566, %v4982, %v4984
  %v4986 = vrot.slane %v4530, 1
  %v4987 = vsel %vm566, %v4984, %v4986
  %v4988 = vrot.slane %v4531, 1
  %v4989 = vsel %vm566, %v4986, %v4988
  %v4990 = vrot.slane %v4532, 1
  %v4991 = vsel %vm566, %v4988, %v4990
  %v4992 = vrot.slane %v4533, 1
  %v4993 = vsel %vm566, %v4990, %v4992
  %v4994 = vrot.slane %v4534, 1
  %v4995 = vsel %vm566, %v4992, %v4994
  %v4996 = vrot.slane %v4535, 1
  %v4997 = vsel %vm566, %v4994, %v4996
  %v4998 = vrot.slane %v4536, 1
  %v4999 = vsel %vm566, %v4996, %v4998
  %v5000 = vrot.slane %v4537, 1
  %v5001 = vsel %vm566, %v4998, %v5000
  %v5005 = vunpack.c.l.b16 %v4973
  %v5006 = vunpack.c.l.b16 %v4974
  %v5007 = vunpack.c.l.b16 %v4975
  %v5008 = vpack.c.b16 %v5006, %v5005
  %v5009 = vpack.c.b16 %v5007, %v5007
  %v5012 = vsel %vm223, %v4981, 0
  %v5015 = vsel %vm223, %v4983, 0
  %v5018 = vsel %vm223, %v4985, 0
  %v5021 = vsel %vm223, %v4987, 0
  %v5024 = vsel %vm223, %v4989, 0
  %v5027 = vsel %vm223, %v4991, 0
  %v5030 = vsel %vm223, %v4993, 0
  %v5033 = vsel %vm223, %v4995, 0
  %v5036 = vsel %vm223, %v4997, 0
  %v5039 = vsel %vm223, %v4999, 0
  %v5042 = vsel %vm223, %v5001, 0
  %v5045 = vsel %vm223, %v5000, 0
  %v5048 = vsel %vm260, %v5009, 0
  %5050 = vmatprep.subr.bf16.mxu0 0
  %5051 = vmatpush1.bf16.msra.mxu0 0
  %5052 = vmatprep.subr.bf16.mxu0 0
  %5053 = vmatpush1.bf16.msra.mxu0 0
  %5054 = vmatprep.subr.bf16.mxu0 0
  %5055 = vmatpush1.bf16.msra.mxu0 0
  %5056 = vmatprep.subr.bf16.mxu0 0
  %5057 = vmatpush1.bf16.msra.mxu0 0
  %5058 = vmatprep.subr.bf16.mxu0 0
  %5059 = vmatpush1.bf16.msra.mxu0 0
  %5060 = vmatprep.subr.bf16.mxu0 0
  %5061 = vmatpush1.bf16.msra.mxu0 0
  %5062 = vmatprep.subr.bf16.mxu0 0
  %5063 = vmatpush1.bf16.msra.mxu0 %v5048
  %5064 = vmatprep.subr.bf16.mxu0 0
  %5065 = vmatpush1.bf16.msra.mxu0 %v5008
  %5066 = vmatprep.subr.bf16.mxu0 0
  %5067 = vmatpush2.bf16.msra.mxu0 0
  %5068 = vmatprep.subr.bf16.mxu0 0
  %5069 = vmatpush2.bf16.msra.mxu0 0
  %5070 = vmatprep.subr.bf16.mxu0 0
  %5071 = vmatpush2.bf16.msra.mxu0 0
  %5072 = vmatprep.subr.bf16.mxu0 0
  %5073 = vmatpush2.bf16.msra.mxu0 0
  %5074 = vmatprep.subr.bf16.mxu0 0
  %5075 = vmatpush2.bf16.msra.mxu0 0
  %5076 = vmatprep.subr.bf16.mxu0 0
  %5077 = vmatpush2.bf16.msra.mxu0 0
  %5078 = vmatprep.subr.bf16.mxu0 0
  %5079 = vmatpush2.bf16.msra.mxu0 0
  %5080 = vmatprep.subr.bf16.mxu0 0
  %5081 = vmatpush2.bf16.msra.mxu0 0
  %5082 = vmatprep.mubr.bf16.mxu0 0
  %5083 = vmatmul.mubr.bf16.gmra.mxu0 %v5012
  %v5084 = vpop.f32.mrf.mxu0
  %v5085 = vadd.f32 0.0, %v5084
  %v5086 = vpop.f32.mrf.mxu0
  %v5087 = vpop.f32.mrf.mxu0
  %v5088 = vadd.f32 0.0, %v5087
  %v5089 = vpop.f32.mrf.mxu0
  %5090 = vmatprep.mubr.bf16.mxu0 0
  %5091 = vmatmul.mubr.bf16.gmra.mxu0 %v5015
  %v5092 = vpop.f32.mrf.mxu0
  %v5093 = vadd.f32 0.0, %v5092
  %v5094 = vpop.f32.mrf.mxu0
  %v5095 = vpop.f32.mrf.mxu0
  %v5096 = vadd.f32 0.0, %v5095
  %v5097 = vpop.f32.mrf.mxu0
  %5098 = vmatprep.mubr.bf16.mxu0 0
  %5099 = vmatmul.mubr.bf16.gmra.mxu0 %v5018
  %v5100 = vpop.f32.mrf.mxu0
  %v5101 = vadd.f32 0.0, %v5100
  %v5102 = vpop.f32.mrf.mxu0
  %v5103 = vpop.f32.mrf.mxu0
  %v5104 = vadd.f32 0.0, %v5103
  %v5105 = vpop.f32.mrf.mxu0
  %5106 = vmatprep.mubr.bf16.mxu0 0
  %5107 = vmatmul.mubr.bf16.gmra.mxu0 %v5021
  %v5108 = vpop.f32.mrf.mxu0
  %v5109 = vadd.f32 0.0, %v5108
  %v5110 = vpop.f32.mrf.mxu0
  %v5111 = vpop.f32.mrf.mxu0
  %v5112 = vadd.f32 0.0, %v5111
  %v5113 = vpop.f32.mrf.mxu0
  %5114 = vmatprep.mubr.bf16.mxu0 0
  %5115 = vmatmul.mubr.bf16.gmra.mxu0 %v5024
  %v5116 = vpop.f32.mrf.mxu0
  %v5117 = vadd.f32 0.0, %v5116
  %v5118 = vpop.f32.mrf.mxu0
  %v5119 = vpop.f32.mrf.mxu0
  %v5120 = vadd.f32 0.0, %v5119
  %v5121 = vpop.f32.mrf.mxu0
  %5122 = vmatprep.mubr.bf16.mxu0 0
  %5123 = vmatmul.mubr.bf16.gmra.mxu0 %v5027
  %v5124 = vpop.f32.mrf.mxu0
  %v5125 = vpop.f32.mrf.mxu0
  %v5126 = vpop.f32.mrf.mxu0
  %v5127 = vpop.f32.mrf.mxu0
  %5128 = vmatprep.mubr.bf16.mxu0 0
  %5129 = vmatmul.mubr.bf16.gmra.mxu0 %v5030
  %v5130 = vpop.f32.mrf.mxu0
  %v5131 = vadd.f32 0.0, %v5130
  %v5132 = vpop.f32.mrf.mxu0
  %v5133 = vpop.f32.mrf.mxu0
  %v5134 = vadd.f32 0.0, %v5133
  %v5135 = vpop.f32.mrf.mxu0
  %5136 = vmatprep.mubr.bf16.mxu0 0
  %5137 = vmatmul.mubr.bf16.gmra.mxu0 %v5033
  %v5138 = vpop.f32.mrf.mxu0
  %v5139 = vadd.f32 0.0, %v5138
  %v5140 = vpop.f32.mrf.mxu0
  %v5141 = vpop.f32.mrf.mxu0
  %v5142 = vadd.f32 0.0, %v5141
  %v5143 = vpop.f32.mrf.mxu0
  %5144 = vmatprep.mubr.bf16.mxu0 0
  %5145 = vmatmul.mubr.bf16.gmra.mxu0 %v5036
  %v5146 = vpop.f32.mrf.mxu0
  %v5147 = vadd.f32 0.0, %v5146
  %v5148 = vpop.f32.mrf.mxu0
  %v5149 = vpop.f32.mrf.mxu0
  %v5150 = vadd.f32 0.0, %v5149
  %v5151 = vpop.f32.mrf.mxu0
  %5152 = vmatprep.mubr.bf16.mxu0 0
  %5153 = vmatmul.mubr.bf16.gmra.mxu0 %v5039
  %v5154 = vpop.f32.mrf.mxu0
  %v5155 = vadd.f32 0.0, %v5154
  %v5156 = vpop.f32.mrf.mxu0
  %v5157 = vpop.f32.mrf.mxu0
  %v5158 = vadd.f32 0.0, %v5157
  %v5159 = vpop.f32.mrf.mxu0
  %5160 = vmatprep.mubr.bf16.mxu0 0
  %5161 = vmatmul.mubr.bf16.gmra.mxu0 %v5042
  %v5162 = vpop.f32.mrf.mxu0
  %v5163 = vadd.f32 0.0, %v5162
  %v5164 = vpop.f32.mrf.mxu0
  %v5165 = vpop.f32.mrf.mxu0
  %v5166 = vadd.f32 0.0, %v5165
  %v5167 = vpop.f32.mrf.mxu0
  %5168 = vmatprep.mubr.bf16.mxu0 0
  %5169 = vmatmul.mubr.bf16.gmra.mxu0 %v5045
  %v5170 = vpop.f32.mrf.mxu0
  %v5171 = vadd.f32 0.0, %v5170
  %v5172 = vpop.f32.mrf.mxu0
  %v5173 = vpop.f32.mrf.mxu0
  %v5174 = vpop.f32.mrf.mxu0
  %5175 = vdwg.mxu0
  %v5176 = vadd.f32 %v4880, %v5085
  %v5177 = vadd.f32 %v4883, %v5088
  %v5178 = vadd.f32 %v4888, %v5093
  %v5179 = vadd.f32 %v4891, %v5096
  %v5180 = vadd.f32 %v4896, %v5101
  %v5181 = vadd.f32 %v4899, %v5104
  %v5182 = vadd.f32 %v4904, %v5109
  %v5183 = vadd.f32 %v4907, %v5112
  %v5184 = vadd.f32 %v4912, %v5117
  %v5185 = vadd.f32 %v4915, %v5120
  %v5186 = vadd.f32 %v4926, %v5131
  %v5187 = vadd.f32 %v4929, %v5134
  %v5188 = vadd.f32 %v4934, %v5139
  %v5189 = vadd.f32 %v4937, %v5142
  %v5190 = vadd.f32 %v4942, %v5147
  %v5191 = vadd.f32 %v4945, %v5150
  %v5192 = vadd.f32 %v4950, %v5155
  %v5193 = vadd.f32 %v4953, %v5158
  %v5194 = vadd.f32 %v4958, %v5163
  %v5195 = vadd.f32 %v4961, %v5166
  %v5196 = vadd.f32 %v4966, %v5171
  %v5197 = vld [vmem:[#allocation2 + $0x4] sm:$0xe]
  %v5198 = vld [vmem:[#allocation2 + $0x8] sm:$0xf]
  %v5199 = vld [vmem:[#allocation2 + $0xc] sm:$0xf]
  %v5200 = vld [vmem:[#allocation2 + $0x10] sm:$0xf]
  %v5201 = vld [vmem:[#allocation2 + $0x14] sm:$0xf]
  %v5202 = vld [vmem:[#allocation2 + $0x18] sm:$0xf]
  %v5203 = vld [vmem:[#allocation2 + $0x1c] sm:$0xf]
  %v5204 = vld [vmem:[#allocation2 + $0x20] sm:$0xf]
  %v5205 = vld [vmem:[#allocation2 + $0x24] sm:$0xf]
  %v5206 = vld [vmem:[#allocation2 + $0x28] sm:$0xf]
  %v5207 = vld [vmem:[#allocation2 + $0x2c] sm:$0xf]
  %v5208 = vld [vmem:[#allocation2 + $0x30] sm:$0xf]
  %v5209 = vld [vmem:[#allocation2 + $0x34] sm:$0xf]
  %v5210 = vld [vmem:[#allocation2 + $0x38] sm:$0xf]
  %v5211 = vld [vmem:[#allocation2 + $0x3c] sm:$0xf]
  %v5212 = vld [vmem:[#allocation2 + $0x40] sm:$0xf]
  %v5213 = vld [vmem:[#allocation2 + $0x44] sm:$0xf]
  %v5214 = vld [vmem:[#allocation2 + $0x48] sm:$0xf]
  %v5215 = vld [vmem:[#allocation2 + $0x4c] sm:$0xf]
  %v5216 = vld [vmem:[#allocation2 + $0x50] sm:$0xf]
  %v5217 = vld [vmem:[#allocation2 + $0x54] sm:$0xf]
  %v5218 = vld [vmem:[#allocation2 + $0x58] sm:$0xf]
  %v5219 = vld [vmem:[#allocation2 + $0x5c] sm:$0xf]
  %v5220 = vld [vmem:[#allocation2 + $0x60] sm:$0x1]
  %s5221 = scalar_lea.vmem %s4, 36
  %v5222 = vld [vmem:[%s5221] sm:$0xf]
  %v5223 = vld [vmem:[%s5221 + $0x4] sm:$0xf]
  %v5224 = vld [vmem:[%s5221 + $0x8] sm:$0xf]
  %v5249 = vunpack.c.l.b16 %v5197
  %v5250 = vunpack.c.l.b16 %v5198
  %v5251 = vunpack.c.l.b16 %v5199
  %v5252 = vunpack.c.l.b16 %v5200
  %v5253 = vunpack.c.l.b16 %v5201
  %v5254 = vunpack.c.l.b16 %v5202
  %v5255 = vunpack.c.l.b16 %v5203
  %v5256 = vunpack.c.l.b16 %v5204
  %v5257 = vunpack.c.l.b16 %v5205
  %v5258 = vunpack.c.l.b16 %v5206
  %v5259 = vunpack.c.l.b16 %v5207
  %v5260 = vunpack.c.l.b16 %v5208
  %v5261 = vunpack.c.l.b16 %v5209
  %v5262 = vunpack.c.l.b16 %v5210
  %v5263 = vunpack.c.l.b16 %v5211
  %v5264 = vunpack.c.l.b16 %v5212
  %v5265 = vunpack.c.l.b16 %v5213
  %v5266 = vunpack.c.l.b16 %v5214
  %v5267 = vunpack.c.l.b16 %v5215
  %v5268 = vunpack.c.l.b16 %v5216
  %v5269 = vunpack.c.l.b16 %v5217
  %v5270 = vunpack.c.l.b16 %v5218
  %v5271 = vunpack.c.l.b16 %v5219
  %v5272 = vunpack.c.l.b16 %v5220
  %v5273 = vpack.c.b16 %v5250, %v5249
  %v5274 = vpack.c.b16 %v5252, %v5251
  %v5275 = vpack.c.b16 %v5254, %v5253
  %v5276 = vpack.c.b16 %v5256, %v5255
  %v5277 = vpack.c.b16 %v5258, %v5257
  %v5278 = vpack.c.b16 %v5260, %v5259
  %v5279 = vpack.c.b16 %v5262, %v5261
  %v5280 = vpack.c.b16 %v5264, %v5263
  %v5281 = vpack.c.b16 %v5266, %v5265
  %v5282 = vpack.c.b16 %v5268, %v5267
  %v5283 = vpack.c.b16 %v5270, %v5269
  %v5284 = vpack.c.b16 %v5272, %v5271
  %v5285 = vrot.slane %v5273, 1
  %v5286 = vrot.slane %v5274, 1
  %v5287 = vsel %vm566, %v5285, %v5286
  %v5288 = vrot.slane %v5275, 1
  %v5289 = vsel %vm566, %v5286, %v5288
  %v5290 = vrot.slane %v5276, 1
  %v5291 = vsel %vm566, %v5288, %v5290
  %v5292 = vrot.slane %v5277, 1
  %v5293 = vsel %vm566, %v5290, %v5292
  %v5294 = vrot.slane %v5278, 1
  %v5295 = vsel %vm566, %v5292, %v5294
  %v5296 = vrot.slane %v5279, 1
  %v5297 = vsel %vm566, %v5294, %v5296
  %v5298 = vrot.slane %v5280, 1
  %v5299 = vsel %vm566, %v5296, %v5298
  %v5300 = vrot.slane %v5281, 1
  %v5301 = vsel %vm566, %v5298, %v5300
  %v5302 = vrot.slane %v5282, 1
  %v5303 = vsel %vm566, %v5300, %v5302
  %v5304 = vrot.slane %v5283, 1
  %v5305 = vsel %vm566, %v5302, %v5304
  %v5306 = vrot.slane %v5284, 1
  %v5307 = vsel %vm566, %v5304, %v5306
  %v5311 = vunpack.c.l.b16 %v5222
  %v5312 = vunpack.c.l.b16 %v5223
  %v5313 = vunpack.c.l.b16 %v5224
  %v5314 = vpack.c.b16 %v5312, %v5311
  %v5315 = vpack.c.b16 %v5313, %v5313
  %v5318 = vsel %vm223, %v5287, 0
  %v5321 = vsel %vm223, %v5289, 0
  %v5324 = vsel %vm223, %v5291, 0
  %v5327 = vsel %vm223, %v5293, 0
  %v5330 = vsel %vm223, %v5295, 0
  %v5333 = vsel %vm223, %v5297, 0
  %v5336 = vsel %vm223, %v5299, 0
  %v5339 = vsel %vm223, %v5301, 0
  %v5342 = vsel %vm223, %v5303, 0
  %v5345 = vsel %vm223, %v5305, 0
  %v5348 = vsel %vm223, %v5307, 0
  %v5351 = vsel %vm223, %v5306, 0
  %v5354 = vsel %vm260, %v5315, 0
  %5356 = vmatprep.subr.bf16.mxu0 0
  %5357 = vmatpush1.bf16.msra.mxu0 0
  %5358 = vmatprep.subr.bf16.mxu0 0
  %5359 = vmatpush1.bf16.msra.mxu0 0
  %5360 = vmatprep.subr.bf16.mxu0 0
  %5361 = vmatpush1.bf16.msra.mxu0 0
  %5362 = vmatprep.subr.bf16.mxu0 0
  %5363 = vmatpush1.bf16.msra.mxu0 0
  %5364 = vmatprep.subr.bf16.mxu0 0
  %5365 = vmatpush1.bf16.msra.mxu0 0
  %5366 = vmatprep.subr.bf16.mxu0 0
  %5367 = vmatpush1.bf16.msra.mxu0 0
  %5368 = vmatprep.subr.bf16.mxu0 0
  %5369 = vmatpush1.bf16.msra.mxu0 %v5354
  %5370 = vmatprep.subr.bf16.mxu0 0
  %5371 = vmatpush1.bf16.msra.mxu0 %v5314
  %5372 = vmatprep.subr.bf16.mxu0 0
  %5373 = vmatpush2.bf16.msra.mxu0 0
  %5374 = vmatprep.subr.bf16.mxu0 0
  %5375 = vmatpush2.bf16.msra.mxu0 0
  %5376 = vmatprep.subr.bf16.mxu0 0
  %5377 = vmatpush2.bf16.msra.mxu0 0
  %5378 = vmatprep.subr.bf16.mxu0 0
  %5379 = vmatpush2.bf16.msra.mxu0 0
  %5380 = vmatprep.subr.bf16.mxu0 0
  %5381 = vmatpush2.bf16.msra.mxu0 0
  %5382 = vmatprep.subr.bf16.mxu0 0
  %5383 = vmatpush2.bf16.msra.mxu0 0
  %5384 = vmatprep.subr.bf16.mxu0 0
  %5385 = vmatpush2.bf16.msra.mxu0 0
  %5386 = vmatprep.subr.bf16.mxu0 0
  %5387 = vmatpush2.bf16.msra.mxu0 0
  %5388 = vmatprep.mubr.bf16.mxu0 0
  %5389 = vmatmul.mubr.bf16.gmra.mxu0 %v5318
  %v5390 = vpop.f32.mrf.mxu0
  %v5391 = vadd.f32 0.0, %v5390
  %v5392 = vpop.f32.mrf.mxu0
  %v5393 = vpop.f32.mrf.mxu0
  %v5394 = vadd.f32 0.0, %v5393
  %v5395 = vpop.f32.mrf.mxu0
  %5396 = vmatprep.mubr.bf16.mxu0 0
  %5397 = vmatmul.mubr.bf16.gmra.mxu0 %v5321
  %v5398 = vpop.f32.mrf.mxu0
  %v5399 = vadd.f32 0.0, %v5398
  %v5400 = vpop.f32.mrf.mxu0
  %v5401 = vpop.f32.mrf.mxu0
  %v5402 = vadd.f32 0.0, %v5401
  %v5403 = vpop.f32.mrf.mxu0
  %5404 = vmatprep.mubr.bf16.mxu0 0
  %5405 = vmatmul.mubr.bf16.gmra.mxu0 %v5324
  %v5406 = vpop.f32.mrf.mxu0
  %v5407 = vadd.f32 0.0, %v5406
  %v5408 = vpop.f32.mrf.mxu0
  %v5409 = vpop.f32.mrf.mxu0
  %v5410 = vadd.f32 0.0, %v5409
  %v5411 = vpop.f32.mrf.mxu0
  %5412 = vmatprep.mubr.bf16.mxu0 0
  %5413 = vmatmul.mubr.bf16.gmra.mxu0 %v5327
  %v5414 = vpop.f32.mrf.mxu0
  %v5415 = vadd.f32 0.0, %v5414
  %v5416 = vpop.f32.mrf.mxu0
  %v5417 = vpop.f32.mrf.mxu0
  %v5418 = vadd.f32 0.0, %v5417
  %v5419 = vpop.f32.mrf.mxu0
  %5420 = vmatprep.mubr.bf16.mxu0 0
  %5421 = vmatmul.mubr.bf16.gmra.mxu0 %v5330
  %v5422 = vpop.f32.mrf.mxu0
  %v5423 = vadd.f32 0.0, %v5422
  %v5424 = vpop.f32.mrf.mxu0
  %v5425 = vpop.f32.mrf.mxu0
  %v5426 = vadd.f32 0.0, %v5425
  %v5427 = vpop.f32.mrf.mxu0
  %5428 = vmatprep.mubr.bf16.mxu0 0
  %5429 = vmatmul.mubr.bf16.gmra.mxu0 %v5333
  %v5430 = vpop.f32.mrf.mxu0
  %v5431 = vpop.f32.mrf.mxu0
  %v5432 = vpop.f32.mrf.mxu0
  %v5433 = vpop.f32.mrf.mxu0
  %5434 = vmatprep.mubr.bf16.mxu0 0
  %5435 = vmatmul.mubr.bf16.gmra.mxu0 %v5336
  %v5436 = vpop.f32.mrf.mxu0
  %v5437 = vadd.f32 0.0, %v5436
  %v5438 = vpop.f32.mrf.mxu0
  %v5439 = vpop.f32.mrf.mxu0
  %v5440 = vadd.f32 0.0, %v5439
  %v5441 = vpop.f32.mrf.mxu0
  %5442 = vmatprep.mubr.bf16.mxu0 0
  %5443 = vmatmul.mubr.bf16.gmra.mxu0 %v5339
  %v5444 = vpop.f32.mrf.mxu0
  %v5445 = vadd.f32 0.0, %v5444
  %v5446 = vpop.f32.mrf.mxu0
  %v5447 = vpop.f32.mrf.mxu0
  %v5448 = vadd.f32 0.0, %v5447
  %v5449 = vpop.f32.mrf.mxu0
  %5450 = vmatprep.mubr.bf16.mxu0 0
  %5451 = vmatmul.mubr.bf16.gmra.mxu0 %v5342
  %v5452 = vpop.f32.mrf.mxu0
  %v5453 = vadd.f32 0.0, %v5452
  %v5454 = vpop.f32.mrf.mxu0
  %v5455 = vpop.f32.mrf.mxu0
  %v5456 = vadd.f32 0.0, %v5455
  %v5457 = vpop.f32.mrf.mxu0
  %5458 = vmatprep.mubr.bf16.mxu0 0
  %5459 = vmatmul.mubr.bf16.gmra.mxu0 %v5345
  %v5460 = vpop.f32.mrf.mxu0
  %v5461 = vadd.f32 0.0, %v5460
  %v5462 = vpop.f32.mrf.mxu0
  %v5463 = vpop.f32.mrf.mxu0
  %v5464 = vadd.f32 0.0, %v5463
  %v5465 = vpop.f32.mrf.mxu0
  %5466 = vmatprep.mubr.bf16.mxu0 0
  %5467 = vmatmul.mubr.bf16.gmra.mxu0 %v5348
  %v5468 = vpop.f32.mrf.mxu0
  %v5469 = vadd.f32 0.0, %v5468
  %v5470 = vpop.f32.mrf.mxu0
  %v5471 = vpop.f32.mrf.mxu0
  %v5472 = vadd.f32 0.0, %v5471
  %v5473 = vpop.f32.mrf.mxu0
  %5474 = vmatprep.mubr.bf16.mxu0 0
  %5475 = vmatmul.mubr.bf16.gmra.mxu0 %v5351
  %v5476 = vpop.f32.mrf.mxu0
  %v5477 = vadd.f32 0.0, %v5476
  %v5478 = vpop.f32.mrf.mxu0
  %v5479 = vpop.f32.mrf.mxu0
  %v5480 = vpop.f32.mrf.mxu0
  %5481 = vdwg.mxu0
  %v5482 = vadd.f32 %v5176, %v5391
  %v5483 = vadd.f32 %v5177, %v5394
  %v5484 = vadd.f32 %v5178, %v5399
  %v5485 = vadd.f32 %v5179, %v5402
  %v5486 = vadd.f32 %v5180, %v5407
  %v5487 = vadd.f32 %v5181, %v5410
  %v5488 = vadd.f32 %v5182, %v5415
  %v5489 = vadd.f32 %v5183, %v5418
  %v5490 = vadd.f32 %v5184, %v5423
  %v5491 = vadd.f32 %v5185, %v5426
  %v5492 = vadd.f32 %v5186, %v5437
  %v5493 = vadd.f32 %v5187, %v5440
  %v5494 = vadd.f32 %v5188, %v5445
  %v5495 = vadd.f32 %v5189, %v5448
  %v5496 = vadd.f32 %v5190, %v5453
  %v5497 = vadd.f32 %v5191, %v5456
  %v5498 = vadd.f32 %v5192, %v5461
  %v5499 = vadd.f32 %v5193, %v5464
  %v5500 = vadd.f32 %v5194, %v5469
  %v5501 = vadd.f32 %v5195, %v5472
  %v5502 = vadd.f32 %v5196, %v5477
  %v5503 = vld [vmem:[#allocation2 + $0x60] sm:$0x3]
  %s5504 = scalar_lea.vmem %s4, 48
  %v5505 = vld [vmem:[%s5504] sm:$0xf]
  %v5506 = vld [vmem:[%s5504 + $0x4] sm:$0xf]
  %v5507 = vld [vmem:[%s5504 + $0x8] sm:$0xf]
  %v5509 = vunpack.c.l.b16 %v5503
  %v5510 = vpack.c.b16 %v5509, %v5271
  %v5512 = vshrl.u32 %v5273, 16
  %v5514 = vrot.slane %v5512, 1
  %v5515 = vshll.u32 %v5273, 16
  %v5517 = vrot.slane %v5515, 2
  %v5518 = vor.u32 %v5514, %v5517
  %v5520 = vshrl.u32 %v5274, 16
  %v5522 = vrot.slane %v5520, 1
  %v5523 = vshll.u32 %v5274, 16
  %v5525 = vrot.slane %v5523, 2
  %v5526 = vor.u32 %v5522, %v5525
  %v5527 = vsel %vm1107, %v5518, %v5526
  %v5529 = vshrl.u32 %v5275, 16
  %v5531 = vrot.slane %v5529, 1
  %v5532 = vshll.u32 %v5275, 16
  %v5534 = vrot.slane %v5532, 2
  %v5535 = vor.u32 %v5531, %v5534
  %v5536 = vsel %vm1107, %v5526, %v5535
  %v5538 = vshrl.u32 %v5276, 16
  %v5540 = vrot.slane %v5538, 1
  %v5541 = vshll.u32 %v5276, 16
  %v5543 = vrot.slane %v5541, 2
  %v5544 = vor.u32 %v5540, %v5543
  %v5545 = vsel %vm1107, %v5535, %v5544
  %v5547 = vshrl.u32 %v5277, 16
  %v5549 = vrot.slane %v5547, 1
  %v5550 = vshll.u32 %v5277, 16
  %v5552 = vrot.slane %v5550, 2
  %v5553 = vor.u32 %v5549, %v5552
  %v5554 = vsel %vm1107, %v5544, %v5553
  %v5556 = vshrl.u32 %v5278, 16
  %v5558 = vrot.slane %v5556, 1
  %v5559 = vshll.u32 %v5278, 16
  %v5561 = vrot.slane %v5559, 2
  %v5562 = vor.u32 %v5558, %v5561
  %v5563 = vsel %vm1107, %v5553, %v5562
  %v5565 = vshrl.u32 %v5279, 16
  %v5567 = vrot.slane %v5565, 1
  %v5568 = vshll.u32 %v5279, 16
  %v5570 = vrot.slane %v5568, 2
  %v5571 = vor.u32 %v5567, %v5570
  %v5572 = vsel %vm1107, %v5562, %v5571
  %v5574 = vshrl.u32 %v5280, 16
  %v5576 = vrot.slane %v5574, 1
  %v5577 = vshll.u32 %v5280, 16
  %v5579 = vrot.slane %v5577, 2
  %v5580 = vor.u32 %v5576, %v5579
  %v5581 = vsel %vm1107, %v5571, %v5580
  %v5583 = vshrl.u32 %v5281, 16
  %v5585 = vrot.slane %v5583, 1
  %v5586 = vshll.u32 %v5281, 16
  %v5588 = vrot.slane %v5586, 2
  %v5589 = vor.u32 %v5585, %v5588
  %v5590 = vsel %vm1107, %v5580, %v5589
  %v5592 = vshrl.u32 %v5282, 16
  %v5594 = vrot.slane %v5592, 1
  %v5595 = vshll.u32 %v5282, 16
  %v5597 = vrot.slane %v5595, 2
  %v5598 = vor.u32 %v5594, %v5597
  %v5599 = vsel %vm1107, %v5589, %v5598
  %v5601 = vshrl.u32 %v5283, 16
  %v5603 = vrot.slane %v5601, 1
  %v5604 = vshll.u32 %v5283, 16
  %v5606 = vrot.slane %v5604, 2
  %v5607 = vor.u32 %v5603, %v5606
  %v5608 = vsel %vm1107, %v5598, %v5607
  %v5610 = vshrl.u32 %v5510, 16
  %v5612 = vrot.slane %v5610, 1
  %v5613 = vshll.u32 %v5510, 16
  %v5615 = vrot.slane %v5613, 2
  %v5616 = vor.u32 %v5612, %v5615
  %v5617 = vsel %vm1107, %v5607, %v5616
  %v5621 = vunpack.c.l.b16 %v5505
  %v5622 = vunpack.c.l.b16 %v5506
  %v5623 = vunpack.c.l.b16 %v5507
  %v5624 = vpack.c.b16 %v5622, %v5621
  %v5625 = vpack.c.b16 %v5623, %v5623
  %v5628 = vsel %vm223, %v5527, 0
  %v5631 = vsel %vm223, %v5536, 0
  %v5634 = vsel %vm223, %v5545, 0
  %v5637 = vsel %vm223, %v5554, 0
  %v5640 = vsel %vm223, %v5563, 0
  %v5643 = vsel %vm223, %v5572, 0
  %v5646 = vsel %vm223, %v5581, 0
  %v5649 = vsel %vm223, %v5590, 0
  %v5652 = vsel %vm223, %v5599, 0
  %v5655 = vsel %vm223, %v5608, 0
  %v5658 = vsel %vm223, %v5617, 0
  %v5661 = vsel %vm223, %v5616, 0
  %v5664 = vsel %vm260, %v5625, 0
  %5666 = vmatprep.subr.bf16.mxu0 0
  %5667 = vmatpush1.bf16.msra.mxu0 0
  %5668 = vmatprep.subr.bf16.mxu0 0
  %5669 = vmatpush1.bf16.msra.mxu0 0
  %5670 = vmatprep.subr.bf16.mxu0 0
  %5671 = vmatpush1.bf16.msra.mxu0 0
  %5672 = vmatprep.subr.bf16.mxu0 0
  %5673 = vmatpush1.bf16.msra.mxu0 0
  %5674 = vmatprep.subr.bf16.mxu0 0
  %5675 = vmatpush1.bf16.msra.mxu0 0
  %5676 = vmatprep.subr.bf16.mxu0 0
  %5677 = vmatpush1.bf16.msra.mxu0 0
  %5678 = vmatprep.subr.bf16.mxu0 0
  %5679 = vmatpush1.bf16.msra.mxu0 %v5664
  %5680 = vmatprep.subr.bf16.mxu0 0
  %5681 = vmatpush1.bf16.msra.mxu0 %v5624
  %5682 = vmatprep.subr.bf16.mxu0 0
  %5683 = vmatpush2.bf16.msra.mxu0 0
  %5684 = vmatprep.subr.bf16.mxu0 0
  %5685 = vmatpush2.bf16.msra.mxu0 0
  %5686 = vmatprep.subr.bf16.mxu0 0
  %5687 = vmatpush2.bf16.msra.mxu0 0
  %5688 = vmatprep.subr.bf16.mxu0 0
  %5689 = vmatpush2.bf16.msra.mxu0 0
  %5690 = vmatprep.subr.bf16.mxu0 0
  %5691 = vmatpush2.bf16.msra.mxu0 0
  %5692 = vmatprep.subr.bf16.mxu0 0
  %5693 = vmatpush2.bf16.msra.mxu0 0
  %5694 = vmatprep.subr.bf16.mxu0 0
  %5695 = vmatpush2.bf16.msra.mxu0 0
  %5696 = vmatprep.subr.bf16.mxu0 0
  %5697 = vmatpush2.bf16.msra.mxu0 0
  %5698 = vmatprep.mubr.bf16.mxu0 0
  %5699 = vmatmul.mubr.bf16.gmra.mxu0 %v5628
  %v5700 = vpop.f32.mrf.mxu0
  %v5701 = vadd.f32 0.0, %v5700
  %v5702 = vpop.f32.mrf.mxu0
  %v5703 = vpop.f32.mrf.mxu0
  %v5704 = vadd.f32 0.0, %v5703
  %v5705 = vpop.f32.mrf.mxu0
  %5706 = vmatprep.mubr.bf16.mxu0 0
  %5707 = vmatmul.mubr.bf16.gmra.mxu0 %v5631
  %v5708 = vpop.f32.mrf.mxu0
  %v5709 = vadd.f32 0.0, %v5708
  %v5710 = vpop.f32.mrf.mxu0
  %v5711 = vpop.f32.mrf.mxu0
  %v5712 = vadd.f32 0.0, %v5711
  %v5713 = vpop.f32.mrf.mxu0
  %5714 = vmatprep.mubr.bf16.mxu0 0
  %5715 = vmatmul.mubr.bf16.gmra.mxu0 %v5634
  %v5716 = vpop.f32.mrf.mxu0
  %v5717 = vadd.f32 0.0, %v5716
  %v5718 = vpop.f32.mrf.mxu0
  %v5719 = vpop.f32.mrf.mxu0
  %v5720 = vadd.f32 0.0, %v5719
  %v5721 = vpop.f32.mrf.mxu0
  %5722 = vmatprep.mubr.bf16.mxu0 0
  %5723 = vmatmul.mubr.bf16.gmra.mxu0 %v5637
  %v5724 = vpop.f32.mrf.mxu0
  %v5725 = vadd.f32 0.0, %v5724
  %v5726 = vpop.f32.mrf.mxu0
  %v5727 = vpop.f32.mrf.mxu0
  %v5728 = vadd.f32 0.0, %v5727
  %v5729 = vpop.f32.mrf.mxu0
  %5730 = vmatprep.mubr.bf16.mxu0 0
  %5731 = vmatmul.mubr.bf16.gmra.mxu0 %v5640
  %v5732 = vpop.f32.mrf.mxu0
  %v5733 = vadd.f32 0.0, %v5732
  %v5734 = vpop.f32.mrf.mxu0
  %v5735 = vpop.f32.mrf.mxu0
  %v5736 = vadd.f32 0.0, %v5735
  %v5737 = vpop.f32.mrf.mxu0
  %5738 = vmatprep.mubr.bf16.mxu0 0
  %5739 = vmatmul.mubr.bf16.gmra.mxu0 %v5643
  %v5740 = vpop.f32.mrf.mxu0
  %v5741 = vpop.f32.mrf.mxu0
  %v5742 = vpop.f32.mrf.mxu0
  %v5743 = vpop.f32.mrf.mxu0
  %5744 = vmatprep.mubr.bf16.mxu0 0
  %5745 = vmatmul.mubr.bf16.gmra.mxu0 %v5646
  %v5746 = vpop.f32.mrf.mxu0
  %v5747 = vadd.f32 0.0, %v5746
  %v5748 = vpop.f32.mrf.mxu0
  %v5749 = vpop.f32.mrf.mxu0
  %v5750 = vadd.f32 0.0, %v5749
  %v5751 = vpop.f32.mrf.mxu0
  %5752 = vmatprep.mubr.bf16.mxu0 0
  %5753 = vmatmul.mubr.bf16.gmra.mxu0 %v5649
  %v5754 = vpop.f32.mrf.mxu0
  %v5755 = vadd.f32 0.0, %v5754
  %v5756 = vpop.f32.mrf.mxu0
  %v5757 = vpop.f32.mrf.mxu0
  %v5758 = vadd.f32 0.0, %v5757
  %v5759 = vpop.f32.mrf.mxu0
  %5760 = vmatprep.mubr.bf16.mxu0 0
  %5761 = vmatmul.mubr.bf16.gmra.mxu0 %v5652
  %v5762 = vpop.f32.mrf.mxu0
  %v5763 = vadd.f32 0.0, %v5762
  %v5764 = vpop.f32.mrf.mxu0
  %v5765 = vpop.f32.mrf.mxu0
  %v5766 = vadd.f32 0.0, %v5765
  %v5767 = vpop.f32.mrf.mxu0
  %5768 = vmatprep.mubr.bf16.mxu0 0
  %5769 = vmatmul.mubr.bf16.gmra.mxu0 %v5655
  %v5770 = vpop.f32.mrf.mxu0
  %v5771 = vadd.f32 0.0, %v5770
  %v5772 = vpop.f32.mrf.mxu0
  %v5773 = vpop.f32.mrf.mxu0
  %v5774 = vadd.f32 0.0, %v5773
  %v5775 = vpop.f32.mrf.mxu0
  %5776 = vmatprep.mubr.bf16.mxu0 0
  %5777 = vmatmul.mubr.bf16.gmra.mxu0 %v5658
  %v5778 = vpop.f32.mrf.mxu0
  %v5779 = vadd.f32 0.0, %v5778
  %v5780 = vpop.f32.mrf.mxu0
  %v5781 = vpop.f32.mrf.mxu0
  %v5782 = vadd.f32 0.0, %v5781
  %v5783 = vpop.f32.mrf.mxu0
  %5784 = vmatprep.mubr.bf16.mxu0 0
  %5785 = vmatmul.mubr.bf16.gmra.mxu0 %v5661
  %v5786 = vpop.f32.mrf.mxu0
  %v5787 = vadd.f32 0.0, %v5786
  %v5788 = vpop.f32.mrf.mxu0
  %v5789 = vpop.f32.mrf.mxu0
  %v5790 = vpop.f32.mrf.mxu0
  %5791 = vdwg.mxu0
  %v5792 = vadd.f32 %v5482, %v5701
  %v5793 = vadd.f32 %v5483, %v5704
  %v5794 = vadd.f32 %v5484, %v5709
  %v5795 = vadd.f32 %v5485, %v5712
  %v5796 = vadd.f32 %v5486, %v5717
  %v5797 = vadd.f32 %v5487, %v5720
  %v5798 = vadd.f32 %v5488, %v5725
  %v5799 = vadd.f32 %v5489, %v5728
  %v5800 = vadd.f32 %v5490, %v5733
  %v5801 = vadd.f32 %v5491, %v5736
  %v5802 = vadd.f32 %v5492, %v5747
  %v5803 = vadd.f32 %v5493, %v5750
  %v5804 = vadd.f32 %v5494, %v5755
  %v5805 = vadd.f32 %v5495, %v5758
  %v5806 = vadd.f32 %v5496, %v5763
  %v5807 = vadd.f32 %v5497, %v5766
  %v5808 = vadd.f32 %v5498, %v5771
  %v5809 = vadd.f32 %v5499, %v5774
  %v5810 = vadd.f32 %v5500, %v5779
  %v5811 = vadd.f32 %v5501, %v5782
  %v5812 = vadd.f32 %v5502, %v5787
  %v5813 = vld [vmem:[#allocation2 + $0x4] sm:$0xc]
  %s5814 = scalar_lea.vmem %s4, 60
  %v5815 = vld [vmem:[%s5814] sm:$0xf]
  %v5816 = vld [vmem:[%s5814 + $0x4] sm:$0xf]
  %v5817 = vld [vmem:[%s5814 + $0x8] sm:$0xf]
  %v5819 = vunpack.c.l.b16 %v5813
  %v5820 = vpack.c.b16 %v5250, %v5819
  %v5821 = vrot.slane %v5820, 2
  %v5822 = vrot.slane %v5274, 2
  %v5823 = vsel %vm1422, %v5821, %v5822
  %v5824 = vrot.slane %v5275, 2
  %v5825 = vsel %vm1422, %v5822, %v5824
  %v5826 = vrot.slane %v5276, 2
  %v5827 = vsel %vm1422, %v5824, %v5826
  %v5828 = vrot.slane %v5277, 2
  %v5829 = vsel %vm1422, %v5826, %v5828
  %v5830 = vrot.slane %v5278, 2
  %v5831 = vsel %vm1422, %v5828, %v5830
  %v5832 = vrot.slane %v5279, 2
  %v5833 = vsel %vm1422, %v5830, %v5832
  %v5834 = vrot.slane %v5280, 2
  %v5835 = vsel %vm1422, %v5832, %v5834
  %v5836 = vrot.slane %v5281, 2
  %v5837 = vsel %vm1422, %v5834, %v5836
  %v5838 = vrot.slane %v5282, 2
  %v5839 = vsel %vm1422, %v5836, %v5838
  %v5840 = vrot.slane %v5283, 2
  %v5841 = vsel %vm1422, %v5838, %v5840
  %v5842 = vrot.slane %v5510, 2
  %v5843 = vsel %vm1422, %v5840, %v5842
  %v5847 = vunpack.c.l.b16 %v5815
  %v5848 = vunpack.c.l.b16 %v5816
  %v5849 = vunpack.c.l.b16 %v5817
  %v5850 = vpack.c.b16 %v5848, %v5847
  %v5851 = vpack.c.b16 %v5849, %v5849
  %v5854 = vsel %vm223, %v5823, 0
  %v5857 = vsel %vm223, %v5825, 0
  %v5860 = vsel %vm223, %v5827, 0
  %v5863 = vsel %vm223, %v5829, 0
  %v5866 = vsel %vm223, %v5831, 0
  %v5869 = vsel %vm223, %v5833, 0
  %v5872 = vsel %vm223, %v5835, 0
  %v5875 = vsel %vm223, %v5837, 0
  %v5878 = vsel %vm223, %v5839, 0
  %v5881 = vsel %vm223, %v5841, 0
  %v5884 = vsel %vm223, %v5843, 0
  %v5887 = vsel %vm223, %v5842, 0
  %v5890 = vsel %vm260, %v5851, 0
  %5892 = vmatprep.subr.bf16.mxu0 0
  %5893 = vmatpush1.bf16.msra.mxu0 0
  %5894 = vmatprep.subr.bf16.mxu0 0
  %5895 = vmatpush1.bf16.msra.mxu0 0
  %5896 = vmatprep.subr.bf16.mxu0 0
  %5897 = vmatpush1.bf16.msra.mxu0 0
  %5898 = vmatprep.subr.bf16.mxu0 0
  %5899 = vmatpush1.bf16.msra.mxu0 0
  %5900 = vmatprep.subr.bf16.mxu0 0
  %5901 = vmatpush1.bf16.msra.mxu0 0
  %5902 = vmatprep.subr.bf16.mxu0 0
  %5903 = vmatpush1.bf16.msra.mxu0 0
  %5904 = vmatprep.subr.bf16.mxu0 0
  %5905 = vmatpush1.bf16.msra.mxu0 %v5890
  %5906 = vmatprep.subr.bf16.mxu0 0
  %5907 = vmatpush1.bf16.msra.mxu0 %v5850
  %5908 = vmatprep.subr.bf16.mxu0 0
  %5909 = vmatpush2.bf16.msra.mxu0 0
  %5910 = vmatprep.subr.bf16.mxu0 0
  %5911 = vmatpush2.bf16.msra.mxu0 0
  %5912 = vmatprep.subr.bf16.mxu0 0
  %5913 = vmatpush2.bf16.msra.mxu0 0
  %5914 = vmatprep.subr.bf16.mxu0 0
  %5915 = vmatpush2.bf16.msra.mxu0 0
  %5916 = vmatprep.subr.bf16.mxu0 0
  %5917 = vmatpush2.bf16.msra.mxu0 0
  %5918 = vmatprep.subr.bf16.mxu0 0
  %5919 = vmatpush2.bf16.msra.mxu0 0
  %5920 = vmatprep.subr.bf16.mxu0 0
  %5921 = vmatpush2.bf16.msra.mxu0 0
  %5922 = vmatprep.subr.bf16.mxu0 0
  %5923 = vmatpush2.bf16.msra.mxu0 0
  %5924 = vmatprep.mubr.bf16.mxu0 0
  %5925 = vmatmul.mubr.bf16.gmra.mxu0 %v5854
  %v5926 = vpop.f32.mrf.mxu0
  %v5927 = vadd.f32 0.0, %v5926
  %v5928 = vpop.f32.mrf.mxu0
  %v5929 = vpop.f32.mrf.mxu0
  %v5930 = vadd.f32 0.0, %v5929
  %v5931 = vpop.f32.mrf.mxu0
  %5932 = vmatprep.mubr.bf16.mxu0 0
  %5933 = vmatmul.mubr.bf16.gmra.mxu0 %v5857
  %v5934 = vpop.f32.mrf.mxu0
  %v5935 = vadd.f32 0.0, %v5934
  %v5936 = vpop.f32.mrf.mxu0
  %v5937 = vpop.f32.mrf.mxu0
  %v5938 = vadd.f32 0.0, %v5937
  %v5939 = vpop.f32.mrf.mxu0
  %5940 = vmatprep.mubr.bf16.mxu0 0
  %5941 = vmatmul.mubr.bf16.gmra.mxu0 %v5860
  %v5942 = vpop.f32.mrf.mxu0
  %v5943 = vadd.f32 0.0, %v5942
  %v5944 = vpop.f32.mrf.mxu0
  %v5945 = vpop.f32.mrf.mxu0
  %v5946 = vadd.f32 0.0, %v5945
  %v5947 = vpop.f32.mrf.mxu0
  %5948 = vmatprep.mubr.bf16.mxu0 0
  %5949 = vmatmul.mubr.bf16.gmra.mxu0 %v5863
  %v5950 = vpop.f32.mrf.mxu0
  %v5951 = vadd.f32 0.0, %v5950
  %v5952 = vpop.f32.mrf.mxu0
  %v5953 = vpop.f32.mrf.mxu0
  %v5954 = vadd.f32 0.0, %v5953
  %v5955 = vpop.f32.mrf.mxu0
  %5956 = vmatprep.mubr.bf16.mxu0 0
  %5957 = vmatmul.mubr.bf16.gmra.mxu0 %v5866
  %v5958 = vpop.f32.mrf.mxu0
  %v5959 = vadd.f32 0.0, %v5958
  %v5960 = vpop.f32.mrf.mxu0
  %v5961 = vpop.f32.mrf.mxu0
  %v5962 = vadd.f32 0.0, %v5961
  %v5963 = vpop.f32.mrf.mxu0
  %5964 = vmatprep.mubr.bf16.mxu0 0
  %5965 = vmatmul.mubr.bf16.gmra.mxu0 %v5869
  %v5966 = vpop.f32.mrf.mxu0
  %v5967 = vpop.f32.mrf.mxu0
  %v5968 = vpop.f32.mrf.mxu0
  %v5969 = vpop.f32.mrf.mxu0
  %5970 = vmatprep.mubr.bf16.mxu0 0
  %5971 = vmatmul.mubr.bf16.gmra.mxu0 %v5872
  %v5972 = vpop.f32.mrf.mxu0
  %v5973 = vadd.f32 0.0, %v5972
  %v5974 = vpop.f32.mrf.mxu0
  %v5975 = vpop.f32.mrf.mxu0
  %v5976 = vadd.f32 0.0, %v5975
  %v5977 = vpop.f32.mrf.mxu0
  %5978 = vmatprep.mubr.bf16.mxu0 0
  %5979 = vmatmul.mubr.bf16.gmra.mxu0 %v5875
  %v5980 = vpop.f32.mrf.mxu0
  %v5981 = vadd.f32 0.0, %v5980
  %v5982 = vpop.f32.mrf.mxu0
  %v5983 = vpop.f32.mrf.mxu0
  %v5984 = vadd.f32 0.0, %v5983
  %v5985 = vpop.f32.mrf.mxu0
  %5986 = vmatprep.mubr.bf16.mxu0 0
  %5987 = vmatmul.mubr.bf16.gmra.mxu0 %v5878
  %v5988 = vpop.f32.mrf.mxu0
  %v5989 = vadd.f32 0.0, %v5988
  %v5990 = vpop.f32.mrf.mxu0
  %v5991 = vpop.f32.mrf.mxu0
  %v5992 = vadd.f32 0.0, %v5991
  %v5993 = vpop.f32.mrf.mxu0
  %5994 = vmatprep.mubr.bf16.mxu0 0
  %5995 = vmatmul.mubr.bf16.gmra.mxu0 %v5881
  %v5996 = vpop.f32.mrf.mxu0
  %v5997 = vadd.f32 0.0, %v5996
  %v5998 = vpop.f32.mrf.mxu0
  %v5999 = vpop.f32.mrf.mxu0
  %v6000 = vadd.f32 0.0, %v5999
  %v6001 = vpop.f32.mrf.mxu0
  %6002 = vmatprep.mubr.bf16.mxu0 0
  %6003 = vmatmul.mubr.bf16.gmra.mxu0 %v5884
  %v6004 = vpop.f32.mrf.mxu0
  %v6005 = vadd.f32 0.0, %v6004
  %v6006 = vpop.f32.mrf.mxu0
  %v6007 = vpop.f32.mrf.mxu0
  %v6008 = vadd.f32 0.0, %v6007
  %v6009 = vpop.f32.mrf.mxu0
  %6010 = vmatprep.mubr.bf16.mxu0 0
  %6011 = vmatmul.mubr.bf16.gmra.mxu0 %v5887
  %v6012 = vpop.f32.mrf.mxu0
  %v6013 = vadd.f32 0.0, %v6012
  %v6014 = vpop.f32.mrf.mxu0
  %v6015 = vpop.f32.mrf.mxu0
  %v6016 = vpop.f32.mrf.mxu0
  %6017 = vdwg.mxu0
  %v6018 = vadd.f32 %v5792, %v5927
  %v6019 = vadd.f32 %v5793, %v5930
  %v6020 = vadd.f32 %v5794, %v5935
  %v6021 = vadd.f32 %v5795, %v5938
  %v6022 = vadd.f32 %v5796, %v5943
  %v6023 = vadd.f32 %v5797, %v5946
  %v6024 = vadd.f32 %v5798, %v5951
  %v6025 = vadd.f32 %v5799, %v5954
  %v6026 = vadd.f32 %v5800, %v5959
  %v6027 = vadd.f32 %v5801, %v5962
  %v6028 = vadd.f32 %v5802, %v5973
  %v6029 = vadd.f32 %v5803, %v5976
  %v6030 = vadd.f32 %v5804, %v5981
  %v6031 = vadd.f32 %v5805, %v5984
  %v6032 = vadd.f32 %v5806, %v5989
  %v6033 = vadd.f32 %v5807, %v5992
  %v6034 = vadd.f32 %v5808, %v5997
  %v6035 = vadd.f32 %v5809, %v6000
  %v6036 = vadd.f32 %v5810, %v6005
  %v6037 = vadd.f32 %v5811, %v6008
  %v6038 = vadd.f32 %v5812, %v6013
  %v6039 = vld [vmem:[#allocation2 + $0x8] sm:$0xc]
  %v6040 = vld [vmem:[#allocation2 + $0xc] sm:$0xf]
  %v6041 = vld [vmem:[#allocation2 + $0x10] sm:$0xf]
  %v6042 = vld [vmem:[#allocation2 + $0x14] sm:$0xf]
  %v6043 = vld [vmem:[#allocation2 + $0x18] sm:$0xf]
  %v6044 = vld [vmem:[#allocation2 + $0x1c] sm:$0xf]
  %v6045 = vld [vmem:[#allocation2 + $0x20] sm:$0xf]
  %v6046 = vld [vmem:[#allocation2 + $0x24] sm:$0xf]
  %v6047 = vld [vmem:[#allocation2 + $0x28] sm:$0xf]
  %v6048 = vld [vmem:[#allocation2 + $0x2c] sm:$0xf]
  %v6049 = vld [vmem:[#allocation2 + $0x30] sm:$0xf]
  %v6050 = vld [vmem:[#allocation2 + $0x34] sm:$0xf]
  %v6051 = vld [vmem:[#allocation2 + $0x38] sm:$0xf]
  %v6052 = vld [vmem:[#allocation2 + $0x3c] sm:$0xf]
  %v6053 = vld [vmem:[#allocation2 + $0x40] sm:$0xf]
  %v6054 = vld [vmem:[#allocation2 + $0x44] sm:$0xf]
  %v6055 = vld [vmem:[#allocation2 + $0x48] sm:$0xf]
  %v6056 = vld [vmem:[#allocation2 + $0x4c] sm:$0xf]
  %v6057 = vld [vmem:[#allocation2 + $0x50] sm:$0xf]
  %v6058 = vld [vmem:[#allocation2 + $0x54] sm:$0xf]
  %v6059 = vld [vmem:[#allocation2 + $0x58] sm:$0xf]
  %v6060 = vld [vmem:[#allocation2 + $0x5c] sm:$0xf]
  %v6061 = vld [vmem:[#allocation2 + $0x60] sm:$0xf]
  %v6062 = vld [vmem:[#allocation2 + $0x64] sm:$0x3]
  %s6063 = scalar_lea.vmem %s4, 72
  %v6064 = vld [vmem:[%s6063] sm:$0xf]
  %v6065 = vld [vmem:[%s6063 + $0x4] sm:$0xf]
  %v6066 = vld [vmem:[%s6063 + $0x8] sm:$0xf]
  %v6091 = vunpack.c.l.b16 %v6039
  %v6092 = vunpack.c.l.b16 %v6040
  %v6093 = vunpack.c.l.b16 %v6041
  %v6094 = vunpack.c.l.b16 %v6042
  %v6095 = vunpack.c.l.b16 %v6043
  %v6096 = vunpack.c.l.b16 %v6044
  %v6097 = vunpack.c.l.b16 %v6045
  %v6098 = vunpack.c.l.b16 %v6046
  %v6099 = vunpack.c.l.b16 %v6047
  %v6100 = vunpack.c.l.b16 %v6048
  %v6101 = vunpack.c.l.b16 %v6049
  %v6102 = vunpack.c.l.b16 %v6050
  %v6103 = vunpack.c.l.b16 %v6051
  %v6104 = vunpack.c.l.b16 %v6052
  %v6105 = vunpack.c.l.b16 %v6053
  %v6106 = vunpack.c.l.b16 %v6054
  %v6107 = vunpack.c.l.b16 %v6055
  %v6108 = vunpack.c.l.b16 %v6056
  %v6109 = vunpack.c.l.b16 %v6057
  %v6110 = vunpack.c.l.b16 %v6058
  %v6111 = vunpack.c.l.b16 %v6059
  %v6112 = vunpack.c.l.b16 %v6060
  %v6113 = vunpack.c.l.b16 %v6061
  %v6114 = vunpack.c.l.b16 %v6062
  %v6115 = vpack.c.b16 %v6092, %v6091
  %v6116 = vpack.c.b16 %v6094, %v6093
  %v6117 = vpack.c.b16 %v6096, %v6095
  %v6118 = vpack.c.b16 %v6098, %v6097
  %v6119 = vpack.c.b16 %v6100, %v6099
  %v6120 = vpack.c.b16 %v6102, %v6101
  %v6121 = vpack.c.b16 %v6104, %v6103
  %v6122 = vpack.c.b16 %v6106, %v6105
  %v6123 = vpack.c.b16 %v6108, %v6107
  %v6124 = vpack.c.b16 %v6110, %v6109
  %v6125 = vpack.c.b16 %v6112, %v6111
  %v6126 = vpack.c.b16 %v6114, %v6113
  %v6127 = vrot.slane %v6115, 2
  %v6128 = vrot.slane %v6116, 2
  %v6129 = vsel %vm1422, %v6127, %v6128
  %v6130 = vrot.slane %v6117, 2
  %v6131 = vsel %vm1422, %v6128, %v6130
  %v6132 = vrot.slane %v6118, 2
  %v6133 = vsel %vm1422, %v6130, %v6132
  %v6134 = vrot.slane %v6119, 2
  %v6135 = vsel %vm1422, %v6132, %v6134
  %v6136 = vrot.slane %v6120, 2
  %v6137 = vsel %vm1422, %v6134, %v6136
  %v6138 = vrot.slane %v6121, 2
  %v6139 = vsel %vm1422, %v6136, %v6138
  %v6140 = vrot.slane %v6122, 2
  %v6141 = vsel %vm1422, %v6138, %v6140
  %v6142 = vrot.slane %v6123, 2
  %v6143 = vsel %vm1422, %v6140, %v6142
  %v6144 = vrot.slane %v6124, 2
  %v6145 = vsel %vm1422, %v6142, %v6144
  %v6146 = vrot.slane %v6125, 2
  %v6147 = vsel %vm1422, %v6144, %v6146
  %v6148 = vrot.slane %v6126, 2
  %v6149 = vsel %vm1422, %v6146, %v6148
  %v6153 = vunpack.c.l.b16 %v6064
  %v6154 = vunpack.c.l.b16 %v6065
  %v6155 = vunpack.c.l.b16 %v6066
  %v6156 = vpack.c.b16 %v6154, %v6153
  %v6157 = vpack.c.b16 %v6155, %v6155
  %v6160 = vsel %vm223, %v6129, 0
  %v6163 = vsel %vm223, %v6131, 0
  %v6166 = vsel %vm223, %v6133, 0
  %v6169 = vsel %vm223, %v6135, 0
  %v6172 = vsel %vm223, %v6137, 0
  %v6175 = vsel %vm223, %v6139, 0
  %v6178 = vsel %vm223, %v6141, 0
  %v6181 = vsel %vm223, %v6143, 0
  %v6184 = vsel %vm223, %v6145, 0
  %v6187 = vsel %vm223, %v6147, 0
  %v6190 = vsel %vm223, %v6149, 0
  %v6193 = vsel %vm223, %v6148, 0
  %v6196 = vsel %vm260, %v6157, 0
  %6198 = vmatprep.subr.bf16.mxu0 0
  %6199 = vmatpush1.bf16.msra.mxu0 0
  %6200 = vmatprep.subr.bf16.mxu0 0
  %6201 = vmatpush1.bf16.msra.mxu0 0
  %6202 = vmatprep.subr.bf16.mxu0 0
  %6203 = vmatpush1.bf16.msra.mxu0 0
  %6204 = vmatprep.subr.bf16.mxu0 0
  %6205 = vmatpush1.bf16.msra.mxu0 0
  %6206 = vmatprep.subr.bf16.mxu0 0
  %6207 = vmatpush1.bf16.msra.mxu0 0
  %6208 = vmatprep.subr.bf16.mxu0 0
  %6209 = vmatpush1.bf16.msra.mxu0 0
  %6210 = vmatprep.subr.bf16.mxu0 0
  %6211 = vmatpush1.bf16.msra.mxu0 %v6196
  %6212 = vmatprep.subr.bf16.mxu0 0
  %6213 = vmatpush1.bf16.msra.mxu0 %v6156
  %6214 = vmatprep.subr.bf16.mxu0 0
  %6215 = vmatpush2.bf16.msra.mxu0 0
  %6216 = vmatprep.subr.bf16.mxu0 0
  %6217 = vmatpush2.bf16.msra.mxu0 0
  %6218 = vmatprep.subr.bf16.mxu0 0
  %6219 = vmatpush2.bf16.msra.mxu0 0
  %6220 = vmatprep.subr.bf16.mxu0 0
  %6221 = vmatpush2.bf16.msra.mxu0 0
  %6222 = vmatprep.subr.bf16.mxu0 0
  %6223 = vmatpush2.bf16.msra.mxu0 0
  %6224 = vmatprep.subr.bf16.mxu0 0
  %6225 = vmatpush2.bf16.msra.mxu0 0
  %6226 = vmatprep.subr.bf16.mxu0 0
  %6227 = vmatpush2.bf16.msra.mxu0 0
  %6228 = vmatprep.subr.bf16.mxu0 0
  %6229 = vmatpush2.bf16.msra.mxu0 0
  %6230 = vmatprep.mubr.bf16.mxu0 0
  %6231 = vmatmul.mubr.bf16.gmra.mxu0 %v6160
  %v6232 = vpop.f32.mrf.mxu0
  %v6233 = vadd.f32 0.0, %v6232
  %v6234 = vpop.f32.mrf.mxu0
  %v6235 = vpop.f32.mrf.mxu0
  %v6236 = vadd.f32 0.0, %v6235
  %v6237 = vpop.f32.mrf.mxu0
  %6238 = vmatprep.mubr.bf16.mxu0 0
  %6239 = vmatmul.mubr.bf16.gmra.mxu0 %v6163
  %v6240 = vpop.f32.mrf.mxu0
  %v6241 = vadd.f32 0.0, %v6240
  %v6242 = vpop.f32.mrf.mxu0
  %v6243 = vpop.f32.mrf.mxu0
  %v6244 = vadd.f32 0.0, %v6243
  %v6245 = vpop.f32.mrf.mxu0
  %6246 = vmatprep.mubr.bf16.mxu0 0
  %6247 = vmatmul.mubr.bf16.gmra.mxu0 %v6166
  %v6248 = vpop.f32.mrf.mxu0
  %v6249 = vadd.f32 0.0, %v6248
  %v6250 = vpop.f32.mrf.mxu0
  %v6251 = vpop.f32.mrf.mxu0
  %v6252 = vadd.f32 0.0, %v6251
  %v6253 = vpop.f32.mrf.mxu0
  %6254 = vmatprep.mubr.bf16.mxu0 0
  %6255 = vmatmul.mubr.bf16.gmra.mxu0 %v6169
  %v6256 = vpop.f32.mrf.mxu0
  %v6257 = vadd.f32 0.0, %v6256
  %v6258 = vpop.f32.mrf.mxu0
  %v6259 = vpop.f32.mrf.mxu0
  %v6260 = vadd.f32 0.0, %v6259
  %v6261 = vpop.f32.mrf.mxu0
  %6262 = vmatprep.mubr.bf16.mxu0 0
  %6263 = vmatmul.mubr.bf16.gmra.mxu0 %v6172
  %v6264 = vpop.f32.mrf.mxu0
  %v6265 = vadd.f32 0.0, %v6264
  %v6266 = vpop.f32.mrf.mxu0
  %v6267 = vpop.f32.mrf.mxu0
  %v6268 = vadd.f32 0.0, %v6267
  %v6269 = vpop.f32.mrf.mxu0
  %6270 = vmatprep.mubr.bf16.mxu0 0
  %6271 = vmatmul.mubr.bf16.gmra.mxu0 %v6175
  %v6272 = vpop.f32.mrf.mxu0
  %v6273 = vpop.f32.mrf.mxu0
  %v6274 = vpop.f32.mrf.mxu0
  %v6275 = vpop.f32.mrf.mxu0
  %6276 = vmatprep.mubr.bf16.mxu0 0
  %6277 = vmatmul.mubr.bf16.gmra.mxu0 %v6178
  %v6278 = vpop.f32.mrf.mxu0
  %v6279 = vadd.f32 0.0, %v6278
  %v6280 = vpop.f32.mrf.mxu0
  %v6281 = vpop.f32.mrf.mxu0
  %v6282 = vadd.f32 0.0, %v6281
  %v6283 = vpop.f32.mrf.mxu0
  %6284 = vmatprep.mubr.bf16.mxu0 0
  %6285 = vmatmul.mubr.bf16.gmra.mxu0 %v6181
  %v6286 = vpop.f32.mrf.mxu0
  %v6287 = vadd.f32 0.0, %v6286
  %v6288 = vpop.f32.mrf.mxu0
  %v6289 = vpop.f32.mrf.mxu0
  %v6290 = vadd.f32 0.0, %v6289
  %v6291 = vpop.f32.mrf.mxu0
  %6292 = vmatprep.mubr.bf16.mxu0 0
  %6293 = vmatmul.mubr.bf16.gmra.mxu0 %v6184
  %v6294 = vpop.f32.mrf.mxu0
  %v6295 = vadd.f32 0.0, %v6294
  %v6296 = vpop.f32.mrf.mxu0
  %v6297 = vpop.f32.mrf.mxu0
  %v6298 = vadd.f32 0.0, %v6297
  %v6299 = vpop.f32.mrf.mxu0
  %6300 = vmatprep.mubr.bf16.mxu0 0
  %6301 = vmatmul.mubr.bf16.gmra.mxu0 %v6187
  %v6302 = vpop.f32.mrf.mxu0
  %v6303 = vadd.f32 0.0, %v6302
  %v6304 = vpop.f32.mrf.mxu0
  %v6305 = vpop.f32.mrf.mxu0
  %v6306 = vadd.f32 0.0, %v6305
  %v6307 = vpop.f32.mrf.mxu0
  %6308 = vmatprep.mubr.bf16.mxu0 0
  %6309 = vmatmul.mubr.bf16.gmra.mxu0 %v6190
  %v6310 = vpop.f32.mrf.mxu0
  %v6311 = vadd.f32 0.0, %v6310
  %v6312 = vpop.f32.mrf.mxu0
  %v6313 = vpop.f32.mrf.mxu0
  %v6314 = vadd.f32 0.0, %v6313
  %v6315 = vpop.f32.mrf.mxu0
  %6316 = vmatprep.mubr.bf16.mxu0 0
  %6317 = vmatmul.mubr.bf16.gmra.mxu0 %v6193
  %v6318 = vpop.f32.mrf.mxu0
  %v6319 = vadd.f32 0.0, %v6318
  %v6320 = vpop.f32.mrf.mxu0
  %v6321 = vpop.f32.mrf.mxu0
  %v6322 = vpop.f32.mrf.mxu0
  %6323 = vdwg.mxu0
  %v6324 = vadd.f32 %v6018, %v6233
  %v6325 = vadd.f32 %v6019, %v6236
  %v6326 = vadd.f32 %v6020, %v6241
  %v6327 = vadd.f32 %v6021, %v6244
  %v6328 = vadd.f32 %v6022, %v6249
  %v6329 = vadd.f32 %v6023, %v6252
  %v6330 = vadd.f32 %v6024, %v6257
  %v6331 = vadd.f32 %v6025, %v6260
  %v6332 = vadd.f32 %v6026, %v6265
  %v6333 = vadd.f32 %v6027, %v6268
  %v6334 = vadd.f32 %v6028, %v6279
  %v6335 = vadd.f32 %v6029, %v6282
  %v6336 = vadd.f32 %v6030, %v6287
  %v6337 = vadd.f32 %v6031, %v6290
  %v6338 = vadd.f32 %v6032, %v6295
  %v6339 = vadd.f32 %v6033, %v6298
  %v6340 = vadd.f32 %v6034, %v6303
  %v6341 = vadd.f32 %v6035, %v6306
  %v6342 = vadd.f32 %v6036, %v6311
  %v6343 = vadd.f32 %v6037, %v6314
  %v6344 = vadd.f32 %v6038, %v6319
  %v6345 = vld [vmem:[#allocation2 + $0x64] sm:$0x7]
  %s6346 = scalar_lea.vmem %s4, 84
  %v6347 = vld [vmem:[%s6346] sm:$0xf]
  %v6348 = vld [vmem:[%s6346 + $0x4] sm:$0xf]
  %v6349 = vld [vmem:[%s6346 + $0x8] sm:$0xf]
  %v6351 = vunpack.c.l.b16 %v6345
  %v6352 = vpack.c.b16 %v6351, %v6113
  %v6354 = vshrl.u32 %v6115, 16
  %v6356 = vrot.slane %v6354, 2
  %v6357 = vshll.u32 %v6115, 16
  %v6359 = vrot.slane %v6357, 3
  %v6360 = vor.u32 %v6356, %v6359
  %v6362 = vshrl.u32 %v6116, 16
  %v6364 = vrot.slane %v6362, 2
  %v6365 = vshll.u32 %v6116, 16
  %v6367 = vrot.slane %v6365, 3
  %v6368 = vor.u32 %v6364, %v6367
  %v6369 = vsel %vm1963, %v6360, %v6368
  %v6371 = vshrl.u32 %v6117, 16
  %v6373 = vrot.slane %v6371, 2
  %v6374 = vshll.u32 %v6117, 16
  %v6376 = vrot.slane %v6374, 3
  %v6377 = vor.u32 %v6373, %v6376
  %v6378 = vsel %vm1963, %v6368, %v6377
  %v6380 = vshrl.u32 %v6118, 16
  %v6382 = vrot.slane %v6380, 2
  %v6383 = vshll.u32 %v6118, 16
  %v6385 = vrot.slane %v6383, 3
  %v6386 = vor.u32 %v6382, %v6385
  %v6387 = vsel %vm1963, %v6377, %v6386
  %v6389 = vshrl.u32 %v6119, 16
  %v6391 = vrot.slane %v6389, 2
  %v6392 = vshll.u32 %v6119, 16
  %v6394 = vrot.slane %v6392, 3
  %v6395 = vor.u32 %v6391, %v6394
  %v6396 = vsel %vm1963, %v6386, %v6395
  %v6398 = vshrl.u32 %v6120, 16
  %v6400 = vrot.slane %v6398, 2
  %v6401 = vshll.u32 %v6120, 16
  %v6403 = vrot.slane %v6401, 3
  %v6404 = vor.u32 %v6400, %v6403
  %v6405 = vsel %vm1963, %v6395, %v6404
  %v6407 = vshrl.u32 %v6121, 16
  %v6409 = vrot.slane %v6407, 2
  %v6410 = vshll.u32 %v6121, 16
  %v6412 = vrot.slane %v6410, 3
  %v6413 = vor.u32 %v6409, %v6412
  %v6414 = vsel %vm1963, %v6404, %v6413
  %v6416 = vshrl.u32 %v6122, 16
  %v6418 = vrot.slane %v6416, 2
  %v6419 = vshll.u32 %v6122, 16
  %v6421 = vrot.slane %v6419, 3
  %v6422 = vor.u32 %v6418, %v6421
  %v6423 = vsel %vm1963, %v6413, %v6422
  %v6425 = vshrl.u32 %v6123, 16
  %v6427 = vrot.slane %v6425, 2
  %v6428 = vshll.u32 %v6123, 16
  %v6430 = vrot.slane %v6428, 3
  %v6431 = vor.u32 %v6427, %v6430
  %v6432 = vsel %vm1963, %v6422, %v6431
  %v6434 = vshrl.u32 %v6124, 16
  %v6436 = vrot.slane %v6434, 2
  %v6437 = vshll.u32 %v6124, 16
  %v6439 = vrot.slane %v6437, 3
  %v6440 = vor.u32 %v6436, %v6439
  %v6441 = vsel %vm1963, %v6431, %v6440
  %v6443 = vshrl.u32 %v6125, 16
  %v6445 = vrot.slane %v6443, 2
  %v6446 = vshll.u32 %v6125, 16
  %v6448 = vrot.slane %v6446, 3
  %v6449 = vor.u32 %v6445, %v6448
  %v6450 = vsel %vm1963, %v6440, %v6449
  %v6452 = vshrl.u32 %v6352, 16
  %v6454 = vrot.slane %v6452, 2
  %v6455 = vshll.u32 %v6352, 16
  %v6457 = vrot.slane %v6455, 3
  %v6458 = vor.u32 %v6454, %v6457
  %v6459 = vsel %vm1963, %v6449, %v6458
  %v6463 = vunpack.c.l.b16 %v6347
  %v6464 = vunpack.c.l.b16 %v6348
  %v6465 = vunpack.c.l.b16 %v6349
  %v6466 = vpack.c.b16 %v6464, %v6463
  %v6467 = vpack.c.b16 %v6465, %v6465
  %v6470 = vsel %vm223, %v6369, 0
  %v6473 = vsel %vm223, %v6378, 0
  %v6476 = vsel %vm223, %v6387, 0
  %v6479 = vsel %vm223, %v6396, 0
  %v6482 = vsel %vm223, %v6405, 0
  %v6485 = vsel %vm223, %v6414, 0
  %v6488 = vsel %vm223, %v6423, 0
  %v6491 = vsel %vm223, %v6432, 0
  %v6494 = vsel %vm223, %v6441, 0
  %v6497 = vsel %vm223, %v6450, 0
  %v6500 = vsel %vm223, %v6459, 0
  %v6503 = vsel %vm223, %v6458, 0
  %v6506 = vsel %vm260, %v6467, 0
  %6508 = vmatprep.subr.bf16.mxu0 0
  %6509 = vmatpush1.bf16.msra.mxu0 0
  %6510 = vmatprep.subr.bf16.mxu0 0
  %6511 = vmatpush1.bf16.msra.mxu0 0
  %6512 = vmatprep.subr.bf16.mxu0 0
  %6513 = vmatpush1.bf16.msra.mxu0 0
  %6514 = vmatprep.subr.bf16.mxu0 0
  %6515 = vmatpush1.bf16.msra.mxu0 0
  %6516 = vmatprep.subr.bf16.mxu0 0
  %6517 = vmatpush1.bf16.msra.mxu0 0
  %6518 = vmatprep.subr.bf16.mxu0 0
  %6519 = vmatpush1.bf16.msra.mxu0 0
  %6520 = vmatprep.subr.bf16.mxu0 0
  %6521 = vmatpush1.bf16.msra.mxu0 %v6506
  %6522 = vmatprep.subr.bf16.mxu0 0
  %6523 = vmatpush1.bf16.msra.mxu0 %v6466
  %6524 = vmatprep.subr.bf16.mxu0 0
  %6525 = vmatpush2.bf16.msra.mxu0 0
  %6526 = vmatprep.subr.bf16.mxu0 0
  %6527 = vmatpush2.bf16.msra.mxu0 0
  %6528 = vmatprep.subr.bf16.mxu0 0
  %6529 = vmatpush2.bf16.msra.mxu0 0
  %6530 = vmatprep.subr.bf16.mxu0 0
  %6531 = vmatpush2.bf16.msra.mxu0 0
  %6532 = vmatprep.subr.bf16.mxu0 0
  %6533 = vmatpush2.bf16.msra.mxu0 0
  %6534 = vmatprep.subr.bf16.mxu0 0
  %6535 = vmatpush2.bf16.msra.mxu0 0
  %6536 = vmatprep.subr.bf16.mxu0 0
  %6537 = vmatpush2.bf16.msra.mxu0 0
  %6538 = vmatprep.subr.bf16.mxu0 0
  %6539 = vmatpush2.bf16.msra.mxu0 0
  %6540 = vmatprep.mubr.bf16.mxu0 0
  %6541 = vmatmul.mubr.bf16.gmra.mxu0 %v6470
  %v6542 = vpop.f32.mrf.mxu0
  %v6543 = vadd.f32 0.0, %v6542
  %v6544 = vpop.f32.mrf.mxu0
  %v6545 = vpop.f32.mrf.mxu0
  %v6546 = vadd.f32 0.0, %v6545
  %v6547 = vpop.f32.mrf.mxu0
  %6548 = vmatprep.mubr.bf16.mxu0 0
  %6549 = vmatmul.mubr.bf16.gmra.mxu0 %v6473
  %v6550 = vpop.f32.mrf.mxu0
  %v6551 = vadd.f32 0.0, %v6550
  %v6552 = vpop.f32.mrf.mxu0
  %v6553 = vpop.f32.mrf.mxu0
  %v6554 = vadd.f32 0.0, %v6553
  %v6555 = vpop.f32.mrf.mxu0
  %6556 = vmatprep.mubr.bf16.mxu0 0
  %6557 = vmatmul.mubr.bf16.gmra.mxu0 %v6476
  %v6558 = vpop.f32.mrf.mxu0
  %v6559 = vadd.f32 0.0, %v6558
  %v6560 = vpop.f32.mrf.mxu0
  %v6561 = vpop.f32.mrf.mxu0
  %v6562 = vadd.f32 0.0, %v6561
  %v6563 = vpop.f32.mrf.mxu0
  %6564 = vmatprep.mubr.bf16.mxu0 0
  %6565 = vmatmul.mubr.bf16.gmra.mxu0 %v6479
  %v6566 = vpop.f32.mrf.mxu0
  %v6567 = vadd.f32 0.0, %v6566
  %v6568 = vpop.f32.mrf.mxu0
  %v6569 = vpop.f32.mrf.mxu0
  %v6570 = vadd.f32 0.0, %v6569
  %v6571 = vpop.f32.mrf.mxu0
  %6572 = vmatprep.mubr.bf16.mxu0 0
  %6573 = vmatmul.mubr.bf16.gmra.mxu0 %v6482
  %v6574 = vpop.f32.mrf.mxu0
  %v6575 = vadd.f32 0.0, %v6574
  %v6576 = vpop.f32.mrf.mxu0
  %v6577 = vpop.f32.mrf.mxu0
  %v6578 = vadd.f32 0.0, %v6577
  %v6579 = vpop.f32.mrf.mxu0
  %6580 = vmatprep.mubr.bf16.mxu0 0
  %6581 = vmatmul.mubr.bf16.gmra.mxu0 %v6485
  %v6582 = vpop.f32.mrf.mxu0
  %v6583 = vpop.f32.mrf.mxu0
  %v6584 = vpop.f32.mrf.mxu0
  %v6585 = vpop.f32.mrf.mxu0
  %6586 = vmatprep.mubr.bf16.mxu0 0
  %6587 = vmatmul.mubr.bf16.gmra.mxu0 %v6488
  %v6588 = vpop.f32.mrf.mxu0
  %v6589 = vadd.f32 0.0, %v6588
  %v6590 = vpop.f32.mrf.mxu0
  %v6591 = vpop.f32.mrf.mxu0
  %v6592 = vadd.f32 0.0, %v6591
  %v6593 = vpop.f32.mrf.mxu0
  %6594 = vmatprep.mubr.bf16.mxu0 0
  %6595 = vmatmul.mubr.bf16.gmra.mxu0 %v6491
  %v6596 = vpop.f32.mrf.mxu0
  %v6597 = vadd.f32 0.0, %v6596
  %v6598 = vpop.f32.mrf.mxu0
  %v6599 = vpop.f32.mrf.mxu0
  %v6600 = vadd.f32 0.0, %v6599
  %v6601 = vpop.f32.mrf.mxu0
  %6602 = vmatprep.mubr.bf16.mxu0 0
  %6603 = vmatmul.mubr.bf16.gmra.mxu0 %v6494
  %v6604 = vpop.f32.mrf.mxu0
  %v6605 = vadd.f32 0.0, %v6604
  %v6606 = vpop.f32.mrf.mxu0
  %v6607 = vpop.f32.mrf.mxu0
  %v6608 = vadd.f32 0.0, %v6607
  %v6609 = vpop.f32.mrf.mxu0
  %6610 = vmatprep.mubr.bf16.mxu0 0
  %6611 = vmatmul.mubr.bf16.gmra.mxu0 %v6497
  %v6612 = vpop.f32.mrf.mxu0
  %v6613 = vadd.f32 0.0, %v6612
  %v6614 = vpop.f32.mrf.mxu0
  %v6615 = vpop.f32.mrf.mxu0
  %v6616 = vadd.f32 0.0, %v6615
  %v6617 = vpop.f32.mrf.mxu0
  %6618 = vmatprep.mubr.bf16.mxu0 0
  %6619 = vmatmul.mubr.bf16.gmra.mxu0 %v6500
  %v6620 = vpop.f32.mrf.mxu0
  %v6621 = vadd.f32 0.0, %v6620
  %v6622 = vpop.f32.mrf.mxu0
  %v6623 = vpop.f32.mrf.mxu0
  %v6624 = vadd.f32 0.0, %v6623
  %v6625 = vpop.f32.mrf.mxu0
  %6626 = vmatprep.mubr.bf16.mxu0 0
  %6627 = vmatmul.mubr.bf16.gmra.mxu0 %v6503
  %v6628 = vpop.f32.mrf.mxu0
  %v6629 = vadd.f32 0.0, %v6628
  %v6630 = vpop.f32.mrf.mxu0
  %v6631 = vpop.f32.mrf.mxu0
  %v6632 = vpop.f32.mrf.mxu0
  %6633 = vdwg.mxu0
  %v6634 = vadd.f32 %v6324, %v6543
  %v6635 = vadd.f32 %v6325, %v6546
  %v6636 = vadd.f32 %v6326, %v6551
  %v6637 = vadd.f32 %v6327, %v6554
  %v6638 = vadd.f32 %v6328, %v6559
  %v6639 = vadd.f32 %v6329, %v6562
  %v6640 = vadd.f32 %v6330, %v6567
  %v6641 = vadd.f32 %v6331, %v6570
  %v6642 = vadd.f32 %v6332, %v6575
  %v6643 = vadd.f32 %v6333, %v6578
  %v6644 = vadd.f32 %v6334, %v6589
  %v6645 = vadd.f32 %v6335, %v6592
  %v6646 = vadd.f32 %v6336, %v6597
  %v6647 = vadd.f32 %v6337, %v6600
  %v6648 = vadd.f32 %v6338, %v6605
  %v6649 = vadd.f32 %v6339, %v6608
  %v6650 = vadd.f32 %v6340, %v6613
  %v6651 = vadd.f32 %v6341, %v6616
  %v6652 = vadd.f32 %v6342, %v6621
  %v6653 = vadd.f32 %v6343, %v6624
  %v6654 = vadd.f32 %v6344, %v6629
  %v6655 = vld [vmem:[#allocation2 + $0x8] sm:$0x8]
  %s6656 = scalar_lea.vmem %s4, 96
  %v6657 = vld [vmem:[%s6656] sm:$0xf]
  %v6658 = vld [vmem:[%s6656 + $0x4] sm:$0xf]
  %v6659 = vld [vmem:[%s6656 + $0x8] sm:$0xf]
  %v6661 = vunpack.c.l.b16 %v6655
  %v6662 = vpack.c.b16 %v6092, %v6661
  %v6663 = vrot.slane %v6662, 3
  %v6664 = vrot.slane %v6116, 3
  %v6665 = vsel %vm2278, %v6663, %v6664
  %v6666 = vrot.slane %v6117, 3
  %v6667 = vsel %vm2278, %v6664, %v6666
  %v6668 = vrot.slane %v6118, 3
  %v6669 = vsel %vm2278, %v6666, %v6668
  %v6670 = vrot.slane %v6119, 3
  %v6671 = vsel %vm2278, %v6668, %v6670
  %v6672 = vrot.slane %v6120, 3
  %v6673 = vsel %vm2278, %v6670, %v6672
  %v6674 = vrot.slane %v6121, 3
  %v6675 = vsel %vm2278, %v6672, %v6674
  %v6676 = vrot.slane %v6122, 3
  %v6677 = vsel %vm2278, %v6674, %v6676
  %v6678 = vrot.slane %v6123, 3
  %v6679 = vsel %vm2278, %v6676, %v6678
  %v6680 = vrot.slane %v6124, 3
  %v6681 = vsel %vm2278, %v6678, %v6680
  %v6682 = vrot.slane %v6125, 3
  %v6683 = vsel %vm2278, %v6680, %v6682
  %v6684 = vrot.slane %v6352, 3
  %v6685 = vsel %vm2278, %v6682, %v6684
  %v6689 = vunpack.c.l.b16 %v6657
  %v6690 = vunpack.c.l.b16 %v6658
  %v6691 = vunpack.c.l.b16 %v6659
  %v6692 = vpack.c.b16 %v6690, %v6689
  %v6693 = vpack.c.b16 %v6691, %v6691
  %v6696 = vsel %vm223, %v6665, 0
  %v6699 = vsel %vm223, %v6667, 0
  %v6702 = vsel %vm223, %v6669, 0
  %v6705 = vsel %vm223, %v6671, 0
  %v6708 = vsel %vm223, %v6673, 0
  %v6711 = vsel %vm223, %v6675, 0
  %v6714 = vsel %vm223, %v6677, 0
  %v6717 = vsel %vm223, %v6679, 0
  %v6720 = vsel %vm223, %v6681, 0
  %v6723 = vsel %vm223, %v6683, 0
  %v6726 = vsel %vm223, %v6685, 0
  %v6729 = vsel %vm223, %v6684, 0
  %v6732 = vsel %vm260, %v6693, 0
  %6734 = vmatprep.subr.bf16.mxu0 0
  %6735 = vmatpush1.bf16.msra.mxu0 0
  %6736 = vmatprep.subr.bf16.mxu0 0
  %6737 = vmatpush1.bf16.msra.mxu0 0
  %6738 = vmatprep.subr.bf16.mxu0 0
  %6739 = vmatpush1.bf16.msra.mxu0 0
  %6740 = vmatprep.subr.bf16.mxu0 0
  %6741 = vmatpush1.bf16.msra.mxu0 0
  %6742 = vmatprep.subr.bf16.mxu0 0
  %6743 = vmatpush1.bf16.msra.mxu0 0
  %6744 = vmatprep.subr.bf16.mxu0 0
  %6745 = vmatpush1.bf16.msra.mxu0 0
  %6746 = vmatprep.subr.bf16.mxu0 0
  %6747 = vmatpush1.bf16.msra.mxu0 %v6732
  %6748 = vmatprep.subr.bf16.mxu0 0
  %6749 = vmatpush1.bf16.msra.mxu0 %v6692
  %6750 = vmatprep.subr.bf16.mxu0 0
  %6751 = vmatpush2.bf16.msra.mxu0 0
  %6752 = vmatprep.subr.bf16.mxu0 0
  %6753 = vmatpush2.bf16.msra.mxu0 0
  %6754 = vmatprep.subr.bf16.mxu0 0
  %6755 = vmatpush2.bf16.msra.mxu0 0
  %6756 = vmatprep.subr.bf16.mxu0 0
  %6757 = vmatpush2.bf16.msra.mxu0 0
  %6758 = vmatprep.subr.bf16.mxu0 0
  %6759 = vmatpush2.bf16.msra.mxu0 0
  %6760 = vmatprep.subr.bf16.mxu0 0
  %6761 = vmatpush2.bf16.msra.mxu0 0
  %6762 = vmatprep.subr.bf16.mxu0 0
  %6763 = vmatpush2.bf16.msra.mxu0 0
  %6764 = vmatprep.subr.bf16.mxu0 0
  %6765 = vmatpush2.bf16.msra.mxu0 0
  %6766 = vmatprep.mubr.bf16.mxu0 0
  %6767 = vmatmul.mubr.bf16.gmra.mxu0 %v6696
  %v6768 = vpop.f32.mrf.mxu0
  %v6769 = vadd.f32 0.0, %v6768
  %v6770 = vpop.f32.mrf.mxu0
  %v6771 = vpop.f32.mrf.mxu0
  %v6772 = vadd.f32 0.0, %v6771
  %v6773 = vpop.f32.mrf.mxu0
  %6774 = vmatprep.mubr.bf16.mxu0 0
  %6775 = vmatmul.mubr.bf16.gmra.mxu0 %v6699
  %v6776 = vpop.f32.mrf.mxu0
  %v6777 = vadd.f32 0.0, %v6776
  %v6778 = vpop.f32.mrf.mxu0
  %v6779 = vpop.f32.mrf.mxu0
  %v6780 = vadd.f32 0.0, %v6779
  %v6781 = vpop.f32.mrf.mxu0
  %6782 = vmatprep.mubr.bf16.mxu0 0
  %6783 = vmatmul.mubr.bf16.gmra.mxu0 %v6702
  %v6784 = vpop.f32.mrf.mxu0
  %v6785 = vadd.f32 0.0, %v6784
  %v6786 = vpop.f32.mrf.mxu0
  %v6787 = vpop.f32.mrf.mxu0
  %v6788 = vadd.f32 0.0, %v6787
  %v6789 = vpop.f32.mrf.mxu0
  %6790 = vmatprep.mubr.bf16.mxu0 0
  %6791 = vmatmul.mubr.bf16.gmra.mxu0 %v6705
  %v6792 = vpop.f32.mrf.mxu0
  %v6793 = vadd.f32 0.0, %v6792
  %v6794 = vpop.f32.mrf.mxu0
  %v6795 = vpop.f32.mrf.mxu0
  %v6796 = vadd.f32 0.0, %v6795
  %v6797 = vpop.f32.mrf.mxu0
  %6798 = vmatprep.mubr.bf16.mxu0 0
  %6799 = vmatmul.mubr.bf16.gmra.mxu0 %v6708
  %v6800 = vpop.f32.mrf.mxu0
  %v6801 = vadd.f32 0.0, %v6800
  %v6802 = vpop.f32.mrf.mxu0
  %v6803 = vpop.f32.mrf.mxu0
  %v6804 = vadd.f32 0.0, %v6803
  %v6805 = vpop.f32.mrf.mxu0
  %6806 = vmatprep.mubr.bf16.mxu0 0
  %6807 = vmatmul.mubr.bf16.gmra.mxu0 %v6711
  %v6808 = vpop.f32.mrf.mxu0
  %v6809 = vpop.f32.mrf.mxu0
  %v6810 = vpop.f32.mrf.mxu0
  %v6811 = vpop.f32.mrf.mxu0
  %6812 = vmatprep.mubr.bf16.mxu0 0
  %6813 = vmatmul.mubr.bf16.gmra.mxu0 %v6714
  %v6814 = vpop.f32.mrf.mxu0
  %v6815 = vadd.f32 0.0, %v6814
  %v6816 = vpop.f32.mrf.mxu0
  %v6817 = vpop.f32.mrf.mxu0
  %v6818 = vadd.f32 0.0, %v6817
  %v6819 = vpop.f32.mrf.mxu0
  %6820 = vmatprep.mubr.bf16.mxu0 0
  %6821 = vmatmul.mubr.bf16.gmra.mxu0 %v6717
  %v6822 = vpop.f32.mrf.mxu0
  %v6823 = vadd.f32 0.0, %v6822
  %v6824 = vpop.f32.mrf.mxu0
  %v6825 = vpop.f32.mrf.mxu0
  %v6826 = vadd.f32 0.0, %v6825
  %v6827 = vpop.f32.mrf.mxu0
  %6828 = vmatprep.mubr.bf16.mxu0 0
  %6829 = vmatmul.mubr.bf16.gmra.mxu0 %v6720
  %v6830 = vpop.f32.mrf.mxu0
  %v6831 = vadd.f32 0.0, %v6830
  %v6832 = vpop.f32.mrf.mxu0
  %v6833 = vpop.f32.mrf.mxu0
  %v6834 = vadd.f32 0.0, %v6833
  %v6835 = vpop.f32.mrf.mxu0
  %6836 = vmatprep.mubr.bf16.mxu0 0
  %6837 = vmatmul.mubr.bf16.gmra.mxu0 %v6723
  %v6838 = vpop.f32.mrf.mxu0
  %v6839 = vadd.f32 0.0, %v6838
  %v6840 = vpop.f32.mrf.mxu0
  %v6841 = vpop.f32.mrf.mxu0
  %v6842 = vadd.f32 0.0, %v6841
  %v6843 = vpop.f32.mrf.mxu0
  %6844 = vmatprep.mubr.bf16.mxu0 0
  %6845 = vmatmul.mubr.bf16.gmra.mxu0 %v6726
  %v6846 = vpop.f32.mrf.mxu0
  %v6847 = vadd.f32 0.0, %v6846
  %v6848 = vpop.f32.mrf.mxu0
  %v6849 = vpop.f32.mrf.mxu0
  %v6850 = vadd.f32 0.0, %v6849
  %v6851 = vpop.f32.mrf.mxu0
  %6852 = vmatprep.mubr.bf16.mxu0 0
  %6853 = vmatmul.mubr.bf16.gmra.mxu0 %v6729
  %v6854 = vpop.f32.mrf.mxu0
  %v6855 = vadd.f32 0.0, %v6854
  %v6856 = vpop.f32.mrf.mxu0
  %v6857 = vpop.f32.mrf.mxu0
  %v6858 = vpop.f32.mrf.mxu0
  %6859 = vdwg.mxu0
  %v6860 = vadd.f32 %v6634, %v6769
  %v6861 = vadd.f32 %v6635, %v6772
  %v6862 = vadd.f32 %v6636, %v6777
  %v6863 = vadd.f32 %v6637, %v6780
  %v6864 = vadd.f32 %v6638, %v6785
  %v6865 = vadd.f32 %v6639, %v6788
  %v6866 = vadd.f32 %v6640, %v6793
  %v6867 = vadd.f32 %v6641, %v6796
  %v6868 = vadd.f32 %v6642, %v6801
  %v6869 = vadd.f32 %v6643, %v6804
  %v6870 = vadd.f32 %v6644, %v6815
  %v6871 = vadd.f32 %v6645, %v6818
  %v6872 = vadd.f32 %v6646, %v6823
  %v6873 = vadd.f32 %v6647, %v6826
  %v6874 = vadd.f32 %v6648, %v6831
  %v6875 = vadd.f32 %v6649, %v6834
  %v6876 = vadd.f32 %v6650, %v6839
  %v6877 = vadd.f32 %v6651, %v6842
  %v6878 = vadd.f32 %v6652, %v6847
  %v6879 = vadd.f32 %v6653, %v6850
  %v6880 = vadd.f32 %v6654, %v6855
  %v6881 = vld [vmem:[%s5] sm:$0x1]
  %v6883 = vlaneseq
  %v6884 = vshrl.u32 %v6883, 7
  %v6885 = vsub.s32 0, %v6884
  %v6886 = vrot.slane %v6881, %v6885
  %v6888 = vadd.f32 %v6860, %v6886
  %v6889 = vadd.f32 %v6861, %v6886
  %v6890 = vadd.f32 %v6862, %v6886
  %v6891 = vadd.f32 %v6863, %v6886
  %v6892 = vadd.f32 %v6864, %v6886
  %v6893 = vadd.f32 %v6865, %v6886
  %v6894 = vadd.f32 %v6866, %v6886
  %v6895 = vadd.f32 %v6867, %v6886
  %v6896 = vadd.f32 %v6868, %v6886
  %v6897 = vadd.f32 %v6869, %v6886
  %v6898 = vadd.f32 %v6870, %v6886
  %v6899 = vadd.f32 %v6871, %v6886
  %v6900 = vadd.f32 %v6872, %v6886
  %v6901 = vadd.f32 %v6873, %v6886
  %v6902 = vadd.f32 %v6874, %v6886
  %v6903 = vadd.f32 %v6875, %v6886
  %v6904 = vadd.f32 %v6876, %v6886
  %v6905 = vadd.f32 %v6877, %v6886
  %v6906 = vadd.f32 %v6878, %v6886
  %v6907 = vadd.f32 %v6879, %v6886
  %v6908 = vadd.f32 %v6880, %v6886
  %6909 = vst [vmem:[%s6] sm:$0xff] %v6888
  %6910 = vst [vmem:[%s6 + $0x8] sm:$0xff] %v6889
  %6911 = vst [vmem:[%s6 + $0x10] sm:$0xff] %v6890
  %6912 = vst [vmem:[%s6 + $0x18] sm:$0xff] %v6891
  %6913 = vst [vmem:[%s6 + $0x20] sm:$0xff] %v6892
  %6914 = vst [vmem:[%s6 + $0x28] sm:$0xff] %v6893
  %6915 = vst [vmem:[%s6 + $0x30] sm:$0xff] %v6894
  %6916 = vst [vmem:[%s6 + $0x38] sm:$0xff] %v6895
  %6917 = vst [vmem:[%s6 + $0x40] sm:$0xff] %v6896
  %6918 = vst [vmem:[%s6 + $0x48] sm:$0xff] %v6897
  %s6919 = scalar_lea.vmem %s6, 80
  %6920 = vst [vmem:[%s6919 - $0x4] sm:$0xf0] %v6898
  %6921 = vst [vmem:[%s6919 + $0x4] sm:$0xff] %v6899
  %6922 = vst [vmem:[%s6919 + $0xc] sm:$0xff] %v6900
  %6923 = vst [vmem:[%s6919 + $0x14] sm:$0xff] %v6901
  %6924 = vst [vmem:[%s6919 + $0x1c] sm:$0xff] %v6902
  %6925 = vst [vmem:[%s6919 + $0x24] sm:$0xff] %v6903
  %6926 = vst [vmem:[%s6919 + $0x2c] sm:$0xff] %v6904
  %6927 = vst [vmem:[%s6919 + $0x34] sm:$0xff] %v6905
  %6928 = vst [vmem:[%s6919 + $0x3c] sm:$0xff] %v6906
  %6929 = vst [vmem:[%s6919 + $0x44] sm:$0xff] %v6907
  %6930 = vst [vmem:[%s6919 + $0x4c] sm:$0xf] %v6908
  // Predicated region
  $region26: #{_lambda_.1} parent=0 // pred_check
    _
  $region27: #{_lambda_.1} parent=0 // pred_check_branch
    %6932 = sbr.rel (0) target = $region29
  $region28: #{_lambda_.1} parent=0 // pred_region
    _
  $region29: #{_lambda_.1} parent=0 // pred_fallthru
    _
  // Predicated region
  $region30: #{_lambda_.1} parent=0 // pred_check
    _
  $region31: #{_lambda_.1} parent=0 // pred_check_branch
    %6934 = sbr.rel (0) target = $region33
  $region32: #{_lambda_.1} parent=0 // pred_region
    _
  $region33: #{_lambda_.1} parent=0 // pred_fallthru
    _

</llo_original>
